<compile_context>
chip_gen: v7x
topology: tpu7x:2x2x1
jax: 0.10.0
libtpu: 0.0.40
codegen_flags: <defaults>
</compile_context>

<pallas_src>
import functools
import math

import jax
import jax.numpy as jnp
from jax.experimental import pallas as pl
from jax.experimental.pallas import tpu as pltpu


# ---------------------------------------------------------------------------
# Static geometry of the trunk
# ---------------------------------------------------------------------------
H_IN = W_IN = 10
PITCH = W_IN                      # row pitch for EVERY layer: row = h*PITCH + w
ROWS_PER_IMG = H_IN * W_IN        # 100 pitched rows per image
C_IN = 3
C_IN_PAD = 8                      # pad input channels 3 -> 8 (zero channels)
H_OUT = W_OUT = 4
C1, C2, C3 = 32, 64, 128

# The 9 (kh, kw) taps of a 3x3 valid conv become 9 row offsets in the pitched
# layout (kh-major, kw-minor — must match the packed weight order below).
OFFS = tuple(kh * PITCH + kw for kh in range(3) for kw in range(3))
MAX_OFF = OFFS[-1]                # 22
# Valid conv3 output rows within one image (pitched): ho*10 + wo, ho,wo in 0..3.
VALID_OUT = tuple(ho * PITCH + wo for ho in range(H_OUT) for wo in range(W_OUT))


def _round_up(x, m):
    return -(-x // m) * m


# ---------------------------------------------------------------------------
# Fused kernel: conv1+ReLU -> conv2+ReLU -> conv3+ReLU (pitched output block)
# ---------------------------------------------------------------------------
def _dqn_trunk_kernel(m1, m2, m3,
                      xkp_ref, w1_ref, b1_ref, w2_ref, b2_ref, w3_ref, b3_ref,
                      out_ref, a1_ref, lhs2_ref, a2_ref, lhs3_ref):
    """One grid step = one batch tile of images.

    xkp_ref : (m1, 72)   bf16  K-packed conv1 lhs (built in the wrapper)
    wL_ref  : (9*Cin, Cout) bf16 K-packed weights
    bL_ref  : (1, Cout)  f32
    out_ref : (m3, 128)  f32   pitched conv3 output block (lane-dense)
    a1/a2   : bf16 activations (VMEM only, pitched, never touch HBM)
    lhs2/3  : bf16 K-packed staging buffers for conv2 / conv3
    Garbage rows of the pitched layout are never read into valid outputs
    (row-wise independence of the matmul), and are always finite.
    """
    # ---- conv1: one matmul, K = 72 ----------------------------------------
    z1 = jnp.dot(xkp_ref[...], w1_ref[...], preferred_element_type=jnp.float32)
    a1_ref[...] = jnp.maximum(z1 + b1_ref[...], 0.0).astype(jnp.bfloat16)

    # ---- conv2: stage 9 shifted windows of a1, one matmul, K = 288 --------
    for k, off in enumerate(OFFS):
        lhs2_ref[:, k * C1:(k + 1) * C1] = a1_ref[pl.ds(off, m2), :]
    z2 = jnp.dot(lhs2_ref[...], w2_ref[...], preferred_element_type=jnp.float32)
    a2_ref[...] = jnp.maximum(z2 + b2_ref[...], 0.0).astype(jnp.bfloat16)

    # ---- conv3: stage 9 shifted windows of a2, one matmul, K = 576 --------
    for k, off in enumerate(OFFS):
        lhs3_ref[:, k * C2:(k + 1) * C2] = a2_ref[pl.ds(off, m3), :]
    z3 = jnp.dot(lhs3_ref[...], w3_ref[...], preferred_element_type=jnp.float32)
    # f32 bias + ReLU epilogue straight to the lane-dense pitched output block.
    out_ref[...] = jnp.maximum(z3 + b3_ref[...], 0.0)


# ---------------------------------------------------------------------------
# Wrapper: layout plumbing + pallas_call
# ---------------------------------------------------------------------------
def deepmind_forward(x_nchw, packed_params, *, tile_b=32):
    """x_nchw: (B, 3, 10, 10) f32 (PyTorch layout). Returns (B, 2048) f32."""
    B, C, H, W = x_nchw.shape
    assert (C, H, W) == (C_IN, H_IN, W_IN), x_nchw.shape
    (w1, b1), (w2, b2), (w3, b3) = packed_params

    # Balanced batch tiles: keeps grid >= 2 whenever B > tile_b (v7x megacore)
    # while avoiding useless padding images.
    num_tiles = max(1, -(-B // int(tile_b)))
    nb = -(-B // num_tiles)               # images per grid step
    bp = nb * num_tiles

    rows = nb * ROWS_PER_IMG
    # Padded (16-aligned) row counts; each layer's slices stay in bounds:
    # m_next + MAX_OFF <= m_prev.
    m3 = _round_up(rows - 3 * MAX_OFF, 16)
    m2 = _round_up(m3 + MAX_OFF, 16)
    m1 = _round_up(m2 + MAX_OFF, 16)

    # NCHW -> NHWC, pad channels 3 -> 8 (zeros), cast to bf16 (review item:
    # no in-kernel converts, halved input DMA).
    x = jnp.transpose(x_nchw, (0, 2, 3, 1)).astype(jnp.bfloat16)     # (B,10,10,3)
    x = jnp.pad(x, ((0, bp - B), (0, 0), (0, 0), (0, C_IN_PAD - C_IN)))
    xp = x.reshape(num_tiles, rows, C_IN_PAD)
    xp = jnp.pad(xp, ((0, 0), (0, m1 + MAX_OFF - rows), (0, 0)))     # zero halo rows
    # K-packed conv1 lhs (tiny 9x blow-up of a tiny input, built once in XLA).
    xkp = jnp.concatenate([xp[:, off:off + m1, :] for off in OFFS], axis=-1)
    xkp = xkp.reshape(num_tiles * m1, 9 * C_IN_PAD)                  # (nt*m1, 72) bf16

    flops = 2 * num_tiles * (m1 * 9 * C_IN_PAD * C1
                             + m2 * 9 * C1 * C2
                             + m3 * 9 * C2 * C3)
    bytes_accessed = (xkp.size * 2                      # bf16 input
                      + num_tiles * m3 * C3 * 4         # f32 pitched output
                      + (w1.size + w2.size + w3.size) * 2
                      + (b1.size + b2.size + b3.size) * 4)

    out_pitched = pl.pallas_call(
        functools.partial(_dqn_trunk_kernel, m1, m2, m3),
        out_shape=jax.ShapeDtypeStruct((num_tiles * m3, C3), jnp.float32),
        grid=(num_tiles,),
        in_specs=[
            pl.BlockSpec((m1, 9 * C_IN_PAD), lambda i: (i, 0)),   # batch-tiled lhs1
            pl.BlockSpec(w1.shape, lambda i: (0, 0)),             # grid-invariant
            pl.BlockSpec(b1.shape, lambda i: (0, 0)),
            pl.BlockSpec(w2.shape, lambda i: (0, 0)),
            pl.BlockSpec(b2.shape, lambda i: (0, 0)),
            pl.BlockSpec(w3.shape, lambda i: (0, 0)),
            pl.BlockSpec(b3.shape, lambda i: (0, 0)),
        ],
        out_specs=pl.BlockSpec((m3, C3), lambda i: (i, 0)),       # lane-dense output
        scratch_shapes=[
            pltpu.VMEM((m1, C1), jnp.bfloat16),        # conv1 activations
            pltpu.VMEM((m2, 9 * C1), jnp.bfloat16),    # conv2 K-packed lhs
            pltpu.VMEM((m2, C2), jnp.bfloat16),        # conv2 activations
            pltpu.VMEM((m3, 9 * C2), jnp.bfloat16),    # conv3 K-packed lhs
        ],
        compiler_params=pltpu.CompilerParams(
            dimension_semantics=("parallel",),          # megacore-shardable batch axis
            vmem_limit_bytes=32 * 1024 * 1024,          # headroom for v5e's 16 MiB default
        ),
        cost_estimate=pl.CostEstimate(
            flops=flops, transcendentals=0, bytes_accessed=bytes_accessed),
    )(xkp, w1, b1, w2, b2, w3, b3)

    # Compact the 16 valid rows/image out of the pitched block in the wrapper
    # (review item 6: cheaper than 32 masked 4-row copies inside the kernel).
    out3 = out_pitched.reshape(num_tiles, m3, C3)
    valid = jnp.asarray(
        [bb * ROWS_PER_IMG + r for bb in range(nb) for r in VALID_OUT],
        dtype=jnp.int32)
    out = out3[:, valid, :].reshape(bp, H_OUT, W_OUT, C3)[:B]       # (B,4,4,128)
    # Match PyTorch's NCHW reshape(-1, 2048): flat index = c*16 + h*4 + w.
    out = jnp.transpose(out, (0, 3, 1, 2)).reshape(B, C3 * H_OUT * W_OUT)
    return out


# ---------------------------------------------------------------------------
# Parameters: PyTorch-equivalent init + packing into the kernel's layout
# ---------------------------------------------------------------------------
def init_deepmind_params(seed=0):
    """Orthogonal (gain=sqrt(2)) weights, zero bias, PyTorch (Cout,Cin,KH,KW)."""
    k1, k2, k3 = jax.random.split(jax.random.PRNGKey(seed), 3)
    ortho = jax.nn.initializers.orthogonal(scale=math.sqrt(2.0))

    def make(key, cin, cout):
        w = ortho(key, (cout, cin * 9), jnp.float32).reshape(cout, cin, 3, 3)
        return w, jnp.zeros((cout,), jnp.float32)

    return [make(k1, 3, 32), make(k2, 32, 64), make(k3, 64, 128)]


def pack_params(raw_params):
    """(Cout,Cin,3,3) f32 -> (9*Cin[_pad], Cout) bf16 K-packed weight + (1,Cout) f32 bias."""
    packed = []
    for w, b in raw_params:
        cout, cin, kh, kw = w.shape
        wk = jnp.transpose(w, (2, 3, 1, 0)).reshape(kh * kw, cin, cout)  # kh-major taps
        if cin < C_IN_PAD:
            wk = jnp.pad(wk, ((0, 0), (0, C_IN_PAD - cin), (0, 0)))
        wk = wk.reshape(-1, cout).astype(jnp.bfloat16)                   # (9*cin_pad, cout)
        packed.append((wk, b.reshape(1, cout).astype(jnp.float32)))
    return packed


# ---------------------------------------------------------------------------
# Pure-JAX reference (f32) for a correctness check
# ---------------------------------------------------------------------------
def _reference_forward(x_nchw, raw_params):
    x = x_nchw.astype(jnp.float32)
    for w, b in raw_params:
        x = jax.lax.conv_general_dilated(
            x, w, window_strides=(1, 1), padding="VALID",
            dimension_numbers=("NCHW", "OIHW", "NCHW"),
            precision=jax.lax.Precision.HIGHEST)
        x = jax.nn.relu(x + b.reshape(1, -1, 1, 1))
    return x.reshape(x.shape[0], -1)


if __name__ == "__main__":
    raw_params = init_deepmind_params(seed=0)
    packed = pack_params(raw_params)

    key0, key1 = jax.random.split(jax.random.PRNGKey(0))

    # Small deterministic test, single grid step.
    x = jax.random.normal(key0, (2, 3, 10, 10), jnp.float32)           # NCHW
    fwd = jax.jit(lambda xx: deepmind_forward(xx, packed))
    out = jax.block_until_ready(fwd(x))
    assert out.shape == (2, 128 * 4 * 4), out.shape
    assert bool(jnp.all(jnp.isfinite(out)))
    assert bool(jnp.all(out >= 0.0))                                   # post-ReLU
    ref = _reference_forward(x, raw_params)
    rel = float(jnp.linalg.norm(out - ref) / (jnp.linalg.norm(ref) + 1e-12))
    assert rel < 0.03, f"relative L2 error too high: {rel}"

    # Multi-tile / padded-batch path (grid > 1, batch padding exercised).
    x2 = jax.random.normal(key1, (10, 3, 10, 10), jnp.float32)
    fwd2 = jax.jit(lambda xx: deepmind_forward(xx, packed, tile_b=4))
    out2 = jax.block_until_ready(fwd2(x2))
    assert out2.shape == (10, 2048), out2.shape
    ref2 = _reference_forward(x2, raw_params)
    rel2 = float(jnp.linalg.norm(out2 - ref2) / (jnp.linalg.norm(ref2) + 1e-12))
    assert rel2 < 0.03, f"relative L2 error too high: {rel2}"

    print("KERNEL_OK")
</pallas_src>

<mosaic_0001>
module attributes {stable_mosaic.version = 11 : i64} {
  func.func @_dqn_trunk_kernel(%arg0: i32, %arg1: memref<208x72xbf16, #tpu.memory_space<vmem>>, %arg2: memref<72x32xbf16, #tpu.memory_space<vmem>>, %arg3: memref<1x32xf32, #tpu.memory_space<vmem>>, %arg4: memref<288x64xbf16, #tpu.memory_space<vmem>>, %arg5: memref<1x64xf32, #tpu.memory_space<vmem>>, %arg6: memref<576x128xbf16, #tpu.memory_space<vmem>>, %arg7: memref<1x128xf32, #tpu.memory_space<vmem>>, %arg8: memref<144x128xf32, #tpu.memory_space<vmem>>, %arg9: memref<208x32xbf16, #tpu.memory_space<vmem>>, %arg10: memref<176x288xbf16, #tpu.memory_space<vmem>>, %arg11: memref<176x64xbf16, #tpu.memory_space<vmem>>, %arg12: memref<144x576xbf16, #tpu.memory_space<vmem>>) attributes {dimension_semantics = [#tpu.dimension_semantics<parallel>], iteration_bounds = array<i64: 1>, scalar_prefetch = 0 : i64, scratch_operands = 4 : i64, tpu.core_type = #tpu.core_type<tc>, window_params = [{transform_indices = @transform_0, window_bounds = array<i64: 208, 72>}, {pipeline_mode = #tpu.pipeline_mode<synchronous>, transform_indices = @transform_1, window_bounds = array<i64: 72, 32>}, {pipeline_mode = #tpu.pipeline_mode<synchronous>, transform_indices = @transform_2, window_bounds = array<i64: 1, 32>}, {pipeline_mode = #tpu.pipeline_mode<synchronous>, transform_indices = @transform_3, window_bounds = array<i64: 288, 64>}, {pipeline_mode = #tpu.pipeline_mode<synchronous>, transform_indices = @transform_4, window_bounds = array<i64: 1, 64>}, {pipeline_mode = #tpu.pipeline_mode<synchronous>, transform_indices = @transform_5, window_bounds = array<i64: 576, 128>}, {pipeline_mode = #tpu.pipeline_mode<synchronous>, transform_indices = @transform_6, window_bounds = array<i64: 1, 128>}, {transform_indices = @transform_7, window_bounds = array<i64: 144, 128>}]} {
    %c0 = arith.constant 0 : index
    %c0_0 = arith.constant 0 : index
    %0 = vector.load %arg1[%c0, %c0_0] : memref<208x72xbf16, #tpu.memory_space<vmem>>, vector<208x72xbf16>
    %c0_1 = arith.constant 0 : index
    %c0_2 = arith.constant 0 : index
    %1 = vector.load %arg2[%c0_1, %c0_2] : memref<72x32xbf16, #tpu.memory_space<vmem>>, vector<72x32xbf16>
    %cst = arith.constant dense<0.000000e+00> : vector<208x32xf32>
    %2 = tpu.matmul %0, %1, %cst {dimension_numbers = #tpu.dot_dimension_numbers<[1], [0], [0], [1], [0, 0, 1, 1], [], []>} : vector<208x72xbf16>, vector<72x32xbf16>, vector<208x32xf32> -> vector<208x32xf32>
    %c0_3 = arith.constant 0 : index
    %c0_4 = arith.constant 0 : index
    %3 = vector.load %arg3[%c0_3, %c0_4] : memref<1x32xf32, #tpu.memory_space<vmem>>, vector<1x32xf32>
    %4 = vector.broadcast %3 : vector<1x32xf32> to vector<208x32xf32>
    %5 = arith.addf %2, %4 : vector<208x32xf32>
    %cst_5 = arith.constant 0.000000e+00 : f32
    %6 = vector.broadcast %cst_5 : f32 to vector<208x32xf32>
    %7 = arith.maximumf %5, %6 : vector<208x32xf32>
    %8 = arith.truncf %7 : vector<208x32xf32> to vector<208x32xbf16>
    %c0_6 = arith.constant 0 : index
    %c0_7 = arith.constant 0 : index
    %9 = vector.load %arg9[%c0_6, %c0_7] : memref<208x32xbf16, #tpu.memory_space<vmem>>, vector<208x32xbf16>
    tpu.vector_store %arg9[%c0_6, %c0_7], %8 {strides = array<i32>} : memref<208x32xbf16, #tpu.memory_space<vmem>>, vector<208x32xbf16>,
    %c0_8 = arith.constant 0 : index
    %c0_9 = arith.constant 0 : index
    %10 = vector.load %arg9[%c0_8, %c0_9] : memref<208x32xbf16, #tpu.memory_space<vmem>>, vector<176x32xbf16>
    %c0_10 = arith.constant 0 : index
    %c0_11 = arith.constant 0 : index
    %11 = vector.load %arg10[%c0_10, %c0_11] : memref<176x288xbf16, #tpu.memory_space<vmem>>, vector<176x32xbf16>
    tpu.vector_store %arg10[%c0_10, %c0_11], %10 {strides = array<i32>} : memref<176x288xbf16, #tpu.memory_space<vmem>>, vector<176x32xbf16>,
    %c1 = arith.constant 1 : index
    %c0_12 = arith.constant 0 : index
    %12 = vector.load %arg9[%c1, %c0_12] : memref<208x32xbf16, #tpu.memory_space<vmem>>, vector<176x32xbf16>
    %c0_13 = arith.constant 0 : index
    %c32 = arith.constant 32 : index
    %13 = vector.load %arg10[%c0_13, %c32] : memref<176x288xbf16, #tpu.memory_space<vmem>>, vector<176x32xbf16>
    tpu.vector_store %arg10[%c0_13, %c32], %12 {strides = array<i32>} : memref<176x288xbf16, #tpu.memory_space<vmem>>, vector<176x32xbf16>,
    %c2 = arith.constant 2 : index
    %c0_14 = arith.constant 0 : index
    %14 = vector.load %arg9[%c2, %c0_14] : memref<208x32xbf16, #tpu.memory_space<vmem>>, vector<176x32xbf16>
    %c0_15 = arith.constant 0 : index
    %c64 = arith.constant 64 : index
    %15 = vector.load %arg10[%c0_15, %c64] : memref<176x288xbf16, #tpu.memory_space<vmem>>, vector<176x32xbf16>
    tpu.vector_store %arg10[%c0_15, %c64], %14 {strides = array<i32>} : memref<176x288xbf16, #tpu.memory_space<vmem>>, vector<176x32xbf16>,
    %c10 = arith.constant 10 : index
    %c0_16 = arith.constant 0 : index
    %16 = vector.load %arg9[%c10, %c0_16] : memref<208x32xbf16, #tpu.memory_space<vmem>>, vector<176x32xbf16>
    %c0_17 = arith.constant 0 : index
    %c96 = arith.constant 96 : index
    %17 = vector.load %arg10[%c0_17, %c96] : memref<176x288xbf16, #tpu.memory_space<vmem>>, vector<176x32xbf16>
    tpu.vector_store %arg10[%c0_17, %c96], %16 {strides = array<i32>} : memref<176x288xbf16, #tpu.memory_space<vmem>>, vector<176x32xbf16>,
    %c11 = arith.constant 11 : index
    %c0_18 = arith.constant 0 : index
    %18 = vector.load %arg9[%c11, %c0_18] : memref<208x32xbf16, #tpu.memory_space<vmem>>, vector<176x32xbf16>
    %c0_19 = arith.constant 0 : index
    %c128 = arith.constant 128 : index
    %19 = vector.load %arg10[%c0_19, %c128] : memref<176x288xbf16, #tpu.memory_space<vmem>>, vector<176x32xbf16>
    tpu.vector_store %arg10[%c0_19, %c128], %18 {strides = array<i32>} : memref<176x288xbf16, #tpu.memory_space<vmem>>, vector<176x32xbf16>,
    %c12 = arith.constant 12 : index
    %c0_20 = arith.constant 0 : index
    %20 = vector.load %arg9[%c12, %c0_20] : memref<208x32xbf16, #tpu.memory_space<vmem>>, vector<176x32xbf16>
    %c0_21 = arith.constant 0 : index
    %c160 = arith.constant 160 : index
    %21 = vector.load %arg10[%c0_21, %c160] : memref<176x288xbf16, #tpu.memory_space<vmem>>, vector<176x32xbf16>
    tpu.vector_store %arg10[%c0_21, %c160], %20 {strides = array<i32>} : memref<176x288xbf16, #tpu.memory_space<vmem>>, vector<176x32xbf16>,
    %c20 = arith.constant 20 : index
    %c0_22 = arith.constant 0 : index
    %22 = vector.load %arg9[%c20, %c0_22] : memref<208x32xbf16, #tpu.memory_space<vmem>>, vector<176x32xbf16>
    %c0_23 = arith.constant 0 : index
    %c192 = arith.constant 192 : index
    %23 = vector.load %arg10[%c0_23, %c192] : memref<176x288xbf16, #tpu.memory_space<vmem>>, vector<176x32xbf16>
    tpu.vector_store %arg10[%c0_23, %c192], %22 {strides = array<i32>} : memref<176x288xbf16, #tpu.memory_space<vmem>>, vector<176x32xbf16>,
    %c21 = arith.constant 21 : index
    %c0_24 = arith.constant 0 : index
    %24 = vector.load %arg9[%c21, %c0_24] : memref<208x32xbf16, #tpu.memory_space<vmem>>, vector<176x32xbf16>
    %c0_25 = arith.constant 0 : index
    %c224 = arith.constant 224 : index
    %25 = vector.load %arg10[%c0_25, %c224] : memref<176x288xbf16, #tpu.memory_space<vmem>>, vector<176x32xbf16>
    tpu.vector_store %arg10[%c0_25, %c224], %24 {strides = array<i32>} : memref<176x288xbf16, #tpu.memory_space<vmem>>, vector<176x32xbf16>,
    %c22 = arith.constant 22 : index
    %c0_26 = arith.constant 0 : index
    %26 = vector.load %arg9[%c22, %c0_26] : memref<208x32xbf16, #tpu.memory_space<vmem>>, vector<176x32xbf16>
    %c0_27 = arith.constant 0 : index
    %c256 = arith.constant 256 : index
    %27 = vector.load %arg10[%c0_27, %c256] : memref<176x288xbf16, #tpu.memory_space<vmem>>, vector<176x32xbf16>
    tpu.vector_store %arg10[%c0_27, %c256], %26 {strides = array<i32>} : memref<176x288xbf16, #tpu.memory_space<vmem>>, vector<176x32xbf16>,
    %c0_28 = arith.constant 0 : index
    %c0_29 = arith.constant 0 : index
    %28 = vector.load %arg10[%c0_28, %c0_29] : memref<176x288xbf16, #tpu.memory_space<vmem>>, vector<176x288xbf16>
    %c0_30 = arith.constant 0 : index
    %c0_31 = arith.constant 0 : index
    %29 = vector.load %arg4[%c0_30, %c0_31] : memref<288x64xbf16, #tpu.memory_space<vmem>>, vector<288x64xbf16>
    %cst_32 = arith.constant dense<0.000000e+00> : vector<176x64xf32>
    %30 = tpu.matmul %28, %29, %cst_32 {dimension_numbers = #tpu.dot_dimension_numbers<[1], [0], [0], [1], [0, 0, 1, 1], [], []>} : vector<176x288xbf16>, vector<288x64xbf16>, vector<176x64xf32> -> vector<176x64xf32>
    %c0_33 = arith.constant 0 : index
    %c0_34 = arith.constant 0 : index
    %31 = vector.load %arg5[%c0_33, %c0_34] : memref<1x64xf32, #tpu.memory_space<vmem>>, vector<1x64xf32>
    %32 = vector.broadcast %31 : vector<1x64xf32> to vector<176x64xf32>
    %33 = arith.addf %30, %32 : vector<176x64xf32>
    %cst_35 = arith.constant 0.000000e+00 : f32
    %34 = vector.broadcast %cst_35 : f32 to vector<176x64xf32>
    %35 = arith.maximumf %33, %34 : vector<176x64xf32>
    %36 = arith.truncf %35 : vector<176x64xf32> to vector<176x64xbf16>
    %c0_36 = arith.constant 0 : index
    %c0_37 = arith.constant 0 : index
    %37 = vector.load %arg11[%c0_36, %c0_37] : memref<176x64xbf16, #tpu.memory_space<vmem>>, vector<176x64xbf16>
    tpu.vector_store %arg11[%c0_36, %c0_37], %36 {strides = array<i32>} : memref<176x64xbf16, #tpu.memory_space<vmem>>, vector<176x64xbf16>,
    %c0_38 = arith.constant 0 : index
    %c0_39 = arith.constant 0 : index
    %38 = vector.load %arg11[%c0_38, %c0_39] : memref<176x64xbf16, #tpu.memory_space<vmem>>, vector<144x64xbf16>
    %c0_40 = arith.constant 0 : index
    %c0_41 = arith.constant 0 : index
    %39 = vector.load %arg12[%c0_40, %c0_41] : memref<144x576xbf16, #tpu.memory_space<vmem>>, vector<144x64xbf16>
    tpu.vector_store %arg12[%c0_40, %c0_41], %38 {strides = array<i32>} : memref<144x576xbf16, #tpu.memory_space<vmem>>, vector<144x64xbf16>,
    %c1_42 = arith.constant 1 : index
    %c0_43 = arith.constant 0 : index
    %40 = vector.load %arg11[%c1_42, %c0_43] : memref<176x64xbf16, #tpu.memory_space<vmem>>, vector<144x64xbf16>
    %c0_44 = arith.constant 0 : index
    %c64_45 = arith.constant 64 : index
    %41 = vector.load %arg12[%c0_44, %c64_45] : memref<144x576xbf16, #tpu.memory_space<vmem>>, vector<144x64xbf16>
    tpu.vector_store %arg12[%c0_44, %c64_45], %40 {strides = array<i32>} : memref<144x576xbf16, #tpu.memory_space<vmem>>, vector<144x64xbf16>,
    %c2_46 = arith.constant 2 : index
    %c0_47 = arith.constant 0 : index
    %42 = vector.load %arg11[%c2_46, %c0_47] : memref<176x64xbf16, #tpu.memory_space<vmem>>, vector<144x64xbf16>
    %c0_48 = arith.constant 0 : index
    %c128_49 = arith.constant 128 : index
    %43 = vector.load %arg12[%c0_48, %c128_49] : memref<144x576xbf16, #tpu.memory_space<vmem>>, vector<144x64xbf16>
    tpu.vector_store %arg12[%c0_48, %c128_49], %42 {strides = array<i32>} : memref<144x576xbf16, #tpu.memory_space<vmem>>, vector<144x64xbf16>,
    %c10_50 = arith.constant 10 : index
    %c0_51 = arith.constant 0 : index
    %44 = vector.load %arg11[%c10_50, %c0_51] : memref<176x64xbf16, #tpu.memory_space<vmem>>, vector<144x64xbf16>
    %c0_52 = arith.constant 0 : index
    %c192_53 = arith.constant 192 : index
    %45 = vector.load %arg12[%c0_52, %c192_53] : memref<144x576xbf16, #tpu.memory_space<vmem>>, vector<144x64xbf16>
    tpu.vector_store %arg12[%c0_52, %c192_53], %44 {strides = array<i32>} : memref<144x576xbf16, #tpu.memory_space<vmem>>, vector<144x64xbf16>,
    %c11_54 = arith.constant 11 : index
    %c0_55 = arith.constant 0 : index
    %46 = vector.load %arg11[%c11_54, %c0_55] : memref<176x64xbf16, #tpu.memory_space<vmem>>, vector<144x64xbf16>
    %c0_56 = arith.constant 0 : index
    %c256_57 = arith.constant 256 : index
    %47 = vector.load %arg12[%c0_56, %c256_57] : memref<144x576xbf16, #tpu.memory_space<vmem>>, vector<144x64xbf16>
    tpu.vector_store %arg12[%c0_56, %c256_57], %46 {strides = array<i32>} : memref<144x576xbf16, #tpu.memory_space<vmem>>, vector<144x64xbf16>,
    %c12_58 = arith.constant 12 : index
    %c0_59 = arith.constant 0 : index
    %48 = vector.load %arg11[%c12_58, %c0_59] : memref<176x64xbf16, #tpu.memory_space<vmem>>, vector<144x64xbf16>
    %c0_60 = arith.constant 0 : index
    %c320 = arith.constant 320 : index
    %49 = vector.load %arg12[%c0_60, %c320] : memref<144x576xbf16, #tpu.memory_space<vmem>>, vector<144x64xbf16>
    tpu.vector_store %arg12[%c0_60, %c320], %48 {strides = array<i32>} : memref<144x576xbf16, #tpu.memory_space<vmem>>, vector<144x64xbf16>,
    %c20_61 = arith.constant 20 : index
    %c0_62 = arith.constant 0 : index
    %50 = vector.load %arg11[%c20_61, %c0_62] : memref<176x64xbf16, #tpu.memory_space<vmem>>, vector<144x64xbf16>
    %c0_63 = arith.constant 0 : index
    %c384 = arith.constant 384 : index
    %51 = vector.load %arg12[%c0_63, %c384] : memref<144x576xbf16, #tpu.memory_space<vmem>>, vector<144x64xbf16>
    tpu.vector_store %arg12[%c0_63, %c384], %50 {strides = array<i32>} : memref<144x576xbf16, #tpu.memory_space<vmem>>, vector<144x64xbf16>,
    %c21_64 = arith.constant 21 : index
    %c0_65 = arith.constant 0 : index
    %52 = vector.load %arg11[%c21_64, %c0_65] : memref<176x64xbf16, #tpu.memory_space<vmem>>, vector<144x64xbf16>
    %c0_66 = arith.constant 0 : index
    %c448 = arith.constant 448 : index
    %53 = vector.load %arg12[%c0_66, %c448] : memref<144x576xbf16, #tpu.memory_space<vmem>>, vector<144x64xbf16>
    tpu.vector_store %arg12[%c0_66, %c448], %52 {strides = array<i32>} : memref<144x576xbf16, #tpu.memory_space<vmem>>, vector<144x64xbf16>,
    %c22_67 = arith.constant 22 : index
    %c0_68 = arith.constant 0 : index
    %54 = vector.load %arg11[%c22_67, %c0_68] : memref<176x64xbf16, #tpu.memory_space<vmem>>, vector<144x64xbf16>
    %c0_69 = arith.constant 0 : index
    %c512 = arith.constant 512 : index
    %55 = vector.load %arg12[%c0_69, %c512] : memref<144x576xbf16, #tpu.memory_space<vmem>>, vector<144x64xbf16>
    tpu.vector_store %arg12[%c0_69, %c512], %54 {strides = array<i32>} : memref<144x576xbf16, #tpu.memory_space<vmem>>, vector<144x64xbf16>,
    %c0_70 = arith.constant 0 : index
    %c0_71 = arith.constant 0 : index
    %56 = vector.load %arg12[%c0_70, %c0_71] : memref<144x576xbf16, #tpu.memory_space<vmem>>, vector<144x576xbf16>
    %c0_72 = arith.constant 0 : index
    %c0_73 = arith.constant 0 : index
    %57 = vector.load %arg6[%c0_72, %c0_73] : memref<576x128xbf16, #tpu.memory_space<vmem>>, vector<576x128xbf16>
    %cst_74 = arith.constant dense<0.000000e+00> : vector<144x128xf32>
    %58 = tpu.matmul %56, %57, %cst_74 {dimension_numbers = #tpu.dot_dimension_numbers<[1], [0], [0], [1], [0, 0, 1, 1], [], []>} : vector<144x576xbf16>, vector<576x128xbf16>, vector<144x128xf32> -> vector<144x128xf32>
    %c0_75 = arith.constant 0 : index
    %c0_76 = arith.constant 0 : index
    %59 = vector.load %arg7[%c0_75, %c0_76] : memref<1x128xf32, #tpu.memory_space<vmem>>, vector<1x128xf32>
    %60 = vector.broadcast %59 : vector<1x128xf32> to vector<144x128xf32>
    %61 = arith.addf %58, %60 : vector<144x128xf32>
    %cst_77 = arith.constant 0.000000e+00 : f32
    %62 = vector.broadcast %cst_77 : f32 to vector<144x128xf32>
    %63 = arith.maximumf %61, %62 : vector<144x128xf32>
    %c0_78 = arith.constant 0 : index
    %c0_79 = arith.constant 0 : index
    %64 = vector.load %arg8[%c0_78, %c0_79] : memref<144x128xf32, #tpu.memory_space<vmem>>, vector<144x128xf32>
    tpu.vector_store %arg8[%c0_78, %c0_79], %63 {strides = array<i32>} : memref<144x128xf32, #tpu.memory_space<vmem>>, vector<144x128xf32>,
    return
  }
  func.func @transform_0(%arg0: i32) -> (i32, i32) {
    %c0_i32 = arith.constant 0 : i32
    %c0_i32_0 = arith.constant 0 : i32
    return %arg0, %c0_i32 : i32, i32
  }
  func.func @transform_1(%arg0: i32) -> (i32, i32) {
    %c0_i32 = arith.constant 0 : i32
    %c0_i32_0 = arith.constant 0 : i32
    %c0_i32_1 = arith.constant 0 : i32
    return %c0_i32, %c0_i32_0 : i32, i32
  }
  func.func @transform_2(%arg0: i32) -> (i32, i32) {
    %c0_i32 = arith.constant 0 : i32
    %c0_i32_0 = arith.constant 0 : i32
    %c0_i32_1 = arith.constant 0 : i32
    return %c0_i32, %c0_i32_0 : i32, i32
  }
  func.func @transform_3(%arg0: i32) -> (i32, i32) {
    %c0_i32 = arith.constant 0 : i32
    %c0_i32_0 = arith.constant 0 : i32
    %c0_i32_1 = arith.constant 0 : i32
    return %c0_i32, %c0_i32_0 : i32, i32
  }
  func.func @transform_4(%arg0: i32) -> (i32, i32) {
    %c0_i32 = arith.constant 0 : i32
    %c0_i32_0 = arith.constant 0 : i32
    %c0_i32_1 = arith.constant 0 : i32
    return %c0_i32, %c0_i32_0 : i32, i32
  }
  func.func @transform_5(%arg0: i32) -> (i32, i32) {
    %c0_i32 = arith.constant 0 : i32
    %c0_i32_0 = arith.constant 0 : i32
    %c0_i32_1 = arith.constant 0 : i32
    return %c0_i32, %c0_i32_0 : i32, i32
  }
  func.func @transform_6(%arg0: i32) -> (i32, i32) {
    %c0_i32 = arith.constant 0 : i32
    %c0_i32_0 = arith.constant 0 : i32
    %c0_i32_1 = arith.constant 0 : i32
    return %c0_i32, %c0_i32_0 : i32, i32
  }
  func.func @transform_7(%arg0: i32) -> (i32, i32) {
    %c0_i32 = arith.constant 0 : i32
    %c0_i32_0 = arith.constant 0 : i32
    return %arg0, %c0_i32 : i32, i32
  }
}

</mosaic_0001>

<llo_original>
// kernel: _lambda_.1
$region0: #{_lambda_.1}
  #allocation0 [shape = 'u32[]', space=smem, size = 0x4, offset = 0x4, fixed_abs, tag = 'smem constant byte address 0x4 - core index']
  #allocation1 [shape = 'u32[144,128]{1,0:T(1,128)}', space=vmem, size = 0x12000, scoped, tag = 'internal scratch']
  #allocation2 [shape = 'bf16[208,32]{1,0:T(16,128)(2,1)}', space=vmem, size = 0xd000, scoped, tag = 'scratch operand']
  #allocation3 [shape = 'bf16[176,288]{1,0:T(16,128)(2,1)}', space=vmem, size = 0x21000, scoped, tag = 'scratch operand']
  #allocation4 [shape = 'bf16[176,64]{1,0:T(16,128)(2,1)}', space=vmem, size = 0xb000, scoped, tag = 'scratch operand']
  #allocation5 [shape = 'bf16[144,576]{1,0:T(16,128)(2,1)}', space=vmem, size = 0x2d000, scoped, tag = 'scratch operand']
  %s0 = inlined_call_operand.vmem [shape: bf16[208,72], index: 0, kind: input, shape index: {}]
  %s1 = inlined_call_operand.vmem [shape: bf16[72,32], index: 1, kind: input, shape index: {}]
  %s2 = inlined_call_operand.vmem [shape: f32[1,32], index: 2, kind: input, shape index: {}]
  %s3 = inlined_call_operand.vmem [shape: bf16[288,64], index: 3, kind: input, shape index: {}]
  %s4 = inlined_call_operand.vmem [shape: f32[1,64], index: 4, kind: input, shape index: {}]
  %s5 = inlined_call_operand.vmem [shape: bf16[576,128], index: 5, kind: input, shape index: {}]
  %s6 = inlined_call_operand.vmem [shape: f32[1,128], index: 6, kind: input, shape index: {}]
  %s7 = inlined_call_operand.vmem [shape: f32[144,128], index: 7, kind: output, shape index: {}]
  %s8 = sld [smem:[#allocation0]]
  $region38: #{_lambda_.1} parent=0
    _
  %s10 = ssub.s32 1, %s8
  %s11 = scalar_select 0, %s10, %s8
  // Predicated region
  $region2: #{_lambda_.1} parent=0 // pred_check
    _
  $region3: #{_lambda_.1} parent=0 // pred_check_branch
    %13 = sbr.rel (0) target = $region5
  $region4: #{_lambda_.1} parent=0 // pred_region
    _
  $region5: #{_lambda_.1} parent=0 // pred_fallthru
    _
  // Predicated region
  $region6: #{_lambda_.1} parent=0 // pred_check
    _
  $region7: #{_lambda_.1} parent=0 // pred_check_branch
    %15 = sbr.rel (0) target = $region9
  $region8: #{_lambda_.1} parent=0 // pred_region
    _
  $region9: #{_lambda_.1} parent=0 // pred_fallthru
    _
  // Predicated region
  $region10: #{_lambda_.1} parent=0 // pred_check
    _
  $region11: #{_lambda_.1} parent=0 // pred_check_branch
    %17 = sbr.rel (0) target = $region13
  $region12: #{_lambda_.1} parent=0 // pred_region
    _
  $region13: #{_lambda_.1} parent=0 // pred_fallthru
    _
  // Predicated region
  $region14: #{_lambda_.1} parent=0 // pred_check
    _
  $region15: #{_lambda_.1} parent=0 // pred_check_branch
    %19 = sbr.rel (0) target = $region17
  $region16: #{_lambda_.1} parent=0 // pred_region
    _
  $region17: #{_lambda_.1} parent=0 // pred_fallthru
    _
  // Predicated region
  $region18: #{_lambda_.1} parent=0 // pred_check
    _
  $region19: #{_lambda_.1} parent=0 // pred_check_branch
    %21 = sbr.rel (0) target = $region21
  $region20: #{_lambda_.1} parent=0 // pred_region
    _
  $region21: #{_lambda_.1} parent=0 // pred_fallthru
    _
  // Predicated region
  $region22: #{_lambda_.1} parent=0 // pred_check
    _
  $region23: #{_lambda_.1} parent=0 // pred_check_branch
    %23 = sbr.rel (0) target = $region25
  $region24: #{_lambda_.1} parent=0 // pred_region
    _
  $region25: #{_lambda_.1} parent=0 // pred_fallthru
    _
  // Predicated region
  $region26: #{_lambda_.1} parent=0 // pred_check
    _
  $region27: #{_lambda_.1} parent=0 // pred_check_branch
    %25 = sbr.rel (0) target = $region29
  $region28: #{_lambda_.1} parent=0 // pred_region
    _
  $region29: #{_lambda_.1} parent=0 // pred_fallthru
    _
  %v27 = vld [vmem:[%s0] sm:$0xf]
  %v28 = vld [vmem:[%s0 + $0x4] sm:$0xf]
  %v29 = vld [vmem:[%s0 + $0x8] sm:$0xf]
  %v30 = vld [vmem:[%s0 + $0xc] sm:$0xf]
  %v31 = vld [vmem:[%s0 + $0x10] sm:$0xf]
  %v32 = vld [vmem:[%s0 + $0x14] sm:$0xf]
  %v33 = vld [vmem:[%s0 + $0x18] sm:$0xf]
  %v34 = vld [vmem:[%s0 + $0x1c] sm:$0xf]
  %v35 = vld [vmem:[%s0 + $0x20] sm:$0xf]
  %v36 = vld [vmem:[%s0 + $0x24] sm:$0xf]
  %v37 = vld [vmem:[%s0 + $0x28] sm:$0xf]
  %v38 = vld [vmem:[%s0 + $0x2c] sm:$0xf]
  %v39 = vld [vmem:[%s0 + $0x30] sm:$0xf]
  %v40 = vld [vmem:[%s0 + $0x34] sm:$0xf]
  %v41 = vld [vmem:[%s0 + $0x38] sm:$0xf]
  %v42 = vld [vmem:[%s0 + $0x3c] sm:$0xf]
  %v43 = vld [vmem:[%s0 + $0x40] sm:$0xf]
  %v44 = vld [vmem:[%s0 + $0x44] sm:$0xf]
  %v45 = vld [vmem:[%s0 + $0x48] sm:$0xf]
  %v46 = vld [vmem:[%s0 + $0x4c] sm:$0xf]
  %v47 = vld [vmem:[%s0 + $0x50] sm:$0xf]
  %v48 = vld [vmem:[%s0 + $0x54] sm:$0xf]
  %v49 = vld [vmem:[%s0 + $0x58] sm:$0xf]
  %v50 = vld [vmem:[%s0 + $0x5c] sm:$0xf]
  %v51 = vld [vmem:[%s0 + $0x60] sm:$0xf]
  %v52 = vld [vmem:[%s0 + $0x64] sm:$0xf]
  %v53 = vld [vmem:[%s1] sm:$0xf]
  %v54 = vld [vmem:[%s1 + $0x4] sm:$0xf]
  %v55 = vld [vmem:[%s1 + $0x8] sm:$0xf]
  %v56 = vld [vmem:[%s1 + $0xc] sm:$0xf]
  %v57 = vld [vmem:[%s1 + $0x10] sm:$0xf]
  %v58 = vld [vmem:[%s1 + $0x14] sm:$0xf]
  %v59 = vld [vmem:[%s1 + $0x18] sm:$0xf]
  %v60 = vld [vmem:[%s1 + $0x1c] sm:$0xf]
  %v61 = vld [vmem:[%s1 + $0x20] sm:$0xf]
  %v62 = vld [vmem:[%s2] sm:$0x1]
  %v64 = vlaneseq
  %v65 = vshrl.u32 %v64, 7
  %v66 = vsub.s32 0, %v65
  %v67 = vrot.slane %v62, %v66
  %v95 = vunpack.c.l.b16 %v27
  %v96 = vunpack.c.l.b16 %v28
  %v97 = vunpack.c.l.b16 %v29
  %v98 = vunpack.c.l.b16 %v30
  %v99 = vunpack.c.l.b16 %v31
  %v100 = vunpack.c.l.b16 %v32
  %v101 = vunpack.c.l.b16 %v33
  %v102 = vunpack.c.l.b16 %v34
  %v103 = vunpack.c.l.b16 %v35
  %v104 = vunpack.c.l.b16 %v36
  %v105 = vunpack.c.l.b16 %v37
  %v106 = vunpack.c.l.b16 %v38
  %v107 = vunpack.c.l.b16 %v39
  %v108 = vunpack.c.l.b16 %v40
  %v109 = vunpack.c.l.b16 %v41
  %v110 = vunpack.c.l.b16 %v42
  %v111 = vunpack.c.l.b16 %v43
  %v112 = vunpack.c.l.b16 %v44
  %v113 = vunpack.c.l.b16 %v45
  %v114 = vunpack.c.l.b16 %v46
  %v115 = vunpack.c.l.b16 %v47
  %v116 = vunpack.c.l.b16 %v48
  %v117 = vunpack.c.l.b16 %v49
  %v118 = vunpack.c.l.b16 %v50
  %v119 = vunpack.c.l.b16 %v51
  %v120 = vunpack.c.l.b16 %v52
  %v121 = vpack.c.b16 %v96, %v95
  %v122 = vpack.c.b16 %v98, %v97
  %v123 = vpack.c.b16 %v100, %v99
  %v124 = vpack.c.b16 %v102, %v101
  %v125 = vpack.c.b16 %v104, %v103
  %v126 = vpack.c.b16 %v106, %v105
  %v127 = vpack.c.b16 %v108, %v107
  %v128 = vpack.c.b16 %v110, %v109
  %v129 = vpack.c.b16 %v112, %v111
  %v130 = vpack.c.b16 %v114, %v113
  %v131 = vpack.c.b16 %v116, %v115
  %v132 = vpack.c.b16 %v118, %v117
  %v133 = vpack.c.b16 %v120, %v119
  %v143 = vunpack.c.l.b16 %v53
  %v144 = vunpack.c.l.b16 %v54
  %v145 = vunpack.c.l.b16 %v55
  %v146 = vunpack.c.l.b16 %v56
  %v147 = vunpack.c.l.b16 %v57
  %v148 = vunpack.c.l.b16 %v58
  %v149 = vunpack.c.l.b16 %v59
  %v150 = vunpack.c.l.b16 %v60
  %v151 = vunpack.c.l.b16 %v61
  %v152 = vpack.c.b16 %v144, %v143
  %v153 = vpack.c.b16 %v146, %v145
  %v154 = vpack.c.b16 %v148, %v147
  %v155 = vpack.c.b16 %v150, %v149
  %v156 = vpack.c.b16 %v151, %v151
  %vm161 = vcmask 588800
  %v163 = vsel %vm161, %v121, 0
  %v166 = vsel %vm161, %v122, 0
  %v169 = vsel %vm161, %v123, 0
  %v172 = vsel %vm161, %v124, 0
  %v175 = vsel %vm161, %v125, 0
  %v178 = vsel %vm161, %v126, 0
  %v181 = vsel %vm161, %v127, 0
  %v184 = vsel %vm161, %v128, 0
  %v187 = vsel %vm161, %v129, 0
  %v190 = vsel %vm161, %v130, 0
  %v193 = vsel %vm161, %v131, 0
  %v196 = vsel %vm161, %v132, 0
  %v199 = vsel %vm161, %v133, 0
  %vm201 = vcmask 1043456
  %v203 = vsel %vm201, %v156, 0
  %205 = vmatprep.subr.bf16.mxu0 0
  %206 = vmatpush1.bf16.msra.mxu0 %v152
  %207 = vmatprep.subr.bf16.mxu0 0
  %208 = vmatpush1.bf16.msra.mxu0 %v153
  %209 = vmatprep.subr.bf16.mxu0 0
  %210 = vmatpush1.bf16.msra.mxu0 %v154
  %211 = vmatprep.subr.bf16.mxu0 0
  %212 = vmatpush1.bf16.msra.mxu0 %v155
  %213 = vmatprep.subr.bf16.mxu0 0
  %214 = vmatpush1.bf16.msra.mxu0 %v203
  %215 = vmatprep.subr.bf16.mxu0 0
  %216 = vmatpush1.bf16.msra.mxu0 0
  %217 = vmatprep.subr.bf16.mxu0 0
  %218 = vmatpush1.bf16.msra.mxu0 0
  %219 = vmatprep.subr.bf16.mxu0 0
  %220 = vmatpush1.bf16.msra.mxu0 0
  %221 = vmatprep.subr.bf16.mxu0 0
  %222 = vmatpush1.bf16.msra.mxu0 0
  %223 = vmatprep.subr.bf16.mxu0 0
  %224 = vmatpush1.bf16.msra.mxu0 0
  %225 = vmatprep.subr.bf16.mxu0 0
  %226 = vmatpush1.bf16.msra.mxu0 0
  %227 = vmatprep.subr.bf16.mxu0 0
  %228 = vmatpush1.bf16.msra.mxu0 0
  %229 = vmatprep.subr.bf16.mxu0 0
  %230 = vmatpush1.bf16.msra.mxu0 0
  %231 = vmatprep.subr.bf16.mxu0 0
  %232 = vmatpush1.bf16.msra.mxu0 0
  %233 = vmatprep.subr.bf16.mxu0 0
  %234 = vmatpush1.bf16.msra.mxu0 0
  %235 = vmatprep.subr.bf16.mxu0 0
  %236 = vmatpush1.bf16.msra.mxu0 0
  %237 = vmatprep.mubr.bf16.mxu0 0
  %238 = vmatmul.mubr.bf16.gmra.mrb[0].mxu0 %v163
  %v239 = vpop.f32.mrb[0].mxu0
  %v240 = vadd.f32 %v67, %v239
  %v241 = vpop.f32.mrb[0].mxu0
  %v242 = vpop.f32.mrb[0].mxu0
  %v243 = vadd.f32 %v67, %v242
  %v244 = vpop.f32.mrb[0].mxu0
  %245 = vmatprep.mubr.bf16.mxu0 0
  %246 = vmatmul.mubr.bf16.gmra.mrb[0].mxu0 %v166
  %v247 = vpop.f32.mrb[0].mxu0
  %v248 = vadd.f32 %v67, %v247
  %v249 = vpop.f32.mrb[0].mxu0
  %v250 = vpop.f32.mrb[0].mxu0
  %v251 = vadd.f32 %v67, %v250
  %v252 = vpop.f32.mrb[0].mxu0
  %253 = vmatprep.mubr.bf16.mxu0 0
  %254 = vmatmul.mubr.bf16.gmra.mrb[0].mxu0 %v169
  %v255 = vpop.f32.mrb[0].mxu0
  %v256 = vadd.f32 %v67, %v255
  %v257 = vpop.f32.mrb[0].mxu0
  %v258 = vpop.f32.mrb[0].mxu0
  %v259 = vadd.f32 %v67, %v258
  %v260 = vpop.f32.mrb[0].mxu0
  %261 = vmatprep.mubr.bf16.mxu0 0
  %262 = vmatmul.mubr.bf16.gmra.mrb[0].mxu0 %v172
  %v263 = vpop.f32.mrb[0].mxu0
  %v264 = vadd.f32 %v67, %v263
  %v265 = vpop.f32.mrb[0].mxu0
  %v266 = vpop.f32.mrb[0].mxu0
  %v267 = vadd.f32 %v67, %v266
  %v268 = vpop.f32.mrb[0].mxu0
  %269 = vmatprep.mubr.bf16.mxu0 0
  %270 = vmatmul.mubr.bf16.gmra.mrb[0].mxu0 %v175
  %v271 = vpop.f32.mrb[0].mxu0
  %v272 = vadd.f32 %v67, %v271
  %v273 = vpop.f32.mrb[0].mxu0
  %v274 = vpop.f32.mrb[0].mxu0
  %v275 = vadd.f32 %v67, %v274
  %v276 = vpop.f32.mrb[0].mxu0
  %277 = vmatprep.mubr.bf16.mxu0 0
  %278 = vmatmul.mubr.bf16.gmra.mrb[0].mxu0 %v178
  %v279 = vpop.f32.mrb[0].mxu0
  %v280 = vadd.f32 %v67, %v279
  %v281 = vpop.f32.mrb[0].mxu0
  %v282 = vpop.f32.mrb[0].mxu0
  %v283 = vadd.f32 %v67, %v282
  %v284 = vpop.f32.mrb[0].mxu0
  %285 = vmatprep.mubr.bf16.mxu0 0
  %286 = vmatmul.mubr.bf16.gmra.mrb[0].mxu0 %v181
  %v287 = vpop.f32.mrb[0].mxu0
  %v288 = vadd.f32 %v67, %v287
  %v289 = vpop.f32.mrb[0].mxu0
  %v290 = vpop.f32.mrb[0].mxu0
  %v291 = vadd.f32 %v67, %v290
  %v292 = vpop.f32.mrb[0].mxu0
  %293 = vmatprep.mubr.bf16.mxu0 0
  %294 = vmatmul.mubr.bf16.gmra.mrb[0].mxu0 %v184
  %v295 = vpop.f32.mrb[0].mxu0
  %v296 = vadd.f32 %v67, %v295
  %v297 = vpop.f32.mrb[0].mxu0
  %v298 = vpop.f32.mrb[0].mxu0
  %v299 = vadd.f32 %v67, %v298
  %v300 = vpop.f32.mrb[0].mxu0
  %301 = vmatprep.mubr.bf16.mxu0 0
  %302 = vmatmul.mubr.bf16.gmra.mrb[0].mxu0 %v187
  %v303 = vpop.f32.mrb[0].mxu0
  %v304 = vadd.f32 %v67, %v303
  %v305 = vpop.f32.mrb[0].mxu0
  %v306 = vpop.f32.mrb[0].mxu0
  %v307 = vadd.f32 %v67, %v306
  %v308 = vpop.f32.mrb[0].mxu0
  %309 = vmatprep.mubr.bf16.mxu0 0
  %310 = vmatmul.mubr.bf16.gmra.mrb[0].mxu0 %v190
  %v311 = vpop.f32.mrb[0].mxu0
  %v312 = vadd.f32 %v67, %v311
  %v313 = vpop.f32.mrb[0].mxu0
  %v314 = vpop.f32.mrb[0].mxu0
  %v315 = vadd.f32 %v67, %v314
  %v316 = vpop.f32.mrb[0].mxu0
  %317 = vmatprep.mubr.bf16.mxu0 0
  %318 = vmatmul.mubr.bf16.gmra.mrb[0].mxu0 %v193
  %v319 = vpop.f32.mrb[0].mxu0
  %v320 = vadd.f32 %v67, %v319
  %v321 = vpop.f32.mrb[0].mxu0
  %v322 = vpop.f32.mrb[0].mxu0
  %v323 = vadd.f32 %v67, %v322
  %v324 = vpop.f32.mrb[0].mxu0
  %325 = vmatprep.mubr.bf16.mxu0 0
  %326 = vmatmul.mubr.bf16.gmra.mrb[0].mxu0 %v196
  %v327 = vpop.f32.mrb[0].mxu0
  %v328 = vadd.f32 %v67, %v327
  %v329 = vpop.f32.mrb[0].mxu0
  %v330 = vpop.f32.mrb[0].mxu0
  %v331 = vadd.f32 %v67, %v330
  %v332 = vpop.f32.mrb[0].mxu0
  %333 = vmatprep.mubr.bf16.mxu0 0
  %334 = vmatmul.mubr.bf16.gmra.mrb[0].mxu0 %v199
  %v335 = vpop.f32.mrb[0].mxu0
  %v336 = vadd.f32 %v67, %v335
  %v337 = vpop.f32.mrb[0].mxu0
  %v338 = vpop.f32.mrb[0].mxu0
  %v339 = vadd.f32 %v67, %v338
  %v340 = vpop.f32.mrb[0].mxu0
  %341 = vdwg.mxu0
  %v342 = vmax.f32 %v240, 0.0
  %v343 = vmax.f32 %v243, 0.0
  %v344 = vmax.f32 %v248, 0.0
  %v345 = vmax.f32 %v251, 0.0
  %v346 = vmax.f32 %v256, 0.0
  %v347 = vmax.f32 %v259, 0.0
  %v348 = vmax.f32 %v264, 0.0
  %v349 = vmax.f32 %v267, 0.0
  %v350 = vmax.f32 %v272, 0.0
  %v351 = vmax.f32 %v275, 0.0
  %v352 = vmax.f32 %v280, 0.0
  %v353 = vmax.f32 %v283, 0.0
  %v354 = vmax.f32 %v288, 0.0
  %v355 = vmax.f32 %v291, 0.0
  %v356 = vmax.f32 %v296, 0.0
  %v357 = vmax.f32 %v299, 0.0
  %v358 = vmax.f32 %v304, 0.0
  %v359 = vmax.f32 %v307, 0.0
  %v360 = vmax.f32 %v312, 0.0
  %v361 = vmax.f32 %v315, 0.0
  %v362 = vmax.f32 %v320, 0.0
  %v363 = vmax.f32 %v323, 0.0
  %v364 = vmax.f32 %v328, 0.0
  %v365 = vmax.f32 %v331, 0.0
  %v366 = vmax.f32 %v336, 0.0
  %v367 = vmax.f32 %v339, 0.0
  %v368 = vpack.c.bf16 %v343, %v342
  %v369 = vpack.c.bf16 %v345, %v344
  %v370 = vpack.c.bf16 %v347, %v346
  %v371 = vpack.c.bf16 %v349, %v348
  %v372 = vpack.c.bf16 %v351, %v350
  %v373 = vpack.c.bf16 %v353, %v352
  %v374 = vpack.c.bf16 %v355, %v354
  %v375 = vpack.c.bf16 %v357, %v356
  %v376 = vpack.c.bf16 %v359, %v358
  %v377 = vpack.c.bf16 %v361, %v360
  %v378 = vpack.c.bf16 %v363, %v362
  %v379 = vpack.c.bf16 %v365, %v364
  %v380 = vpack.c.bf16 %v367, %v366
  %vm381 = vcmask 261120
  %382 = vst.msk [vmem:[#allocation2] sm:$0xff] %vm381, %v368
  %383 = vst.msk [vmem:[#allocation2 + $0x8] sm:$0xff] %vm381, %v369
  %384 = vst.msk [vmem:[#allocation2 + $0x10] sm:$0xff] %vm381, %v370
  %385 = vst.msk [vmem:[#allocation2 + $0x18] sm:$0xff] %vm381, %v371
  %386 = vst.msk [vmem:[#allocation2 + $0x20] sm:$0xff] %vm381, %v372
  %387 = vst.msk [vmem:[#allocation2 + $0x28] sm:$0xff] %vm381, %v373
  %388 = vst.msk [vmem:[#allocation2 + $0x30] sm:$0xff] %vm381, %v374
  %389 = vst.msk [vmem:[#allocation2 + $0x38] sm:$0xff] %vm381, %v375
  %390 = vst.msk [vmem:[#allocation2 + $0x40] sm:$0xff] %vm381, %v376
  %391 = vst.msk [vmem:[#allocation2 + $0x48] sm:$0xff] %vm381, %v377
  %392 = vst.msk [vmem:[#allocation2 + $0x50] sm:$0xff] %vm381, %v378
  %393 = vst.msk [vmem:[#allocation2 + $0x58] sm:$0xff] %vm381, %v379
  %394 = vst.msk [vmem:[#allocation2 + $0x60] sm:$0xff] %vm381, %v380
  %v395 = vld [vmem:[#allocation2] sm:$0xff]
  %v396 = vld [vmem:[#allocation2 + $0x8] sm:$0xff]
  %v397 = vld [vmem:[#allocation2 + $0x10] sm:$0xff]
  %v398 = vld [vmem:[#allocation2 + $0x18] sm:$0xff]
  %v399 = vld [vmem:[#allocation2 + $0x20] sm:$0xff]
  %v400 = vld [vmem:[#allocation2 + $0x28] sm:$0xff]
  %v401 = vld [vmem:[#allocation2 + $0x30] sm:$0xff]
  %v402 = vld [vmem:[#allocation2 + $0x38] sm:$0xff]
  %v403 = vld [vmem:[#allocation2 + $0x40] sm:$0xff]
  %v404 = vld [vmem:[#allocation2 + $0x48] sm:$0xff]
  %v405 = vld [vmem:[#allocation2 + $0x50] sm:$0xff]
  %406 = vst.msk [vmem:[#allocation3] sm:$0xff] %vm381, %v395
  %407 = vst.msk [vmem:[#allocation3 + $0x18] sm:$0xff] %vm381, %v396
  %408 = vst.msk [vmem:[#allocation3 + $0x30] sm:$0xff] %vm381, %v397
  %409 = vst.msk [vmem:[#allocation3 + $0x48] sm:$0xff] %vm381, %v398
  %410 = vst.msk [vmem:[#allocation3 + $0x60] sm:$0xff] %vm381, %v399
  %411 = vst.msk [vmem:[#allocation3 + $0x78] sm:$0xff] %vm381, %v400
  %412 = vst.msk [vmem:[#allocation3 + $0x90] sm:$0xff] %vm381, %v401
  %413 = vst.msk [vmem:[#allocation3 + $0xa8] sm:$0xff] %vm381, %v402
  %414 = vst.msk [vmem:[#allocation3 + $0xc0] sm:$0xff] %vm381, %v403
  %415 = vst.msk [vmem:[#allocation3 + $0xd8] sm:$0xff] %vm381, %v404
  %416 = vst.msk [vmem:[#allocation3 + $0xf0] sm:$0xff] %vm381, %v405
  %v417 = vld [vmem:[#allocation2] sm:$0xff]
  %v418 = vld [vmem:[#allocation2 + $0x8] sm:$0xff]
  %v419 = vld [vmem:[#allocation2 + $0x10] sm:$0xff]
  %v420 = vld [vmem:[#allocation2 + $0x18] sm:$0xff]
  %v421 = vld [vmem:[#allocation2 + $0x20] sm:$0xff]
  %v422 = vld [vmem:[#allocation2 + $0x28] sm:$0xff]
  %v423 = vld [vmem:[#allocation2 + $0x30] sm:$0xff]
  %v424 = vld [vmem:[#allocation2 + $0x38] sm:$0xff]
  %v425 = vld [vmem:[#allocation2 + $0x40] sm:$0xff]
  %v426 = vld [vmem:[#allocation2 + $0x48] sm:$0xff]
  %v427 = vld [vmem:[#allocation2 + $0x50] sm:$0xff]
  %v428 = vld [vmem:[#allocation2 + $0x58] sm:$0x1]
  %vm429 = vsmask.f32 7424
  %v431 = vshrl.u32 %v417, 16
  %v433 = vshll.u32 %v417, 16
  %v435 = vrot.slane %v433, 1
  %v436 = vor.u32 %v431, %v435
  %v438 = vshll.u32 %v418, 16
  %v440 = vrot.slane %v438, 1
  %v441 = vsel %vm429, %v436, %v440
  %v442 = vshrl.u32 %v418, 16
  %v444 = vor.u32 %v442, %v440
  %v446 = vshll.u32 %v419, 16
  %v448 = vrot.slane %v446, 1
  %v449 = vsel %vm429, %v444, %v448
  %v450 = vshrl.u32 %v419, 16
  %v452 = vor.u32 %v450, %v448
  %v454 = vshll.u32 %v420, 16
  %v456 = vrot.slane %v454, 1
  %v457 = vsel %vm429, %v452, %v456
  %v458 = vshrl.u32 %v420, 16
  %v460 = vor.u32 %v458, %v456
  %v462 = vshll.u32 %v421, 16
  %v464 = vrot.slane %v462, 1
  %v465 = vsel %vm429, %v460, %v464
  %v466 = vshrl.u32 %v421, 16
  %v468 = vor.u32 %v466, %v464
  %v470 = vshll.u32 %v422, 16
  %v472 = vrot.slane %v470, 1
  %v473 = vsel %vm429, %v468, %v472
  %v474 = vshrl.u32 %v422, 16
  %v476 = vor.u32 %v474, %v472
  %v478 = vshll.u32 %v423, 16
  %v480 = vrot.slane %v478, 1
  %v481 = vsel %vm429, %v476, %v480
  %v482 = vshrl.u32 %v423, 16
  %v484 = vor.u32 %v482, %v480
  %v486 = vshll.u32 %v424, 16
  %v488 = vrot.slane %v486, 1
  %v489 = vsel %vm429, %v484, %v488
  %v490 = vshrl.u32 %v424, 16
  %v492 = vor.u32 %v490, %v488
  %v494 = vshll.u32 %v425, 16
  %v496 = vrot.slane %v494, 1
  %v497 = vsel %vm429, %v492, %v496
  %v498 = vshrl.u32 %v425, 16
  %v500 = vor.u32 %v498, %v496
  %v502 = vshll.u32 %v426, 16
  %v504 = vrot.slane %v502, 1
  %v505 = vsel %vm429, %v500, %v504
  %v506 = vshrl.u32 %v426, 16
  %v508 = vor.u32 %v506, %v504
  %v510 = vshll.u32 %v427, 16
  %v512 = vrot.slane %v510, 1
  %v513 = vsel %vm429, %v508, %v512
  %v514 = vshrl.u32 %v427, 16
  %v516 = vor.u32 %v514, %v512
  %v518 = vshll.u32 %v428, 16
  %v520 = vrot.slane %v518, 1
  %v521 = vsel %vm429, %v516, %v520
  %522 = vrot.lane.b32.xlu0 %v441, 32
  %v523 = vpop.permute.xlu0 %522
  %524 = vrot.lane.b32.xlu0 %v449, 32
  %v525 = vpop.permute.xlu0 %524
  %526 = vrot.lane.b32.xlu0 %v457, 32
  %v527 = vpop.permute.xlu0 %526
  %528 = vrot.lane.b32.xlu0 %v465, 32
  %v529 = vpop.permute.xlu0 %528
  %530 = vrot.lane.b32.xlu0 %v473, 32
  %v531 = vpop.permute.xlu0 %530
  %532 = vrot.lane.b32.xlu0 %v481, 32
  %v533 = vpop.permute.xlu0 %532
  %534 = vrot.lane.b32.xlu0 %v489, 32
  %v535 = vpop.permute.xlu0 %534
  %536 = vrot.lane.b32.xlu0 %v497, 32
  %v537 = vpop.permute.xlu0 %536
  %538 = vrot.lane.b32.xlu0 %v505, 32
  %v539 = vpop.permute.xlu0 %538
  %540 = vrot.lane.b32.xlu0 %v513, 32
  %v541 = vpop.permute.xlu0 %540
  %542 = vrot.lane.b32.xlu0 %v521, 32
  %v543 = vpop.permute.xlu0 %542
  %vm555 = vcmask 523520
  %556 = vst.msk [vmem:[#allocation3] sm:$0xff] %vm555, %v523
  %557 = vst.msk [vmem:[#allocation3 + $0x18] sm:$0xff] %vm555, %v525
  %558 = vst.msk [vmem:[#allocation3 + $0x30] sm:$0xff] %vm555, %v527
  %559 = vst.msk [vmem:[#allocation3 + $0x48] sm:$0xff] %vm555, %v529
  %560 = vst.msk [vmem:[#allocation3 + $0x60] sm:$0xff] %vm555, %v531
  %561 = vst.msk [vmem:[#allocation3 + $0x78] sm:$0xff] %vm555, %v533
  %562 = vst.msk [vmem:[#allocation3 + $0x90] sm:$0xff] %vm555, %v535
  %563 = vst.msk [vmem:[#allocation3 + $0xa8] sm:$0xff] %vm555, %v537
  %564 = vst.msk [vmem:[#allocation3 + $0xc0] sm:$0xff] %vm555, %v539
  %565 = vst.msk [vmem:[#allocation3 + $0xd8] sm:$0xff] %vm555, %v541
  %566 = vst.msk [vmem:[#allocation3 + $0xf0] sm:$0xff] %vm555, %v543
  %v567 = vld [vmem:[#allocation2] sm:$0xfe]
  %v568 = vld [vmem:[#allocation2 + $0x8] sm:$0xff]
  %v569 = vld [vmem:[#allocation2 + $0x10] sm:$0xff]
  %v570 = vld [vmem:[#allocation2 + $0x18] sm:$0xff]
  %v571 = vld [vmem:[#allocation2 + $0x20] sm:$0xff]
  %v572 = vld [vmem:[#allocation2 + $0x28] sm:$0xff]
  %v573 = vld [vmem:[#allocation2 + $0x30] sm:$0xff]
  %v574 = vld [vmem:[#allocation2 + $0x38] sm:$0xff]
  %v575 = vld [vmem:[#allocation2 + $0x40] sm:$0xff]
  %v576 = vld [vmem:[#allocation2 + $0x48] sm:$0xff]
  %v577 = vld [vmem:[#allocation2 + $0x50] sm:$0xff]
  %v578 = vld [vmem:[#allocation2 + $0x58] sm:$0x1]
  %vm591 = vcmask 1046528
  %v592 = vrot.slane %v567, 1
  %v593 = vrot.slane %v568, 1
  %v594 = vsel %vm591, %v592, %v593
  %v595 = vrot.slane %v569, 1
  %v596 = vsel %vm591, %v593, %v595
  %v597 = vrot.slane %v570, 1
  %v598 = vsel %vm591, %v595, %v597
  %v599 = vrot.slane %v571, 1
  %v600 = vsel %vm591, %v597, %v599
  %v601 = vrot.slane %v572, 1
  %v602 = vsel %vm591, %v599, %v601
  %v603 = vrot.slane %v573, 1
  %v604 = vsel %vm591, %v601, %v603
  %v605 = vrot.slane %v574, 1
  %v606 = vsel %vm591, %v603, %v605
  %v607 = vrot.slane %v575, 1
  %v608 = vsel %vm591, %v605, %v607
  %v609 = vrot.slane %v576, 1
  %v610 = vsel %vm591, %v607, %v609
  %v611 = vrot.slane %v577, 1
  %v612 = vsel %vm591, %v609, %v611
  %v613 = vrot.slane %v578, 1
  %v614 = vsel %vm591, %v611, %v613
  %615 = vrot.lane.b32.xlu0 %v594, 64
  %v616 = vpop.permute.xlu0 %615
  %617 = vrot.lane.b32.xlu0 %v596, 64
  %v618 = vpop.permute.xlu0 %617
  %619 = vrot.lane.b32.xlu0 %v598, 64
  %v620 = vpop.permute.xlu0 %619
  %621 = vrot.lane.b32.xlu0 %v600, 64
  %v622 = vpop.permute.xlu0 %621
  %623 = vrot.lane.b32.xlu0 %v602, 64
  %v624 = vpop.permute.xlu0 %623
  %625 = vrot.lane.b32.xlu0 %v604, 64
  %v626 = vpop.permute.xlu0 %625
  %627 = vrot.lane.b32.xlu0 %v606, 64
  %v628 = vpop.permute.xlu0 %627
  %629 = vrot.lane.b32.xlu0 %v608, 64
  %v630 = vpop.permute.xlu0 %629
  %631 = vrot.lane.b32.xlu0 %v610, 64
  %v632 = vpop.permute.xlu0 %631
  %633 = vrot.lane.b32.xlu0 %v612, 64
  %v634 = vpop.permute.xlu0 %633
  %635 = vrot.lane.b32.xlu0 %v614, 64
  %v636 = vpop.permute.xlu0 %635
  %vm648 = vcmask 785920
  %649 = vst.msk [vmem:[#allocation3] sm:$0xff] %vm648, %v616
  %650 = vst.msk [vmem:[#allocation3 + $0x18] sm:$0xff] %vm648, %v618
  %651 = vst.msk [vmem:[#allocation3 + $0x30] sm:$0xff] %vm648, %v620
  %652 = vst.msk [vmem:[#allocation3 + $0x48] sm:$0xff] %vm648, %v622
  %653 = vst.msk [vmem:[#allocation3 + $0x60] sm:$0xff] %vm648, %v624
  %654 = vst.msk [vmem:[#allocation3 + $0x78] sm:$0xff] %vm648, %v626
  %655 = vst.msk [vmem:[#allocation3 + $0x90] sm:$0xff] %vm648, %v628
  %656 = vst.msk [vmem:[#allocation3 + $0xa8] sm:$0xff] %vm648, %v630
  %657 = vst.msk [vmem:[#allocation3 + $0xc0] sm:$0xff] %vm648, %v632
  %658 = vst.msk [vmem:[#allocation3 + $0xd8] sm:$0xff] %vm648, %v634
  %659 = vst.msk [vmem:[#allocation3 + $0xf0] sm:$0xff] %vm648, %v636
  %v660 = vld [vmem:[#allocation2] sm:$0xe0]
  %v661 = vld [vmem:[#allocation2 + $0x8] sm:$0xff]
  %v662 = vld [vmem:[#allocation2 + $0x10] sm:$0xff]
  %v663 = vld [vmem:[#allocation2 + $0x18] sm:$0xff]
  %v664 = vld [vmem:[#allocation2 + $0x20] sm:$0xff]
  %v665 = vld [vmem:[#allocation2 + $0x28] sm:$0xff]
  %v666 = vld [vmem:[#allocation2 + $0x30] sm:$0xff]
  %v667 = vld [vmem:[#allocation2 + $0x38] sm:$0xff]
  %v668 = vld [vmem:[#allocation2 + $0x40] sm:$0xff]
  %v669 = vld [vmem:[#allocation2 + $0x48] sm:$0xff]
  %v670 = vld [vmem:[#allocation2 + $0x50] sm:$0xff]
  %v671 = vld [vmem:[#allocation2 + $0x58] sm:$0x1f]
  %vm684 = vcmask 1042432
  %v685 = vrot.slane %v660, 5
  %v686 = vrot.slane %v661, 5
  %v687 = vsel %vm684, %v685, %v686
  %v688 = vrot.slane %v662, 5
  %v689 = vsel %vm684, %v686, %v688
  %v690 = vrot.slane %v663, 5
  %v691 = vsel %vm684, %v688, %v690
  %v692 = vrot.slane %v664, 5
  %v693 = vsel %vm684, %v690, %v692
  %v694 = vrot.slane %v665, 5
  %v695 = vsel %vm684, %v692, %v694
  %v696 = vrot.slane %v666, 5
  %v697 = vsel %vm684, %v694, %v696
  %v698 = vrot.slane %v667, 5
  %v699 = vsel %vm684, %v696, %v698
  %v700 = vrot.slane %v668, 5
  %v701 = vsel %vm684, %v698, %v700
  %v702 = vrot.slane %v669, 5
  %v703 = vsel %vm684, %v700, %v702
  %v704 = vrot.slane %v670, 5
  %v705 = vsel %vm684, %v702, %v704
  %v706 = vrot.slane %v671, 5
  %v707 = vsel %vm684, %v704, %v706
  %708 = vrot.lane.b32.xlu0 %v687, 96
  %v709 = vpop.permute.xlu0 %708
  %710 = vrot.lane.b32.xlu0 %v689, 96
  %v711 = vpop.permute.xlu0 %710
  %712 = vrot.lane.b32.xlu0 %v691, 96
  %v713 = vpop.permute.xlu0 %712
  %714 = vrot.lane.b32.xlu0 %v693, 96
  %v715 = vpop.permute.xlu0 %714
  %716 = vrot.lane.b32.xlu0 %v695, 96
  %v717 = vpop.permute.xlu0 %716
  %718 = vrot.lane.b32.xlu0 %v697, 96
  %v719 = vpop.permute.xlu0 %718
  %720 = vrot.lane.b32.xlu0 %v699, 96
  %v721 = vpop.permute.xlu0 %720
  %722 = vrot.lane.b32.xlu0 %v701, 96
  %v723 = vpop.permute.xlu0 %722
  %724 = vrot.lane.b32.xlu0 %v703, 96
  %v725 = vpop.permute.xlu0 %724
  %726 = vrot.lane.b32.xlu0 %v705, 96
  %v727 = vpop.permute.xlu0 %726
  %728 = vrot.lane.b32.xlu0 %v707, 96
  %v729 = vpop.permute.xlu0 %728
  %vm741 = vcmask 1048320
  %742 = vst.msk [vmem:[#allocation3] sm:$0xff] %vm741, %v709
  %743 = vst.msk [vmem:[#allocation3 + $0x18] sm:$0xff] %vm741, %v711
  %744 = vst.msk [vmem:[#allocation3 + $0x30] sm:$0xff] %vm741, %v713
  %745 = vst.msk [vmem:[#allocation3 + $0x48] sm:$0xff] %vm741, %v715
  %746 = vst.msk [vmem:[#allocation3 + $0x60] sm:$0xff] %vm741, %v717
  %747 = vst.msk [vmem:[#allocation3 + $0x78] sm:$0xff] %vm741, %v719
  %748 = vst.msk [vmem:[#allocation3 + $0x90] sm:$0xff] %vm741, %v721
  %749 = vst.msk [vmem:[#allocation3 + $0xa8] sm:$0xff] %vm741, %v723
  %750 = vst.msk [vmem:[#allocation3 + $0xc0] sm:$0xff] %vm741, %v725
  %751 = vst.msk [vmem:[#allocation3 + $0xd8] sm:$0xff] %vm741, %v727
  %752 = vst.msk [vmem:[#allocation3 + $0xf0] sm:$0xff] %vm741, %v729
  %v753 = vld [vmem:[#allocation2] sm:$0xe0]
  %v754 = vld [vmem:[#allocation2 + $0x8] sm:$0xff]
  %v755 = vld [vmem:[#allocation2 + $0x10] sm:$0xff]
  %v756 = vld [vmem:[#allocation2 + $0x18] sm:$0xff]
  %v757 = vld [vmem:[#allocation2 + $0x20] sm:$0xff]
  %v758 = vld [vmem:[#allocation2 + $0x28] sm:$0xff]
  %v759 = vld [vmem:[#allocation2 + $0x30] sm:$0xff]
  %v760 = vld [vmem:[#allocation2 + $0x38] sm:$0xff]
  %v761 = vld [vmem:[#allocation2 + $0x40] sm:$0xff]
  %v762 = vld [vmem:[#allocation2 + $0x48] sm:$0xff]
  %v763 = vld [vmem:[#allocation2 + $0x50] sm:$0xff]
  %v764 = vld [vmem:[#allocation2 + $0x58] sm:$0x3f]
  %vm765 = vsmask.f32 2304
  %v767 = vshrl.u32 %v753, 16
  %v769 = vrot.slane %v767, 5
  %v770 = vshll.u32 %v753, 16
  %v772 = vrot.slane %v770, 6
  %v773 = vor.u32 %v769, %v772
  %v775 = vshrl.u32 %v754, 16
  %v777 = vrot.slane %v775, 5
  %v778 = vshll.u32 %v754, 16
  %v780 = vrot.slane %v778, 6
  %v781 = vor.u32 %v777, %v780
  %v782 = vsel %vm765, %v773, %v781
  %v784 = vshrl.u32 %v755, 16
  %v786 = vrot.slane %v784, 5
  %v787 = vshll.u32 %v755, 16
  %v789 = vrot.slane %v787, 6
  %v790 = vor.u32 %v786, %v789
  %v791 = vsel %vm765, %v781, %v790
  %v793 = vshrl.u32 %v756, 16
  %v795 = vrot.slane %v793, 5
  %v796 = vshll.u32 %v756, 16
  %v798 = vrot.slane %v796, 6
  %v799 = vor.u32 %v795, %v798
  %v800 = vsel %vm765, %v790, %v799
  %v802 = vshrl.u32 %v757, 16
  %v804 = vrot.slane %v802, 5
  %v805 = vshll.u32 %v757, 16
  %v807 = vrot.slane %v805, 6
  %v808 = vor.u32 %v804, %v807
  %v809 = vsel %vm765, %v799, %v808
  %v811 = vshrl.u32 %v758, 16
  %v813 = vrot.slane %v811, 5
  %v814 = vshll.u32 %v758, 16
  %v816 = vrot.slane %v814, 6
  %v817 = vor.u32 %v813, %v816
  %v818 = vsel %vm765, %v808, %v817
  %v820 = vshrl.u32 %v759, 16
  %v822 = vrot.slane %v820, 5
  %v823 = vshll.u32 %v759, 16
  %v825 = vrot.slane %v823, 6
  %v826 = vor.u32 %v822, %v825
  %v827 = vsel %vm765, %v817, %v826
  %v829 = vshrl.u32 %v760, 16
  %v831 = vrot.slane %v829, 5
  %v832 = vshll.u32 %v760, 16
  %v834 = vrot.slane %v832, 6
  %v835 = vor.u32 %v831, %v834
  %v836 = vsel %vm765, %v826, %v835
  %v838 = vshrl.u32 %v761, 16
  %v840 = vrot.slane %v838, 5
  %v841 = vshll.u32 %v761, 16
  %v843 = vrot.slane %v841, 6
  %v844 = vor.u32 %v840, %v843
  %v845 = vsel %vm765, %v835, %v844
  %v847 = vshrl.u32 %v762, 16
  %v849 = vrot.slane %v847, 5
  %v850 = vshll.u32 %v762, 16
  %v852 = vrot.slane %v850, 6
  %v853 = vor.u32 %v849, %v852
  %v854 = vsel %vm765, %v844, %v853
  %v856 = vshrl.u32 %v763, 16
  %v858 = vrot.slane %v856, 5
  %v859 = vshll.u32 %v763, 16
  %v861 = vrot.slane %v859, 6
  %v862 = vor.u32 %v858, %v861
  %v863 = vsel %vm765, %v853, %v862
  %v865 = vshrl.u32 %v764, 16
  %v867 = vrot.slane %v865, 5
  %v868 = vshll.u32 %v764, 16
  %v870 = vrot.slane %v868, 6
  %v871 = vor.u32 %v867, %v870
  %v872 = vsel %vm765, %v862, %v871
  %884 = vst.msk [vmem:[#allocation3 + $0x8] sm:$0xff] %vm381, %v782
  %885 = vst.msk [vmem:[#allocation3 + $0x20] sm:$0xff] %vm381, %v791
  %886 = vst.msk [vmem:[#allocation3 + $0x38] sm:$0xff] %vm381, %v800
  %887 = vst.msk [vmem:[#allocation3 + $0x50] sm:$0xff] %vm381, %v809
  %888 = vst.msk [vmem:[#allocation3 + $0x68] sm:$0xff] %vm381, %v818
  %889 = vst.msk [vmem:[#allocation3 + $0x80] sm:$0xff] %vm381, %v827
  %890 = vst.msk [vmem:[#allocation3 + $0x98] sm:$0xff] %vm381, %v836
  %891 = vst.msk [vmem:[#allocation3 + $0xb0] sm:$0xff] %vm381, %v845
  %892 = vst.msk [vmem:[#allocation3 + $0xc8] sm:$0xff] %vm381, %v854
  %893 = vst.msk [vmem:[#allocation3 + $0xe0] sm:$0xff] %vm381, %v863
  %894 = vst.msk [vmem:[#allocation3 + $0xf8] sm:$0xff] %vm381, %v872
  %v895 = vld [vmem:[#allocation2] sm:$0xc0]
  %v896 = vld [vmem:[#allocation2 + $0x8] sm:$0xff]
  %v897 = vld [vmem:[#allocation2 + $0x10] sm:$0xff]
  %v898 = vld [vmem:[#allocation2 + $0x18] sm:$0xff]
  %v899 = vld [vmem:[#allocation2 + $0x20] sm:$0xff]
  %v900 = vld [vmem:[#allocation2 + $0x28] sm:$0xff]
  %v901 = vld [vmem:[#allocation2 + $0x30] sm:$0xff]
  %v902 = vld [vmem:[#allocation2 + $0x38] sm:$0xff]
  %v903 = vld [vmem:[#allocation2 + $0x40] sm:$0xff]
  %v904 = vld [vmem:[#allocation2 + $0x48] sm:$0xff]
  %v905 = vld [vmem:[#allocation2 + $0x50] sm:$0xff]
  %v906 = vld [vmem:[#allocation2 + $0x58] sm:$0x3f]
  %vm919 = vcmask 1041408
  %v920 = vrot.slane %v895, 6
  %v921 = vrot.slane %v896, 6
  %v922 = vsel %vm919, %v920, %v921
  %v923 = vrot.slane %v897, 6
  %v924 = vsel %vm919, %v921, %v923
  %v925 = vrot.slane %v898, 6
  %v926 = vsel %vm919, %v923, %v925
  %v927 = vrot.slane %v899, 6
  %v928 = vsel %vm919, %v925, %v927
  %v929 = vrot.slane %v900, 6
  %v930 = vsel %vm919, %v927, %v929
  %v931 = vrot.slane %v901, 6
  %v932 = vsel %vm919, %v929, %v931
  %v933 = vrot.slane %v902, 6
  %v934 = vsel %vm919, %v931, %v933
  %v935 = vrot.slane %v903, 6
  %v936 = vsel %vm919, %v933, %v935
  %v937 = vrot.slane %v904, 6
  %v938 = vsel %vm919, %v935, %v937
  %v939 = vrot.slane %v905, 6
  %v940 = vsel %vm919, %v937, %v939
  %v941 = vrot.slane %v906, 6
  %v942 = vsel %vm919, %v939, %v941
  %943 = vrot.lane.b32.xlu0 %v922, 32
  %v944 = vpop.permute.xlu0 %943
  %945 = vrot.lane.b32.xlu0 %v924, 32
  %v946 = vpop.permute.xlu0 %945
  %947 = vrot.lane.b32.xlu0 %v926, 32
  %v948 = vpop.permute.xlu0 %947
  %949 = vrot.lane.b32.xlu0 %v928, 32
  %v950 = vpop.permute.xlu0 %949
  %951 = vrot.lane.b32.xlu0 %v930, 32
  %v952 = vpop.permute.xlu0 %951
  %953 = vrot.lane.b32.xlu0 %v932, 32
  %v954 = vpop.permute.xlu0 %953
  %955 = vrot.lane.b32.xlu0 %v934, 32
  %v956 = vpop.permute.xlu0 %955
  %957 = vrot.lane.b32.xlu0 %v936, 32
  %v958 = vpop.permute.xlu0 %957
  %959 = vrot.lane.b32.xlu0 %v938, 32
  %v960 = vpop.permute.xlu0 %959
  %961 = vrot.lane.b32.xlu0 %v940, 32
  %v962 = vpop.permute.xlu0 %961
  %963 = vrot.lane.b32.xlu0 %v942, 32
  %v964 = vpop.permute.xlu0 %963
  %976 = vst.msk [vmem:[#allocation3 + $0x8] sm:$0xff] %vm555, %v944
  %977 = vst.msk [vmem:[#allocation3 + $0x20] sm:$0xff] %vm555, %v946
  %978 = vst.msk [vmem:[#allocation3 + $0x38] sm:$0xff] %vm555, %v948
  %979 = vst.msk [vmem:[#allocation3 + $0x50] sm:$0xff] %vm555, %v950
  %980 = vst.msk [vmem:[#allocation3 + $0x68] sm:$0xff] %vm555, %v952
  %981 = vst.msk [vmem:[#allocation3 + $0x80] sm:$0xff] %vm555, %v954
  %982 = vst.msk [vmem:[#allocation3 + $0x98] sm:$0xff] %vm555, %v956
  %983 = vst.msk [vmem:[#allocation3 + $0xb0] sm:$0xff] %vm555, %v958
  %984 = vst.msk [vmem:[#allocation3 + $0xc8] sm:$0xff] %vm555, %v960
  %985 = vst.msk [vmem:[#allocation3 + $0xe0] sm:$0xff] %vm555, %v962
  %986 = vst.msk [vmem:[#allocation3 + $0xf8] sm:$0xff] %vm555, %v964
  %v987 = vld [vmem:[#allocation2 + $0x8] sm:$0xfc]
  %v988 = vld [vmem:[#allocation2 + $0x10] sm:$0xff]
  %v989 = vld [vmem:[#allocation2 + $0x18] sm:$0xff]
  %v990 = vld [vmem:[#allocation2 + $0x20] sm:$0xff]
  %v991 = vld [vmem:[#allocation2 + $0x28] sm:$0xff]
  %v992 = vld [vmem:[#allocation2 + $0x30] sm:$0xff]
  %v993 = vld [vmem:[#allocation2 + $0x38] sm:$0xff]
  %v994 = vld [vmem:[#allocation2 + $0x40] sm:$0xff]
  %v995 = vld [vmem:[#allocation2 + $0x48] sm:$0xff]
  %v996 = vld [vmem:[#allocation2 + $0x50] sm:$0xff]
  %v997 = vld [vmem:[#allocation2 + $0x58] sm:$0xff]
  %v998 = vld [vmem:[#allocation2 + $0x60] sm:$0x3]
  %vm1011 = vcmask 1045504
  %v1012 = vrot.slane %v987, 2
  %v1013 = vrot.slane %v988, 2
  %v1014 = vsel %vm1011, %v1012, %v1013
  %v1015 = vrot.slane %v989, 2
  %v1016 = vsel %vm1011, %v1013, %v1015
  %v1017 = vrot.slane %v990, 2
  %v1018 = vsel %vm1011, %v1015, %v1017
  %v1019 = vrot.slane %v991, 2
  %v1020 = vsel %vm1011, %v1017, %v1019
  %v1021 = vrot.slane %v992, 2
  %v1022 = vsel %vm1011, %v1019, %v1021
  %v1023 = vrot.slane %v993, 2
  %v1024 = vsel %vm1011, %v1021, %v1023
  %v1025 = vrot.slane %v994, 2
  %v1026 = vsel %vm1011, %v1023, %v1025
  %v1027 = vrot.slane %v995, 2
  %v1028 = vsel %vm1011, %v1025, %v1027
  %v1029 = vrot.slane %v996, 2
  %v1030 = vsel %vm1011, %v1027, %v1029
  %v1031 = vrot.slane %v997, 2
  %v1032 = vsel %vm1011, %v1029, %v1031
  %v1033 = vrot.slane %v998, 2
  %v1034 = vsel %vm1011, %v1031, %v1033
  %1035 = vrot.lane.b32.xlu0 %v1014, 64
  %v1036 = vpop.permute.xlu0 %1035
  %1037 = vrot.lane.b32.xlu0 %v1016, 64
  %v1038 = vpop.permute.xlu0 %1037
  %1039 = vrot.lane.b32.xlu0 %v1018, 64
  %v1040 = vpop.permute.xlu0 %1039
  %1041 = vrot.lane.b32.xlu0 %v1020, 64
  %v1042 = vpop.permute.xlu0 %1041
  %1043 = vrot.lane.b32.xlu0 %v1022, 64
  %v1044 = vpop.permute.xlu0 %1043
  %1045 = vrot.lane.b32.xlu0 %v1024, 64
  %v1046 = vpop.permute.xlu0 %1045
  %1047 = vrot.lane.b32.xlu0 %v1026, 64
  %v1048 = vpop.permute.xlu0 %1047
  %1049 = vrot.lane.b32.xlu0 %v1028, 64
  %v1050 = vpop.permute.xlu0 %1049
  %1051 = vrot.lane.b32.xlu0 %v1030, 64
  %v1052 = vpop.permute.xlu0 %1051
  %1053 = vrot.lane.b32.xlu0 %v1032, 64
  %v1054 = vpop.permute.xlu0 %1053
  %1055 = vrot.lane.b32.xlu0 %v1034, 64
  %v1056 = vpop.permute.xlu0 %1055
  %1068 = vst.msk [vmem:[#allocation3 + $0x8] sm:$0xff] %vm648, %v1036
  %1069 = vst.msk [vmem:[#allocation3 + $0x20] sm:$0xff] %vm648, %v1038
  %1070 = vst.msk [vmem:[#allocation3 + $0x38] sm:$0xff] %vm648, %v1040
  %1071 = vst.msk [vmem:[#allocation3 + $0x50] sm:$0xff] %vm648, %v1042
  %1072 = vst.msk [vmem:[#allocation3 + $0x68] sm:$0xff] %vm648, %v1044
  %1073 = vst.msk [vmem:[#allocation3 + $0x80] sm:$0xff] %vm648, %v1046
  %1074 = vst.msk [vmem:[#allocation3 + $0x98] sm:$0xff] %vm648, %v1048
  %1075 = vst.msk [vmem:[#allocation3 + $0xb0] sm:$0xff] %vm648, %v1050
  %1076 = vst.msk [vmem:[#allocation3 + $0xc8] sm:$0xff] %vm648, %v1052
  %1077 = vst.msk [vmem:[#allocation3 + $0xe0] sm:$0xff] %vm648, %v1054
  %1078 = vst.msk [vmem:[#allocation3 + $0xf8] sm:$0xff] %vm648, %v1056
  %v1079 = vld [vmem:[#allocation2 + $0x8] sm:$0xfc]
  %v1080 = vld [vmem:[#allocation2 + $0x10] sm:$0xff]
  %v1081 = vld [vmem:[#allocation2 + $0x18] sm:$0xff]
  %v1082 = vld [vmem:[#allocation2 + $0x20] sm:$0xff]
  %v1083 = vld [vmem:[#allocation2 + $0x28] sm:$0xff]
  %v1084 = vld [vmem:[#allocation2 + $0x30] sm:$0xff]
  %v1085 = vld [vmem:[#allocation2 + $0x38] sm:$0xff]
  %v1086 = vld [vmem:[#allocation2 + $0x40] sm:$0xff]
  %v1087 = vld [vmem:[#allocation2 + $0x48] sm:$0xff]
  %v1088 = vld [vmem:[#allocation2 + $0x50] sm:$0xff]
  %v1089 = vld [vmem:[#allocation2 + $0x58] sm:$0xff]
  %v1090 = vld [vmem:[#allocation2 + $0x60] sm:$0x7]
  %vm1091 = vsmask.f32 5376
  %v1093 = vshrl.u32 %v1079, 16
  %v1095 = vrot.slane %v1093, 2
  %v1096 = vshll.u32 %v1079, 16
  %v1098 = vrot.slane %v1096, 3
  %v1099 = vor.u32 %v1095, %v1098
  %v1101 = vshrl.u32 %v1080, 16
  %v1103 = vrot.slane %v1101, 2
  %v1104 = vshll.u32 %v1080, 16
  %v1106 = vrot.slane %v1104, 3
  %v1107 = vor.u32 %v1103, %v1106
  %v1108 = vsel %vm1091, %v1099, %v1107
  %v1110 = vshrl.u32 %v1081, 16
  %v1112 = vrot.slane %v1110, 2
  %v1113 = vshll.u32 %v1081, 16
  %v1115 = vrot.slane %v1113, 3
  %v1116 = vor.u32 %v1112, %v1115
  %v1117 = vsel %vm1091, %v1107, %v1116
  %v1119 = vshrl.u32 %v1082, 16
  %v1121 = vrot.slane %v1119, 2
  %v1122 = vshll.u32 %v1082, 16
  %v1124 = vrot.slane %v1122, 3
  %v1125 = vor.u32 %v1121, %v1124
  %v1126 = vsel %vm1091, %v1116, %v1125
  %v1128 = vshrl.u32 %v1083, 16
  %v1130 = vrot.slane %v1128, 2
  %v1131 = vshll.u32 %v1083, 16
  %v1133 = vrot.slane %v1131, 3
  %v1134 = vor.u32 %v1130, %v1133
  %v1135 = vsel %vm1091, %v1125, %v1134
  %v1137 = vshrl.u32 %v1084, 16
  %v1139 = vrot.slane %v1137, 2
  %v1140 = vshll.u32 %v1084, 16
  %v1142 = vrot.slane %v1140, 3
  %v1143 = vor.u32 %v1139, %v1142
  %v1144 = vsel %vm1091, %v1134, %v1143
  %v1146 = vshrl.u32 %v1085, 16
  %v1148 = vrot.slane %v1146, 2
  %v1149 = vshll.u32 %v1085, 16
  %v1151 = vrot.slane %v1149, 3
  %v1152 = vor.u32 %v1148, %v1151
  %v1153 = vsel %vm1091, %v1143, %v1152
  %v1155 = vshrl.u32 %v1086, 16
  %v1157 = vrot.slane %v1155, 2
  %v1158 = vshll.u32 %v1086, 16
  %v1160 = vrot.slane %v1158, 3
  %v1161 = vor.u32 %v1157, %v1160
  %v1162 = vsel %vm1091, %v1152, %v1161
  %v1164 = vshrl.u32 %v1087, 16
  %v1166 = vrot.slane %v1164, 2
  %v1167 = vshll.u32 %v1087, 16
  %v1169 = vrot.slane %v1167, 3
  %v1170 = vor.u32 %v1166, %v1169
  %v1171 = vsel %vm1091, %v1161, %v1170
  %v1173 = vshrl.u32 %v1088, 16
  %v1175 = vrot.slane %v1173, 2
  %v1176 = vshll.u32 %v1088, 16
  %v1178 = vrot.slane %v1176, 3
  %v1179 = vor.u32 %v1175, %v1178
  %v1180 = vsel %vm1091, %v1170, %v1179
  %v1182 = vshrl.u32 %v1089, 16
  %v1184 = vrot.slane %v1182, 2
  %v1185 = vshll.u32 %v1089, 16
  %v1187 = vrot.slane %v1185, 3
  %v1188 = vor.u32 %v1184, %v1187
  %v1189 = vsel %vm1091, %v1179, %v1188
  %v1191 = vshrl.u32 %v1090, 16
  %v1193 = vrot.slane %v1191, 2
  %v1194 = vshll.u32 %v1090, 16
  %v1196 = vrot.slane %v1194, 3
  %v1197 = vor.u32 %v1193, %v1196
  %v1198 = vsel %vm1091, %v1188, %v1197
  %1199 = vrot.lane.b32.xlu0 %v1108, 96
  %v1200 = vpop.permute.xlu0 %1199
  %1201 = vrot.lane.b32.xlu0 %v1117, 96
  %v1202 = vpop.permute.xlu0 %1201
  %1203 = vrot.lane.b32.xlu0 %v1126, 96
  %v1204 = vpop.permute.xlu0 %1203
  %1205 = vrot.lane.b32.xlu0 %v1135, 96
  %v1206 = vpop.permute.xlu0 %1205
  %1207 = vrot.lane.b32.xlu0 %v1144, 96
  %v1208 = vpop.permute.xlu0 %1207
  %1209 = vrot.lane.b32.xlu0 %v1153, 96
  %v1210 = vpop.permute.xlu0 %1209
  %1211 = vrot.lane.b32.xlu0 %v1162, 96
  %v1212 = vpop.permute.xlu0 %1211
  %1213 = vrot.lane.b32.xlu0 %v1171, 96
  %v1214 = vpop.permute.xlu0 %1213
  %1215 = vrot.lane.b32.xlu0 %v1180, 96
  %v1216 = vpop.permute.xlu0 %1215
  %1217 = vrot.lane.b32.xlu0 %v1189, 96
  %v1218 = vpop.permute.xlu0 %1217
  %1219 = vrot.lane.b32.xlu0 %v1198, 96
  %v1220 = vpop.permute.xlu0 %1219
  %1232 = vst.msk [vmem:[#allocation3 + $0x8] sm:$0xff] %vm741, %v1200
  %1233 = vst.msk [vmem:[#allocation3 + $0x20] sm:$0xff] %vm741, %v1202
  %1234 = vst.msk [vmem:[#allocation3 + $0x38] sm:$0xff] %vm741, %v1204
  %1235 = vst.msk [vmem:[#allocation3 + $0x50] sm:$0xff] %vm741, %v1206
  %1236 = vst.msk [vmem:[#allocation3 + $0x68] sm:$0xff] %vm741, %v1208
  %1237 = vst.msk [vmem:[#allocation3 + $0x80] sm:$0xff] %vm741, %v1210
  %1238 = vst.msk [vmem:[#allocation3 + $0x98] sm:$0xff] %vm741, %v1212
  %1239 = vst.msk [vmem:[#allocation3 + $0xb0] sm:$0xff] %vm741, %v1214
  %1240 = vst.msk [vmem:[#allocation3 + $0xc8] sm:$0xff] %vm741, %v1216
  %1241 = vst.msk [vmem:[#allocation3 + $0xe0] sm:$0xff] %vm741, %v1218
  %1242 = vst.msk [vmem:[#allocation3 + $0xf8] sm:$0xff] %vm741, %v1220
  %v1243 = vld [vmem:[#allocation2 + $0x8] sm:$0xf8]
  %v1244 = vld [vmem:[#allocation2 + $0x10] sm:$0xff]
  %v1245 = vld [vmem:[#allocation2 + $0x18] sm:$0xff]
  %v1246 = vld [vmem:[#allocation2 + $0x20] sm:$0xff]
  %v1247 = vld [vmem:[#allocation2 + $0x28] sm:$0xff]
  %v1248 = vld [vmem:[#allocation2 + $0x30] sm:$0xff]
  %v1249 = vld [vmem:[#allocation2 + $0x38] sm:$0xff]
  %v1250 = vld [vmem:[#allocation2 + $0x40] sm:$0xff]
  %v1251 = vld [vmem:[#allocation2 + $0x48] sm:$0xff]
  %v1252 = vld [vmem:[#allocation2 + $0x50] sm:$0xff]
  %v1253 = vld [vmem:[#allocation2 + $0x58] sm:$0xff]
  %v1254 = vld [vmem:[#allocation2 + $0x60] sm:$0x7]
  %vm1267 = vcmask 1044480
  %v1268 = vrot.slane %v1243, 3
  %v1269 = vrot.slane %v1244, 3
  %v1270 = vsel %vm1267, %v1268, %v1269
  %v1271 = vrot.slane %v1245, 3
  %v1272 = vsel %vm1267, %v1269, %v1271
  %v1273 = vrot.slane %v1246, 3
  %v1274 = vsel %vm1267, %v1271, %v1273
  %v1275 = vrot.slane %v1247, 3
  %v1276 = vsel %vm1267, %v1273, %v1275
  %v1277 = vrot.slane %v1248, 3
  %v1278 = vsel %vm1267, %v1275, %v1277
  %v1279 = vrot.slane %v1249, 3
  %v1280 = vsel %vm1267, %v1277, %v1279
  %v1281 = vrot.slane %v1250, 3
  %v1282 = vsel %vm1267, %v1279, %v1281
  %v1283 = vrot.slane %v1251, 3
  %v1284 = vsel %vm1267, %v1281, %v1283
  %v1285 = vrot.slane %v1252, 3
  %v1286 = vsel %vm1267, %v1283, %v1285
  %v1287 = vrot.slane %v1253, 3
  %v1288 = vsel %vm1267, %v1285, %v1287
  %v1289 = vrot.slane %v1254, 3
  %v1290 = vsel %vm1267, %v1287, %v1289
  %1302 = vst.msk [vmem:[#allocation3 + $0x10] sm:$0xff] %vm381, %v1270
  %1303 = vst.msk [vmem:[#allocation3 + $0x28] sm:$0xff] %vm381, %v1272
  %1304 = vst.msk [vmem:[#allocation3 + $0x40] sm:$0xff] %vm381, %v1274
  %1305 = vst.msk [vmem:[#allocation3 + $0x58] sm:$0xff] %vm381, %v1276
  %1306 = vst.msk [vmem:[#allocation3 + $0x70] sm:$0xff] %vm381, %v1278
  %1307 = vst.msk [vmem:[#allocation3 + $0x88] sm:$0xff] %vm381, %v1280
  %1308 = vst.msk [vmem:[#allocation3 + $0xa0] sm:$0xff] %vm381, %v1282
  %1309 = vst.msk [vmem:[#allocation3 + $0xb8] sm:$0xff] %vm381, %v1284
  %1310 = vst.msk [vmem:[#allocation3 + $0xd0] sm:$0xff] %vm381, %v1286
  %1311 = vst.msk [vmem:[#allocation3 + $0xe8] sm:$0xff] %vm381, %v1288
  %1312 = vst.msk [vmem:[#allocation3 + $0x100] sm:$0xff] %vm381, %v1290
  %v1313 = vld [vmem:[#allocation3] sm:$0xff]
  %v1314 = vld [vmem:[#allocation3 + $0x8] sm:$0xff]
  %v1315 = vld [vmem:[#allocation3 + $0x10] sm:$0xff]
  %v1316 = vld [vmem:[#allocation3 + $0x18] sm:$0xff]
  %v1317 = vld [vmem:[#allocation3 + $0x20] sm:$0xff]
  %v1318 = vld [vmem:[#allocation3 + $0x28] sm:$0xff]
  %v1319 = vld [vmem:[#allocation3 + $0x30] sm:$0xff]
  %v1320 = vld [vmem:[#allocation3 + $0x38] sm:$0xff]
  %v1321 = vld [vmem:[#allocation3 + $0x40] sm:$0xff]
  %v1322 = vld [vmem:[#allocation3 + $0x48] sm:$0xff]
  %v1323 = vld [vmem:[#allocation3 + $0x50] sm:$0xff]
  %v1324 = vld [vmem:[#allocation3 + $0x58] sm:$0xff]
  %v1325 = vld [vmem:[#allocation3 + $0x60] sm:$0xff]
  %v1326 = vld [vmem:[#allocation3 + $0x68] sm:$0xff]
  %v1327 = vld [vmem:[#allocation3 + $0x70] sm:$0xff]
  %v1328 = vld [vmem:[#allocation3 + $0x78] sm:$0xff]
  %v1329 = vld [vmem:[#allocation3 + $0x80] sm:$0xff]
  %v1330 = vld [vmem:[#allocation3 + $0x88] sm:$0xff]
  %v1331 = vld [vmem:[#allocation3 + $0x90] sm:$0xff]
  %v1332 = vld [vmem:[#allocation3 + $0x98] sm:$0xff]
  %v1333 = vld [vmem:[#allocation3 + $0xa0] sm:$0xff]
  %v1334 = vld [vmem:[#allocation3 + $0xa8] sm:$0xff]
  %v1335 = vld [vmem:[#allocation3 + $0xb0] sm:$0xff]
  %v1336 = vld [vmem:[#allocation3 + $0xb8] sm:$0xff]
  %v1337 = vld [vmem:[#allocation3 + $0xc0] sm:$0xff]
  %v1338 = vld [vmem:[#allocation3 + $0xc8] sm:$0xff]
  %v1339 = vld [vmem:[#allocation3 + $0xd0] sm:$0xff]
  %v1340 = vld [vmem:[#allocation3 + $0xd8] sm:$0xff]
  %v1341 = vld [vmem:[#allocation3 + $0xe0] sm:$0xff]
  %v1342 = vld [vmem:[#allocation3 + $0xe8] sm:$0xff]
  %v1343 = vld [vmem:[#allocation3 + $0xf0] sm:$0xff]
  %v1344 = vld [vmem:[#allocation3 + $0xf8] sm:$0xff]
  %v1345 = vld [vmem:[#allocation3 + $0x100] sm:$0xff]
  %v1346 = vld [vmem:[%s3] sm:$0xf]
  %v1347 = vld [vmem:[%s3 + $0x4] sm:$0xf]
  %v1348 = vld [vmem:[%s3 + $0x8] sm:$0xf]
  %v1349 = vld [vmem:[%s3 + $0xc] sm:$0xf]
  %v1350 = vld [vmem:[%s3 + $0x10] sm:$0xf]
  %v1351 = vld [vmem:[%s3 + $0x14] sm:$0xf]
  %v1352 = vld [vmem:[%s3 + $0x18] sm:$0xf]
  %v1353 = vld [vmem:[%s3 + $0x1c] sm:$0xf]
  %v1354 = vld [vmem:[%s3 + $0x20] sm:$0xf]
  %v1355 = vld [vmem:[%s3 + $0x24] sm:$0xf]
  %v1356 = vld [vmem:[%s3 + $0x28] sm:$0xf]
  %v1357 = vld [vmem:[%s3 + $0x2c] sm:$0xf]
  %v1358 = vld [vmem:[%s3 + $0x30] sm:$0xf]
  %v1359 = vld [vmem:[%s3 + $0x34] sm:$0xf]
  %v1360 = vld [vmem:[%s3 + $0x38] sm:$0xf]
  %v1361 = vld [vmem:[%s3 + $0x3c] sm:$0xf]
  %v1362 = vld [vmem:[%s3 + $0x40] sm:$0xf]
  %v1363 = vld [vmem:[%s3 + $0x44] sm:$0xf]
  %v1364 = vld [vmem:[%s3 + $0x48] sm:$0xf]
  %v1365 = vld [vmem:[%s3 + $0x4c] sm:$0xf]
  %v1366 = vld [vmem:[%s3 + $0x50] sm:$0xf]
  %v1367 = vld [vmem:[%s3 + $0x54] sm:$0xf]
  %v1368 = vld [vmem:[%s3 + $0x58] sm:$0xf]
  %v1369 = vld [vmem:[%s3 + $0x5c] sm:$0xf]
  %v1370 = vld [vmem:[%s3 + $0x60] sm:$0xf]
  %v1371 = vld [vmem:[%s3 + $0x64] sm:$0xf]
  %v1372 = vld [vmem:[%s3 + $0x68] sm:$0xf]
  %v1373 = vld [vmem:[%s3 + $0x6c] sm:$0xf]
  %v1374 = vld [vmem:[%s3 + $0x70] sm:$0xf]
  %v1375 = vld [vmem:[%s3 + $0x74] sm:$0xf]
  %v1376 = vld [vmem:[%s3 + $0x78] sm:$0xf]
  %v1377 = vld [vmem:[%s3 + $0x7c] sm:$0xf]
  %v1378 = vld [vmem:[%s3 + $0x80] sm:$0xf]
  %v1379 = vld [vmem:[%s3 + $0x84] sm:$0xf]
  %v1380 = vld [vmem:[%s3 + $0x88] sm:$0xf]
  %v1381 = vld [vmem:[%s3 + $0x8c] sm:$0xf]
  %v1382 = vld [vmem:[%s4] sm:$0x1]
  %v1384 = vlaneseq
  %v1385 = vshrl.u32 %v1384, 7
  %v1386 = vsub.s32 0, %v1385
  %v1387 = vrot.slane %v1382, %v1386
  %v1425 = vunpack.c.l.b16 %v1346
  %v1426 = vunpack.c.l.b16 %v1347
  %v1427 = vunpack.c.l.b16 %v1348
  %v1428 = vunpack.c.l.b16 %v1349
  %v1429 = vunpack.c.l.b16 %v1350
  %v1430 = vunpack.c.l.b16 %v1351
  %v1431 = vunpack.c.l.b16 %v1352
  %v1432 = vunpack.c.l.b16 %v1353
  %v1433 = vunpack.c.l.b16 %v1354
  %v1434 = vunpack.c.l.b16 %v1355
  %v1435 = vunpack.c.l.b16 %v1356
  %v1436 = vunpack.c.l.b16 %v1357
  %v1437 = vunpack.c.l.b16 %v1358
  %v1438 = vunpack.c.l.b16 %v1359
  %v1439 = vunpack.c.l.b16 %v1360
  %v1440 = vunpack.c.l.b16 %v1361
  %v1441 = vunpack.c.l.b16 %v1362
  %v1442 = vunpack.c.l.b16 %v1363
  %v1443 = vunpack.c.l.b16 %v1364
  %v1444 = vunpack.c.l.b16 %v1365
  %v1445 = vunpack.c.l.b16 %v1366
  %v1446 = vunpack.c.l.b16 %v1367
  %v1447 = vunpack.c.l.b16 %v1368
  %v1448 = vunpack.c.l.b16 %v1369
  %v1449 = vunpack.c.l.b16 %v1370
  %v1450 = vunpack.c.l.b16 %v1371
  %v1451 = vunpack.c.l.b16 %v1372
  %v1452 = vunpack.c.l.b16 %v1373
  %v1453 = vunpack.c.l.b16 %v1374
  %v1454 = vunpack.c.l.b16 %v1375
  %v1455 = vunpack.c.l.b16 %v1376
  %v1456 = vunpack.c.l.b16 %v1377
  %v1457 = vunpack.c.l.b16 %v1378
  %v1458 = vunpack.c.l.b16 %v1379
  %v1459 = vunpack.c.l.b16 %v1380
  %v1460 = vunpack.c.l.b16 %v1381
  %v1461 = vpack.c.b16 %v1426, %v1425
  %v1462 = vpack.c.b16 %v1428, %v1427
  %v1463 = vpack.c.b16 %v1430, %v1429
  %v1464 = vpack.c.b16 %v1432, %v1431
  %v1465 = vpack.c.b16 %v1434, %v1433
  %v1466 = vpack.c.b16 %v1436, %v1435
  %v1467 = vpack.c.b16 %v1438, %v1437
  %v1468 = vpack.c.b16 %v1440, %v1439
  %v1469 = vpack.c.b16 %v1442, %v1441
  %v1470 = vpack.c.b16 %v1444, %v1443
  %v1471 = vpack.c.b16 %v1446, %v1445
  %v1472 = vpack.c.b16 %v1448, %v1447
  %v1473 = vpack.c.b16 %v1450, %v1449
  %v1474 = vpack.c.b16 %v1452, %v1451
  %v1475 = vpack.c.b16 %v1454, %v1453
  %v1476 = vpack.c.b16 %v1456, %v1455
  %v1477 = vpack.c.b16 %v1458, %v1457
  %v1478 = vpack.c.b16 %v1460, %v1459
  %v1498 = vsel %vm381, %v1315, 0
  %v1501 = vsel %vm381, %v1318, 0
  %v1504 = vsel %vm381, %v1321, 0
  %v1507 = vsel %vm381, %v1324, 0
  %v1510 = vsel %vm381, %v1327, 0
  %v1513 = vsel %vm381, %v1330, 0
  %v1516 = vsel %vm381, %v1333, 0
  %v1519 = vsel %vm381, %v1336, 0
  %v1522 = vsel %vm381, %v1339, 0
  %v1525 = vsel %vm381, %v1342, 0
  %v1528 = vsel %vm381, %v1345, 0
  %1530 = vmatprep.subr.bf16.mxu0 0
  %1531 = vmatpush1.bf16.msra.mxu0 %v1461
  %1532 = vmatprep.subr.bf16.mxu0 0
  %1533 = vmatpush1.bf16.msra.mxu0 %v1462
  %1534 = vmatprep.subr.bf16.mxu0 0
  %1535 = vmatpush1.bf16.msra.mxu0 %v1463
  %1536 = vmatprep.subr.bf16.mxu0 0
  %1537 = vmatpush1.bf16.msra.mxu0 %v1464
  %1538 = vmatprep.subr.bf16.mxu0 0
  %1539 = vmatpush1.bf16.msra.mxu0 %v1465
  %1540 = vmatprep.subr.bf16.mxu0 0
  %1541 = vmatpush1.bf16.msra.mxu0 %v1466
  %1542 = vmatprep.subr.bf16.mxu0 0
  %1543 = vmatpush1.bf16.msra.mxu0 %v1467
  %1544 = vmatprep.subr.bf16.mxu0 0
  %1545 = vmatpush1.bf16.msra.mxu0 %v1468
  %1546 = vmatprep.subr.bf16.mxu0 0
  %1547 = vmatpush1.bf16.msra.mxu0 %v1469
  %1548 = vmatprep.subr.bf16.mxu0 0
  %1549 = vmatpush1.bf16.msra.mxu0 %v1470
  %1550 = vmatprep.subr.bf16.mxu0 0
  %1551 = vmatpush1.bf16.msra.mxu0 %v1471
  %1552 = vmatprep.subr.bf16.mxu0 0
  %1553 = vmatpush1.bf16.msra.mxu0 %v1472
  %1554 = vmatprep.subr.bf16.mxu0 0
  %1555 = vmatpush1.bf16.msra.mxu0 %v1473
  %1556 = vmatprep.subr.bf16.mxu0 0
  %1557 = vmatpush1.bf16.msra.mxu0 %v1474
  %1558 = vmatprep.subr.bf16.mxu0 0
  %1559 = vmatpush1.bf16.msra.mxu0 %v1475
  %1560 = vmatprep.subr.bf16.mxu0 0
  %1561 = vmatpush1.bf16.msra.mxu0 %v1476
  %1562 = vmatprep.mubr.bf16.mxu0 %v1314
  %1563 = vmatmul.mubr.bf16.gmra.mrb[0].mxu0 %v1313
  %v1564 = vpop.f32.mrb[0].mxu0
  %v1565 = vadd.f32 %v1387, %v1564
  %v1566 = vpop.f32.mrb[0].mxu0
  %v1567 = vpop.f32.mrb[0].mxu0
  %v1568 = vadd.f32 %v1387, %v1567
  %v1569 = vpop.f32.mrb[0].mxu0
  %1570 = vmatprep.mubr.bf16.mxu0 %v1317
  %1571 = vmatmul.mubr.bf16.gmra.mrb[0].mxu0 %v1316
  %v1572 = vpop.f32.mrb[0].mxu0
  %v1573 = vadd.f32 %v1387, %v1572
  %v1574 = vpop.f32.mrb[0].mxu0
  %v1575 = vpop.f32.mrb[0].mxu0
  %v1576 = vadd.f32 %v1387, %v1575
  %v1577 = vpop.f32.mrb[0].mxu0
  %1578 = vmatprep.mubr.bf16.mxu0 %v1320
  %1579 = vmatmul.mubr.bf16.gmra.mrb[0].mxu0 %v1319
  %v1580 = vpop.f32.mrb[0].mxu0
  %v1581 = vadd.f32 %v1387, %v1580
  %v1582 = vpop.f32.mrb[0].mxu0
  %v1583 = vpop.f32.mrb[0].mxu0
  %v1584 = vadd.f32 %v1387, %v1583
  %v1585 = vpop.f32.mrb[0].mxu0
  %1586 = vmatprep.mubr.bf16.mxu0 %v1323
  %1587 = vmatmul.mubr.bf16.gmra.mrb[0].mxu0 %v1322
  %v1588 = vpop.f32.mrb[0].mxu0
  %v1589 = vadd.f32 %v1387, %v1588
  %v1590 = vpop.f32.mrb[0].mxu0
  %v1591 = vpop.f32.mrb[0].mxu0
  %v1592 = vadd.f32 %v1387, %v1591
  %v1593 = vpop.f32.mrb[0].mxu0
  %1594 = vmatprep.mubr.bf16.mxu0 %v1326
  %1595 = vmatmul.mubr.bf16.gmra.mrb[0].mxu0 %v1325
  %v1596 = vpop.f32.mrb[0].mxu0
  %v1597 = vadd.f32 %v1387, %v1596
  %v1598 = vpop.f32.mrb[0].mxu0
  %v1599 = vpop.f32.mrb[0].mxu0
  %v1600 = vadd.f32 %v1387, %v1599
  %v1601 = vpop.f32.mrb[0].mxu0
  %1602 = vmatprep.mubr.bf16.mxu0 %v1329
  %1603 = vmatmul.mubr.bf16.gmra.mrb[0].mxu0 %v1328
  %v1604 = vpop.f32.mrb[0].mxu0
  %v1605 = vadd.f32 %v1387, %v1604
  %v1606 = vpop.f32.mrb[0].mxu0
  %v1607 = vpop.f32.mrb[0].mxu0
  %v1608 = vadd.f32 %v1387, %v1607
  %v1609 = vpop.f32.mrb[0].mxu0
  %1610 = vmatprep.mubr.bf16.mxu0 %v1332
  %1611 = vmatmul.mubr.bf16.gmra.mrb[0].mxu0 %v1331
  %v1612 = vpop.f32.mrb[0].mxu0
  %v1613 = vadd.f32 %v1387, %v1612
  %v1614 = vpop.f32.mrb[0].mxu0
  %v1615 = vpop.f32.mrb[0].mxu0
  %v1616 = vadd.f32 %v1387, %v1615
  %v1617 = vpop.f32.mrb[0].mxu0
  %1618 = vmatprep.mubr.bf16.mxu0 %v1335
  %1619 = vmatmul.mubr.bf16.gmra.mrb[0].mxu0 %v1334
  %v1620 = vpop.f32.mrb[0].mxu0
  %v1621 = vadd.f32 %v1387, %v1620
  %v1622 = vpop.f32.mrb[0].mxu0
  %v1623 = vpop.f32.mrb[0].mxu0
  %v1624 = vadd.f32 %v1387, %v1623
  %v1625 = vpop.f32.mrb[0].mxu0
  %1626 = vmatprep.mubr.bf16.mxu0 %v1338
  %1627 = vmatmul.mubr.bf16.gmra.mrb[0].mxu0 %v1337
  %v1628 = vpop.f32.mrb[0].mxu0
  %v1629 = vadd.f32 %v1387, %v1628
  %v1630 = vpop.f32.mrb[0].mxu0
  %v1631 = vpop.f32.mrb[0].mxu0
  %v1632 = vadd.f32 %v1387, %v1631
  %v1633 = vpop.f32.mrb[0].mxu0
  %1634 = vmatprep.mubr.bf16.mxu0 %v1341
  %1635 = vmatmul.mubr.bf16.gmra.mrb[0].mxu0 %v1340
  %v1636 = vpop.f32.mrb[0].mxu0
  %v1637 = vadd.f32 %v1387, %v1636
  %v1638 = vpop.f32.mrb[0].mxu0
  %v1639 = vpop.f32.mrb[0].mxu0
  %v1640 = vadd.f32 %v1387, %v1639
  %v1641 = vpop.f32.mrb[0].mxu0
  %1642 = vmatprep.mubr.bf16.mxu0 %v1344
  %1643 = vmatmul.mubr.bf16.gmra.mrb[0].mxu0 %v1343
  %v1644 = vpop.f32.mrb[0].mxu0
  %v1645 = vadd.f32 %v1387, %v1644
  %v1646 = vpop.f32.mrb[0].mxu0
  %v1647 = vpop.f32.mrb[0].mxu0
  %v1648 = vadd.f32 %v1387, %v1647
  %v1649 = vpop.f32.mrb[0].mxu0
  %1650 = vdwg.mxu0
  %1651 = vmatprep.subr.bf16.mxu0 0
  %1652 = vmatpush1.bf16.msra.mxu0 %v1477
  %1653 = vmatprep.subr.bf16.mxu0 0
  %1654 = vmatpush1.bf16.msra.mxu0 %v1478
  %1655 = vmatprep.subr.bf16.mxu0 0
  %1656 = vmatpush1.bf16.msra.mxu0 0
  %1657 = vmatprep.subr.bf16.mxu0 0
  %1658 = vmatpush1.bf16.msra.mxu0 0
  %1659 = vmatprep.subr.bf16.mxu0 0
  %1660 = vmatpush1.bf16.msra.mxu0 0
  %1661 = vmatprep.subr.bf16.mxu0 0
  %1662 = vmatpush1.bf16.msra.mxu0 0
  %1663 = vmatprep.subr.bf16.mxu0 0
  %1664 = vmatpush1.bf16.msra.mxu0 0
  %1665 = vmatprep.subr.bf16.mxu0 0
  %1666 = vmatpush1.bf16.msra.mxu0 0
  %1667 = vmatprep.subr.bf16.mxu0 0
  %1668 = vmatpush1.bf16.msra.mxu0 0
  %1669 = vmatprep.subr.bf16.mxu0 0
  %1670 = vmatpush1.bf16.msra.mxu0 0
  %1671 = vmatprep.subr.bf16.mxu0 0
  %1672 = vmatpush1.bf16.msra.mxu0 0
  %1673 = vmatprep.subr.bf16.mxu0 0
  %1674 = vmatpush1.bf16.msra.mxu0 0
  %1675 = vmatprep.subr.bf16.mxu0 0
  %1676 = vmatpush1.bf16.msra.mxu0 0
  %1677 = vmatprep.subr.bf16.mxu0 0
  %1678 = vmatpush1.bf16.msra.mxu0 0
  %1679 = vmatprep.subr.bf16.mxu0 0
  %1680 = vmatpush1.bf16.msra.mxu0 0
  %1681 = vmatprep.subr.bf16.mxu0 0
  %1682 = vmatpush1.bf16.msra.mxu0 0
  %1683 = vmatprep.mubr.bf16.mxu0 0
  %1684 = vmatmul.mubr.bf16.gmra.mrb[0].mxu0 %v1498
  %v1685 = vpop.f32.mrb[0].mxu0
  %v1686 = vadd.f32 %v1565, %v1685
  %v1687 = vpop.f32.mrb[0].mxu0
  %v1688 = vpop.f32.mrb[0].mxu0
  %v1689 = vadd.f32 %v1568, %v1688
  %v1690 = vpop.f32.mrb[0].mxu0
  %1691 = vmatprep.mubr.bf16.mxu0 0
  %1692 = vmatmul.mubr.bf16.gmra.mrb[0].mxu0 %v1501
  %v1693 = vpop.f32.mrb[0].mxu0
  %v1694 = vadd.f32 %v1573, %v1693
  %v1695 = vpop.f32.mrb[0].mxu0
  %v1696 = vpop.f32.mrb[0].mxu0
  %v1697 = vadd.f32 %v1576, %v1696
  %v1698 = vpop.f32.mrb[0].mxu0
  %1699 = vmatprep.mubr.bf16.mxu0 0
  %1700 = vmatmul.mubr.bf16.gmra.mrb[0].mxu0 %v1504
  %v1701 = vpop.f32.mrb[0].mxu0
  %v1702 = vadd.f32 %v1581, %v1701
  %v1703 = vpop.f32.mrb[0].mxu0
  %v1704 = vpop.f32.mrb[0].mxu0
  %v1705 = vadd.f32 %v1584, %v1704
  %v1706 = vpop.f32.mrb[0].mxu0
  %1707 = vmatprep.mubr.bf16.mxu0 0
  %1708 = vmatmul.mubr.bf16.gmra.mrb[0].mxu0 %v1507
  %v1709 = vpop.f32.mrb[0].mxu0
  %v1710 = vadd.f32 %v1589, %v1709
  %v1711 = vpop.f32.mrb[0].mxu0
  %v1712 = vpop.f32.mrb[0].mxu0
  %v1713 = vadd.f32 %v1592, %v1712
  %v1714 = vpop.f32.mrb[0].mxu0
  %1715 = vmatprep.mubr.bf16.mxu0 0
  %1716 = vmatmul.mubr.bf16.gmra.mrb[0].mxu0 %v1510
  %v1717 = vpop.f32.mrb[0].mxu0
  %v1718 = vadd.f32 %v1597, %v1717
  %v1719 = vpop.f32.mrb[0].mxu0
  %v1720 = vpop.f32.mrb[0].mxu0
  %v1721 = vadd.f32 %v1600, %v1720
  %v1722 = vpop.f32.mrb[0].mxu0
  %1723 = vmatprep.mubr.bf16.mxu0 0
  %1724 = vmatmul.mubr.bf16.gmra.mrb[0].mxu0 %v1513
  %v1725 = vpop.f32.mrb[0].mxu0
  %v1726 = vadd.f32 %v1605, %v1725
  %v1727 = vpop.f32.mrb[0].mxu0
  %v1728 = vpop.f32.mrb[0].mxu0
  %v1729 = vadd.f32 %v1608, %v1728
  %v1730 = vpop.f32.mrb[0].mxu0
  %1731 = vmatprep.mubr.bf16.mxu0 0
  %1732 = vmatmul.mubr.bf16.gmra.mrb[0].mxu0 %v1516
  %v1733 = vpop.f32.mrb[0].mxu0
  %v1734 = vadd.f32 %v1613, %v1733
  %v1735 = vpop.f32.mrb[0].mxu0
  %v1736 = vpop.f32.mrb[0].mxu0
  %v1737 = vadd.f32 %v1616, %v1736
  %v1738 = vpop.f32.mrb[0].mxu0
  %1739 = vmatprep.mubr.bf16.mxu0 0
  %1740 = vmatmul.mubr.bf16.gmra.mrb[0].mxu0 %v1519
  %v1741 = vpop.f32.mrb[0].mxu0
  %v1742 = vadd.f32 %v1621, %v1741
  %v1743 = vpop.f32.mrb[0].mxu0
  %v1744 = vpop.f32.mrb[0].mxu0
  %v1745 = vadd.f32 %v1624, %v1744
  %v1746 = vpop.f32.mrb[0].mxu0
  %1747 = vmatprep.mubr.bf16.mxu0 0
  %1748 = vmatmul.mubr.bf16.gmra.mrb[0].mxu0 %v1522
  %v1749 = vpop.f32.mrb[0].mxu0
  %v1750 = vadd.f32 %v1629, %v1749
  %v1751 = vpop.f32.mrb[0].mxu0
  %v1752 = vpop.f32.mrb[0].mxu0
  %v1753 = vadd.f32 %v1632, %v1752
  %v1754 = vpop.f32.mrb[0].mxu0
  %1755 = vmatprep.mubr.bf16.mxu0 0
  %1756 = vmatmul.mubr.bf16.gmra.mrb[0].mxu0 %v1525
  %v1757 = vpop.f32.mrb[0].mxu0
  %v1758 = vadd.f32 %v1637, %v1757
  %v1759 = vpop.f32.mrb[0].mxu0
  %v1760 = vpop.f32.mrb[0].mxu0
  %v1761 = vadd.f32 %v1640, %v1760
  %v1762 = vpop.f32.mrb[0].mxu0
  %1763 = vmatprep.mubr.bf16.mxu0 0
  %1764 = vmatmul.mubr.bf16.gmra.mrb[0].mxu0 %v1528
  %v1765 = vpop.f32.mrb[0].mxu0
  %v1766 = vadd.f32 %v1645, %v1765
  %v1767 = vpop.f32.mrb[0].mxu0
  %v1768 = vpop.f32.mrb[0].mxu0
  %v1769 = vadd.f32 %v1648, %v1768
  %v1770 = vpop.f32.mrb[0].mxu0
  %1771 = vdwg.mxu0
  %v1772 = vmax.f32 %v1686, 0.0
  %v1773 = vmax.f32 %v1689, 0.0
  %v1774 = vmax.f32 %v1694, 0.0
  %v1775 = vmax.f32 %v1697, 0.0
  %v1776 = vmax.f32 %v1702, 0.0
  %v1777 = vmax.f32 %v1705, 0.0
  %v1778 = vmax.f32 %v1710, 0.0
  %v1779 = vmax.f32 %v1713, 0.0
  %v1780 = vmax.f32 %v1718, 0.0
  %v1781 = vmax.f32 %v1721, 0.0
  %v1782 = vmax.f32 %v1726, 0.0
  %v1783 = vmax.f32 %v1729, 0.0
  %v1784 = vmax.f32 %v1734, 0.0
  %v1785 = vmax.f32 %v1737, 0.0
  %v1786 = vmax.f32 %v1742, 0.0
  %v1787 = vmax.f32 %v1745, 0.0
  %v1788 = vmax.f32 %v1750, 0.0
  %v1789 = vmax.f32 %v1753, 0.0
  %v1790 = vmax.f32 %v1758, 0.0
  %v1791 = vmax.f32 %v1761, 0.0
  %v1792 = vmax.f32 %v1766, 0.0
  %v1793 = vmax.f32 %v1769, 0.0
  %v1794 = vpack.c.bf16 %v1773, %v1772
  %v1795 = vpack.c.bf16 %v1775, %v1774
  %v1796 = vpack.c.bf16 %v1777, %v1776
  %v1797 = vpack.c.bf16 %v1779, %v1778
  %v1798 = vpack.c.bf16 %v1781, %v1780
  %v1799 = vpack.c.bf16 %v1783, %v1782
  %v1800 = vpack.c.bf16 %v1785, %v1784
  %v1801 = vpack.c.bf16 %v1787, %v1786
  %v1802 = vpack.c.bf16 %v1789, %v1788
  %v1803 = vpack.c.bf16 %v1791, %v1790
  %v1804 = vpack.c.bf16 %v1793, %v1792
  %vm1805 = vcmask 523264
  %1806 = vst.msk [vmem:[#allocation4] sm:$0xff] %vm1805, %v1794
  %1807 = vst.msk [vmem:[#allocation4 + $0x8] sm:$0xff] %vm1805, %v1795
  %1808 = vst.msk [vmem:[#allocation4 + $0x10] sm:$0xff] %vm1805, %v1796
  %1809 = vst.msk [vmem:[#allocation4 + $0x18] sm:$0xff] %vm1805, %v1797
  %1810 = vst.msk [vmem:[#allocation4 + $0x20] sm:$0xff] %vm1805, %v1798
  %1811 = vst.msk [vmem:[#allocation4 + $0x28] sm:$0xff] %vm1805, %v1799
  %1812 = vst.msk [vmem:[#allocation4 + $0x30] sm:$0xff] %vm1805, %v1800
  %1813 = vst.msk [vmem:[#allocation4 + $0x38] sm:$0xff] %vm1805, %v1801
  %1814 = vst.msk [vmem:[#allocation4 + $0x40] sm:$0xff] %vm1805, %v1802
  %1815 = vst.msk [vmem:[#allocation4 + $0x48] sm:$0xff] %vm1805, %v1803
  %1816 = vst.msk [vmem:[#allocation4 + $0x50] sm:$0xff] %vm1805, %v1804
  %v1817 = vld [vmem:[#allocation4] sm:$0xff]
  %v1818 = vld [vmem:[#allocation4 + $0x8] sm:$0xff]
  %v1819 = vld [vmem:[#allocation4 + $0x10] sm:$0xff]
  %v1820 = vld [vmem:[#allocation4 + $0x18] sm:$0xff]
  %v1821 = vld [vmem:[#allocation4 + $0x20] sm:$0xff]
  %v1822 = vld [vmem:[#allocation4 + $0x28] sm:$0xff]
  %v1823 = vld [vmem:[#allocation4 + $0x30] sm:$0xff]
  %v1824 = vld [vmem:[#allocation4 + $0x38] sm:$0xff]
  %v1825 = vld [vmem:[#allocation4 + $0x40] sm:$0xff]
  %1826 = vst.msk [vmem:[#allocation5] sm:$0xff] %vm1805, %v1817
  %1827 = vst.msk [vmem:[#allocation5 + $0x28] sm:$0xff] %vm1805, %v1818
  %1828 = vst.msk [vmem:[#allocation5 + $0x50] sm:$0xff] %vm1805, %v1819
  %1829 = vst.msk [vmem:[#allocation5 + $0x78] sm:$0xff] %vm1805, %v1820
  %1830 = vst.msk [vmem:[#allocation5 + $0xa0] sm:$0xff] %vm1805, %v1821
  %1831 = vst.msk [vmem:[#allocation5 + $0xc8] sm:$0xff] %vm1805, %v1822
  %1832 = vst.msk [vmem:[#allocation5 + $0xf0] sm:$0xff] %vm1805, %v1823
  %1833 = vst.msk [vmem:[#allocation5 + $0x118] sm:$0xff] %vm1805, %v1824
  %1834 = vst.msk [vmem:[#allocation5 + $0x140] sm:$0xff] %vm1805, %v1825
  %v1835 = vld [vmem:[#allocation4] sm:$0xff]
  %v1836 = vld [vmem:[#allocation4 + $0x8] sm:$0xff]
  %v1837 = vld [vmem:[#allocation4 + $0x10] sm:$0xff]
  %v1838 = vld [vmem:[#allocation4 + $0x18] sm:$0xff]
  %v1839 = vld [vmem:[#allocation4 + $0x20] sm:$0xff]
  %v1840 = vld [vmem:[#allocation4 + $0x28] sm:$0xff]
  %v1841 = vld [vmem:[#allocation4 + $0x30] sm:$0xff]
  %v1842 = vld [vmem:[#allocation4 + $0x38] sm:$0xff]
  %v1843 = vld [vmem:[#allocation4 + $0x40] sm:$0xff]
  %v1844 = vld [vmem:[#allocation4 + $0x48] sm:$0x1]
  %v1846 = vshrl.u32 %v1835, 16
  %v1848 = vshll.u32 %v1835, 16
  %v1850 = vrot.slane %v1848, 1
  %v1851 = vor.u32 %v1846, %v1850
  %v1853 = vshll.u32 %v1836, 16
  %v1855 = vrot.slane %v1853, 1
  %v1856 = vsel %vm429, %v1851, %v1855
  %v1857 = vshrl.u32 %v1836, 16
  %v1859 = vor.u32 %v1857, %v1855
  %v1861 = vshll.u32 %v1837, 16
  %v1863 = vrot.slane %v1861, 1
  %v1864 = vsel %vm429, %v1859, %v1863
  %v1865 = vshrl.u32 %v1837, 16
  %v1867 = vor.u32 %v1865, %v1863
  %v1869 = vshll.u32 %v1838, 16
  %v1871 = vrot.slane %v1869, 1
  %v1872 = vsel %vm429, %v1867, %v1871
  %v1873 = vshrl.u32 %v1838, 16
  %v1875 = vor.u32 %v1873, %v1871
  %v1877 = vshll.u32 %v1839, 16
  %v1879 = vrot.slane %v1877, 1
  %v1880 = vsel %vm429, %v1875, %v1879
  %v1881 = vshrl.u32 %v1839, 16
  %v1883 = vor.u32 %v1881, %v1879
  %v1885 = vshll.u32 %v1840, 16
  %v1887 = vrot.slane %v1885, 1
  %v1888 = vsel %vm429, %v1883, %v1887
  %v1889 = vshrl.u32 %v1840, 16
  %v1891 = vor.u32 %v1889, %v1887
  %v1893 = vshll.u32 %v1841, 16
  %v1895 = vrot.slane %v1893, 1
  %v1896 = vsel %vm429, %v1891, %v1895
  %v1897 = vshrl.u32 %v1841, 16
  %v1899 = vor.u32 %v1897, %v1895
  %v1901 = vshll.u32 %v1842, 16
  %v1903 = vrot.slane %v1901, 1
  %v1904 = vsel %vm429, %v1899, %v1903
  %v1905 = vshrl.u32 %v1842, 16
  %v1907 = vor.u32 %v1905, %v1903
  %v1909 = vshll.u32 %v1843, 16
  %v1911 = vrot.slane %v1909, 1
  %v1912 = vsel %vm429, %v1907, %v1911
  %v1913 = vshrl.u32 %v1843, 16
  %v1915 = vor.u32 %v1913, %v1911
  %v1917 = vshll.u32 %v1844, 16
  %v1919 = vrot.slane %v1917, 1
  %v1920 = vsel %vm429, %v1915, %v1919
  %1921 = vrot.lane.b32.xlu0 %v1856, 64
  %v1922 = vpop.permute.xlu0 %1921
  %1923 = vrot.lane.b32.xlu0 %v1864, 64
  %v1924 = vpop.permute.xlu0 %1923
  %1925 = vrot.lane.b32.xlu0 %v1872, 64
  %v1926 = vpop.permute.xlu0 %1925
  %1927 = vrot.lane.b32.xlu0 %v1880, 64
  %v1928 = vpop.permute.xlu0 %1927
  %1929 = vrot.lane.b32.xlu0 %v1888, 64
  %v1930 = vpop.permute.xlu0 %1929
  %1931 = vrot.lane.b32.xlu0 %v1896, 64
  %v1932 = vpop.permute.xlu0 %1931
  %1933 = vrot.lane.b32.xlu0 %v1904, 64
  %v1934 = vpop.permute.xlu0 %1933
  %1935 = vrot.lane.b32.xlu0 %v1912, 64
  %v1936 = vpop.permute.xlu0 %1935
  %1937 = vrot.lane.b32.xlu0 %v1920, 64
  %v1938 = vpop.permute.xlu0 %1937
  %vm1948 = vcmask 1048064
  %1949 = vst.msk [vmem:[#allocation5] sm:$0xff] %vm1948, %v1922
  %1950 = vst.msk [vmem:[#allocation5 + $0x28] sm:$0xff] %vm1948, %v1924
  %1951 = vst.msk [vmem:[#allocation5 + $0x50] sm:$0xff] %vm1948, %v1926
  %1952 = vst.msk [vmem:[#allocation5 + $0x78] sm:$0xff] %vm1948, %v1928
  %1953 = vst.msk [vmem:[#allocation5 + $0xa0] sm:$0xff] %vm1948, %v1930
  %1954 = vst.msk [vmem:[#allocation5 + $0xc8] sm:$0xff] %vm1948, %v1932
  %1955 = vst.msk [vmem:[#allocation5 + $0xf0] sm:$0xff] %vm1948, %v1934
  %1956 = vst.msk [vmem:[#allocation5 + $0x118] sm:$0xff] %vm1948, %v1936
  %1957 = vst.msk [vmem:[#allocation5 + $0x140] sm:$0xff] %vm1948, %v1938
  %v1958 = vld [vmem:[#allocation4] sm:$0xfe]
  %v1959 = vld [vmem:[#allocation4 + $0x8] sm:$0xff]
  %v1960 = vld [vmem:[#allocation4 + $0x10] sm:$0xff]
  %v1961 = vld [vmem:[#allocation4 + $0x18] sm:$0xff]
  %v1962 = vld [vmem:[#allocation4 + $0x20] sm:$0xff]
  %v1963 = vld [vmem:[#allocation4 + $0x28] sm:$0xff]
  %v1964 = vld [vmem:[#allocation4 + $0x30] sm:$0xff]
  %v1965 = vld [vmem:[#allocation4 + $0x38] sm:$0xff]
  %v1966 = vld [vmem:[#allocation4 + $0x40] sm:$0xff]
  %v1967 = vld [vmem:[#allocation4 + $0x48] sm:$0x1]
  %v1978 = vrot.slane %v1958, 1
  %v1979 = vrot.slane %v1959, 1
  %v1980 = vsel %vm591, %v1978, %v1979
  %v1981 = vrot.slane %v1960, 1
  %v1982 = vsel %vm591, %v1979, %v1981
  %v1983 = vrot.slane %v1961, 1
  %v1984 = vsel %vm591, %v1981, %v1983
  %v1985 = vrot.slane %v1962, 1
  %v1986 = vsel %vm591, %v1983, %v1985
  %v1987 = vrot.slane %v1963, 1
  %v1988 = vsel %vm591, %v1985, %v1987
  %v1989 = vrot.slane %v1964, 1
  %v1990 = vsel %vm591, %v1987, %v1989
  %v1991 = vrot.slane %v1965, 1
  %v1992 = vsel %vm591, %v1989, %v1991
  %v1993 = vrot.slane %v1966, 1
  %v1994 = vsel %vm591, %v1991, %v1993
  %v1995 = vrot.slane %v1967, 1
  %v1996 = vsel %vm591, %v1993, %v1995
  %2006 = vst.msk [vmem:[#allocation5 + $0x8] sm:$0xff] %vm1805, %v1980
  %2007 = vst.msk [vmem:[#allocation5 + $0x30] sm:$0xff] %vm1805, %v1982
  %2008 = vst.msk [vmem:[#allocation5 + $0x58] sm:$0xff] %vm1805, %v1984
  %2009 = vst.msk [vmem:[#allocation5 + $0x80] sm:$0xff] %vm1805, %v1986
  %2010 = vst.msk [vmem:[#allocation5 + $0xa8] sm:$0xff] %vm1805, %v1988
  %2011 = vst.msk [vmem:[#allocation5 + $0xd0] sm:$0xff] %vm1805, %v1990
  %2012 = vst.msk [vmem:[#allocation5 + $0xf8] sm:$0xff] %vm1805, %v1992
  %2013 = vst.msk [vmem:[#allocation5 + $0x120] sm:$0xff] %vm1805, %v1994
  %2014 = vst.msk [vmem:[#allocation5 + $0x148] sm:$0xff] %vm1805, %v1996
  %v2015 = vld [vmem:[#allocation4] sm:$0xe0]
  %v2016 = vld [vmem:[#allocation4 + $0x8] sm:$0xff]
  %v2017 = vld [vmem:[#allocation4 + $0x10] sm:$0xff]
  %v2018 = vld [vmem:[#allocation4 + $0x18] sm:$0xff]
  %v2019 = vld [vmem:[#allocation4 + $0x20] sm:$0xff]
  %v2020 = vld [vmem:[#allocation4 + $0x28] sm:$0xff]
  %v2021 = vld [vmem:[#allocation4 + $0x30] sm:$0xff]
  %v2022 = vld [vmem:[#allocation4 + $0x38] sm:$0xff]
  %v2023 = vld [vmem:[#allocation4 + $0x40] sm:$0xff]
  %v2024 = vld [vmem:[#allocation4 + $0x48] sm:$0x1f]
  %v2035 = vrot.slane %v2015, 5
  %v2036 = vrot.slane %v2016, 5
  %v2037 = vsel %vm684, %v2035, %v2036
  %v2038 = vrot.slane %v2017, 5
  %v2039 = vsel %vm684, %v2036, %v2038
  %v2040 = vrot.slane %v2018, 5
  %v2041 = vsel %vm684, %v2038, %v2040
  %v2042 = vrot.slane %v2019, 5
  %v2043 = vsel %vm684, %v2040, %v2042
  %v2044 = vrot.slane %v2020, 5
  %v2045 = vsel %vm684, %v2042, %v2044
  %v2046 = vrot.slane %v2021, 5
  %v2047 = vsel %vm684, %v2044, %v2046
  %v2048 = vrot.slane %v2022, 5
  %v2049 = vsel %vm684, %v2046, %v2048
  %v2050 = vrot.slane %v2023, 5
  %v2051 = vsel %vm684, %v2048, %v2050
  %v2052 = vrot.slane %v2024, 5
  %v2053 = vsel %vm684, %v2050, %v2052
  %2054 = vrot.lane.b32.xlu0 %v2037, 64
  %v2055 = vpop.permute.xlu0 %2054
  %2056 = vrot.lane.b32.xlu0 %v2039, 64
  %v2057 = vpop.permute.xlu0 %2056
  %2058 = vrot.lane.b32.xlu0 %v2041, 64
  %v2059 = vpop.permute.xlu0 %2058
  %2060 = vrot.lane.b32.xlu0 %v2043, 64
  %v2061 = vpop.permute.xlu0 %2060
  %2062 = vrot.lane.b32.xlu0 %v2045, 64
  %v2063 = vpop.permute.xlu0 %2062
  %2064 = vrot.lane.b32.xlu0 %v2047, 64
  %v2065 = vpop.permute.xlu0 %2064
  %2066 = vrot.lane.b32.xlu0 %v2049, 64
  %v2067 = vpop.permute.xlu0 %2066
  %2068 = vrot.lane.b32.xlu0 %v2051, 64
  %v2069 = vpop.permute.xlu0 %2068
  %2070 = vrot.lane.b32.xlu0 %v2053, 64
  %v2071 = vpop.permute.xlu0 %2070
  %2081 = vst.msk [vmem:[#allocation5 + $0x8] sm:$0xff] %vm1948, %v2055
  %2082 = vst.msk [vmem:[#allocation5 + $0x30] sm:$0xff] %vm1948, %v2057
  %2083 = vst.msk [vmem:[#allocation5 + $0x58] sm:$0xff] %vm1948, %v2059
  %2084 = vst.msk [vmem:[#allocation5 + $0x80] sm:$0xff] %vm1948, %v2061
  %2085 = vst.msk [vmem:[#allocation5 + $0xa8] sm:$0xff] %vm1948, %v2063
  %2086 = vst.msk [vmem:[#allocation5 + $0xd0] sm:$0xff] %vm1948, %v2065
  %2087 = vst.msk [vmem:[#allocation5 + $0xf8] sm:$0xff] %vm1948, %v2067
  %2088 = vst.msk [vmem:[#allocation5 + $0x120] sm:$0xff] %vm1948, %v2069
  %2089 = vst.msk [vmem:[#allocation5 + $0x148] sm:$0xff] %vm1948, %v2071
  %v2090 = vld [vmem:[#allocation4] sm:$0xe0]
  %v2091 = vld [vmem:[#allocation4 + $0x8] sm:$0xff]
  %v2092 = vld [vmem:[#allocation4 + $0x10] sm:$0xff]
  %v2093 = vld [vmem:[#allocation4 + $0x18] sm:$0xff]
  %v2094 = vld [vmem:[#allocation4 + $0x20] sm:$0xff]
  %v2095 = vld [vmem:[#allocation4 + $0x28] sm:$0xff]
  %v2096 = vld [vmem:[#allocation4 + $0x30] sm:$0xff]
  %v2097 = vld [vmem:[#allocation4 + $0x38] sm:$0xff]
  %v2098 = vld [vmem:[#allocation4 + $0x40] sm:$0xff]
  %v2099 = vld [vmem:[#allocation4 + $0x48] sm:$0x3f]
  %v2101 = vshrl.u32 %v2090, 16
  %v2103 = vrot.slane %v2101, 5
  %v2104 = vshll.u32 %v2090, 16
  %v2106 = vrot.slane %v2104, 6
  %v2107 = vor.u32 %v2103, %v2106
  %v2109 = vshrl.u32 %v2091, 16
  %v2111 = vrot.slane %v2109, 5
  %v2112 = vshll.u32 %v2091, 16
  %v2114 = vrot.slane %v2112, 6
  %v2115 = vor.u32 %v2111, %v2114
  %v2116 = vsel %vm765, %v2107, %v2115
  %v2118 = vshrl.u32 %v2092, 16
  %v2120 = vrot.slane %v2118, 5
  %v2121 = vshll.u32 %v2092, 16
  %v2123 = vrot.slane %v2121, 6
  %v2124 = vor.u32 %v2120, %v2123
  %v2125 = vsel %vm765, %v2115, %v2124
  %v2127 = vshrl.u32 %v2093, 16
  %v2129 = vrot.slane %v2127, 5
  %v2130 = vshll.u32 %v2093, 16
  %v2132 = vrot.slane %v2130, 6
  %v2133 = vor.u32 %v2129, %v2132
  %v2134 = vsel %vm765, %v2124, %v2133
  %v2136 = vshrl.u32 %v2094, 16
  %v2138 = vrot.slane %v2136, 5
  %v2139 = vshll.u32 %v2094, 16
  %v2141 = vrot.slane %v2139, 6
  %v2142 = vor.u32 %v2138, %v2141
  %v2143 = vsel %vm765, %v2133, %v2142
  %v2145 = vshrl.u32 %v2095, 16
  %v2147 = vrot.slane %v2145, 5
  %v2148 = vshll.u32 %v2095, 16
  %v2150 = vrot.slane %v2148, 6
  %v2151 = vor.u32 %v2147, %v2150
  %v2152 = vsel %vm765, %v2142, %v2151
  %v2154 = vshrl.u32 %v2096, 16
  %v2156 = vrot.slane %v2154, 5
  %v2157 = vshll.u32 %v2096, 16
  %v2159 = vrot.slane %v2157, 6
  %v2160 = vor.u32 %v2156, %v2159
  %v2161 = vsel %vm765, %v2151, %v2160
  %v2163 = vshrl.u32 %v2097, 16
  %v2165 = vrot.slane %v2163, 5
  %v2166 = vshll.u32 %v2097, 16
  %v2168 = vrot.slane %v2166, 6
  %v2169 = vor.u32 %v2165, %v2168
  %v2170 = vsel %vm765, %v2160, %v2169
  %v2172 = vshrl.u32 %v2098, 16
  %v2174 = vrot.slane %v2172, 5
  %v2175 = vshll.u32 %v2098, 16
  %v2177 = vrot.slane %v2175, 6
  %v2178 = vor.u32 %v2174, %v2177
  %v2179 = vsel %vm765, %v2169, %v2178
  %v2181 = vshrl.u32 %v2099, 16
  %v2183 = vrot.slane %v2181, 5
  %v2184 = vshll.u32 %v2099, 16
  %v2186 = vrot.slane %v2184, 6
  %v2187 = vor.u32 %v2183, %v2186
  %v2188 = vsel %vm765, %v2178, %v2187
  %2198 = vst.msk [vmem:[#allocation5 + $0x10] sm:$0xff] %vm1805, %v2116
  %2199 = vst.msk [vmem:[#allocation5 + $0x38] sm:$0xff] %vm1805, %v2125
  %2200 = vst.msk [vmem:[#allocation5 + $0x60] sm:$0xff] %vm1805, %v2134
  %2201 = vst.msk [vmem:[#allocation5 + $0x88] sm:$0xff] %vm1805, %v2143
  %2202 = vst.msk [vmem:[#allocation5 + $0xb0] sm:$0xff] %vm1805, %v2152
  %2203 = vst.msk [vmem:[#allocation5 + $0xd8] sm:$0xff] %vm1805, %v2161
  %2204 = vst.msk [vmem:[#allocation5 + $0x100] sm:$0xff] %vm1805, %v2170
  %2205 = vst.msk [vmem:[#allocation5 + $0x128] sm:$0xff] %vm1805, %v2179
  %2206 = vst.msk [vmem:[#allocation5 + $0x150] sm:$0xff] %vm1805, %v2188
  %v2207 = vld [vmem:[#allocation4] sm:$0xc0]
  %v2208 = vld [vmem:[#allocation4 + $0x8] sm:$0xff]
  %v2209 = vld [vmem:[#allocation4 + $0x10] sm:$0xff]
  %v2210 = vld [vmem:[#allocation4 + $0x18] sm:$0xff]
  %v2211 = vld [vmem:[#allocation4 + $0x20] sm:$0xff]
  %v2212 = vld [vmem:[#allocation4 + $0x28] sm:$0xff]
  %v2213 = vld [vmem:[#allocation4 + $0x30] sm:$0xff]
  %v2214 = vld [vmem:[#allocation4 + $0x38] sm:$0xff]
  %v2215 = vld [vmem:[#allocation4 + $0x40] sm:$0xff]
  %v2216 = vld [vmem:[#allocation4 + $0x48] sm:$0x3f]
  %v2227 = vrot.slane %v2207, 6
  %v2228 = vrot.slane %v2208, 6
  %v2229 = vsel %vm919, %v2227, %v2228
  %v2230 = vrot.slane %v2209, 6
  %v2231 = vsel %vm919, %v2228, %v2230
  %v2232 = vrot.slane %v2210, 6
  %v2233 = vsel %vm919, %v2230, %v2232
  %v2234 = vrot.slane %v2211, 6
  %v2235 = vsel %vm919, %v2232, %v2234
  %v2236 = vrot.slane %v2212, 6
  %v2237 = vsel %vm919, %v2234, %v2236
  %v2238 = vrot.slane %v2213, 6
  %v2239 = vsel %vm919, %v2236, %v2238
  %v2240 = vrot.slane %v2214, 6
  %v2241 = vsel %vm919, %v2238, %v2240
  %v2242 = vrot.slane %v2215, 6
  %v2243 = vsel %vm919, %v2240, %v2242
  %v2244 = vrot.slane %v2216, 6
  %v2245 = vsel %vm919, %v2242, %v2244
  %2246 = vrot.lane.b32.xlu0 %v2229, 64
  %v2247 = vpop.permute.xlu0 %2246
  %2248 = vrot.lane.b32.xlu0 %v2231, 64
  %v2249 = vpop.permute.xlu0 %2248
  %2250 = vrot.lane.b32.xlu0 %v2233, 64
  %v2251 = vpop.permute.xlu0 %2250
  %2252 = vrot.lane.b32.xlu0 %v2235, 64
  %v2253 = vpop.permute.xlu0 %2252
  %2254 = vrot.lane.b32.xlu0 %v2237, 64
  %v2255 = vpop.permute.xlu0 %2254
  %2256 = vrot.lane.b32.xlu0 %v2239, 64
  %v2257 = vpop.permute.xlu0 %2256
  %2258 = vrot.lane.b32.xlu0 %v2241, 64
  %v2259 = vpop.permute.xlu0 %2258
  %2260 = vrot.lane.b32.xlu0 %v2243, 64
  %v2261 = vpop.permute.xlu0 %2260
  %2262 = vrot.lane.b32.xlu0 %v2245, 64
  %v2263 = vpop.permute.xlu0 %2262
  %2273 = vst.msk [vmem:[#allocation5 + $0x10] sm:$0xff] %vm1948, %v2247
  %2274 = vst.msk [vmem:[#allocation5 + $0x38] sm:$0xff] %vm1948, %v2249
  %2275 = vst.msk [vmem:[#allocation5 + $0x60] sm:$0xff] %vm1948, %v2251
  %2276 = vst.msk [vmem:[#allocation5 + $0x88] sm:$0xff] %vm1948, %v2253
  %2277 = vst.msk [vmem:[#allocation5 + $0xb0] sm:$0xff] %vm1948, %v2255
  %2278 = vst.msk [vmem:[#allocation5 + $0xd8] sm:$0xff] %vm1948, %v2257
  %2279 = vst.msk [vmem:[#allocation5 + $0x100] sm:$0xff] %vm1948, %v2259
  %2280 = vst.msk [vmem:[#allocation5 + $0x128] sm:$0xff] %vm1948, %v2261
  %2281 = vst.msk [vmem:[#allocation5 + $0x150] sm:$0xff] %vm1948, %v2263
  %v2282 = vld [vmem:[#allocation4 + $0x8] sm:$0xfc]
  %v2283 = vld [vmem:[#allocation4 + $0x10] sm:$0xff]
  %v2284 = vld [vmem:[#allocation4 + $0x18] sm:$0xff]
  %v2285 = vld [vmem:[#allocation4 + $0x20] sm:$0xff]
  %v2286 = vld [vmem:[#allocation4 + $0x28] sm:$0xff]
  %v2287 = vld [vmem:[#allocation4 + $0x30] sm:$0xff]
  %v2288 = vld [vmem:[#allocation4 + $0x38] sm:$0xff]
  %v2289 = vld [vmem:[#allocation4 + $0x40] sm:$0xff]
  %v2290 = vld [vmem:[#allocation4 + $0x48] sm:$0xff]
  %v2291 = vld [vmem:[#allocation4 + $0x50] sm:$0x3]
  %v2302 = vrot.slane %v2282, 2
  %v2303 = vrot.slane %v2283, 2
  %v2304 = vsel %vm1011, %v2302, %v2303
  %v2305 = vrot.slane %v2284, 2
  %v2306 = vsel %vm1011, %v2303, %v2305
  %v2307 = vrot.slane %v2285, 2
  %v2308 = vsel %vm1011, %v2305, %v2307
  %v2309 = vrot.slane %v2286, 2
  %v2310 = vsel %vm1011, %v2307, %v2309
  %v2311 = vrot.slane %v2287, 2
  %v2312 = vsel %vm1011, %v2309, %v2311
  %v2313 = vrot.slane %v2288, 2
  %v2314 = vsel %vm1011, %v2311, %v2313
  %v2315 = vrot.slane %v2289, 2
  %v2316 = vsel %vm1011, %v2313, %v2315
  %v2317 = vrot.slane %v2290, 2
  %v2318 = vsel %vm1011, %v2315, %v2317
  %v2319 = vrot.slane %v2291, 2
  %v2320 = vsel %vm1011, %v2317, %v2319
  %2330 = vst.msk [vmem:[#allocation5 + $0x18] sm:$0xff] %vm1805, %v2304
  %2331 = vst.msk [vmem:[#allocation5 + $0x40] sm:$0xff] %vm1805, %v2306
  %2332 = vst.msk [vmem:[#allocation5 + $0x68] sm:$0xff] %vm1805, %v2308
  %2333 = vst.msk [vmem:[#allocation5 + $0x90] sm:$0xff] %vm1805, %v2310
  %2334 = vst.msk [vmem:[#allocation5 + $0xb8] sm:$0xff] %vm1805, %v2312
  %2335 = vst.msk [vmem:[#allocation5 + $0xe0] sm:$0xff] %vm1805, %v2314
  %2336 = vst.msk [vmem:[#allocation5 + $0x108] sm:$0xff] %vm1805, %v2316
  %2337 = vst.msk [vmem:[#allocation5 + $0x130] sm:$0xff] %vm1805, %v2318
  %2338 = vst.msk [vmem:[#allocation5 + $0x158] sm:$0xff] %vm1805, %v2320
  %v2339 = vld [vmem:[#allocation4 + $0x8] sm:$0xfc]
  %v2340 = vld [vmem:[#allocation4 + $0x10] sm:$0xff]
  %v2341 = vld [vmem:[#allocation4 + $0x18] sm:$0xff]
  %v2342 = vld [vmem:[#allocation4 + $0x20] sm:$0xff]
  %v2343 = vld [vmem:[#allocation4 + $0x28] sm:$0xff]
  %v2344 = vld [vmem:[#allocation4 + $0x30] sm:$0xff]
  %v2345 = vld [vmem:[#allocation4 + $0x38] sm:$0xff]
  %v2346 = vld [vmem:[#allocation4 + $0x40] sm:$0xff]
  %v2347 = vld [vmem:[#allocation4 + $0x48] sm:$0xff]
  %v2348 = vld [vmem:[#allocation4 + $0x50] sm:$0x7]
  %v2350 = vshrl.u32 %v2339, 16
  %v2352 = vrot.slane %v2350, 2
  %v2353 = vshll.u32 %v2339, 16
  %v2355 = vrot.slane %v2353, 3
  %v2356 = vor.u32 %v2352, %v2355
  %v2358 = vshrl.u32 %v2340, 16
  %v2360 = vrot.slane %v2358, 2
  %v2361 = vshll.u32 %v2340, 16
  %v2363 = vrot.slane %v2361, 3
  %v2364 = vor.u32 %v2360, %v2363
  %v2365 = vsel %vm1091, %v2356, %v2364
  %v2367 = vshrl.u32 %v2341, 16
  %v2369 = vrot.slane %v2367, 2
  %v2370 = vshll.u32 %v2341, 16
  %v2372 = vrot.slane %v2370, 3
  %v2373 = vor.u32 %v2369, %v2372
  %v2374 = vsel %vm1091, %v2364, %v2373
  %v2376 = vshrl.u32 %v2342, 16
  %v2378 = vrot.slane %v2376, 2
  %v2379 = vshll.u32 %v2342, 16
  %v2381 = vrot.slane %v2379, 3
  %v2382 = vor.u32 %v2378, %v2381
  %v2383 = vsel %vm1091, %v2373, %v2382
  %v2385 = vshrl.u32 %v2343, 16
  %v2387 = vrot.slane %v2385, 2
  %v2388 = vshll.u32 %v2343, 16
  %v2390 = vrot.slane %v2388, 3
  %v2391 = vor.u32 %v2387, %v2390
  %v2392 = vsel %vm1091, %v2382, %v2391
  %v2394 = vshrl.u32 %v2344, 16
  %v2396 = vrot.slane %v2394, 2
  %v2397 = vshll.u32 %v2344, 16
  %v2399 = vrot.slane %v2397, 3
  %v2400 = vor.u32 %v2396, %v2399
  %v2401 = vsel %vm1091, %v2391, %v2400
  %v2403 = vshrl.u32 %v2345, 16
  %v2405 = vrot.slane %v2403, 2
  %v2406 = vshll.u32 %v2345, 16
  %v2408 = vrot.slane %v2406, 3
  %v2409 = vor.u32 %v2405, %v2408
  %v2410 = vsel %vm1091, %v2400, %v2409
  %v2412 = vshrl.u32 %v2346, 16
  %v2414 = vrot.slane %v2412, 2
  %v2415 = vshll.u32 %v2346, 16
  %v2417 = vrot.slane %v2415, 3
  %v2418 = vor.u32 %v2414, %v2417
  %v2419 = vsel %vm1091, %v2409, %v2418
  %v2421 = vshrl.u32 %v2347, 16
  %v2423 = vrot.slane %v2421, 2
  %v2424 = vshll.u32 %v2347, 16
  %v2426 = vrot.slane %v2424, 3
  %v2427 = vor.u32 %v2423, %v2426
  %v2428 = vsel %vm1091, %v2418, %v2427
  %v2430 = vshrl.u32 %v2348, 16
  %v2432 = vrot.slane %v2430, 2
  %v2433 = vshll.u32 %v2348, 16
  %v2435 = vrot.slane %v2433, 3
  %v2436 = vor.u32 %v2432, %v2435
  %v2437 = vsel %vm1091, %v2427, %v2436
  %2438 = vrot.lane.b32.xlu0 %v2365, 64
  %v2439 = vpop.permute.xlu0 %2438
  %2440 = vrot.lane.b32.xlu0 %v2374, 64
  %v2441 = vpop.permute.xlu0 %2440
  %2442 = vrot.lane.b32.xlu0 %v2383, 64
  %v2443 = vpop.permute.xlu0 %2442
  %2444 = vrot.lane.b32.xlu0 %v2392, 64
  %v2445 = vpop.permute.xlu0 %2444
  %2446 = vrot.lane.b32.xlu0 %v2401, 64
  %v2447 = vpop.permute.xlu0 %2446
  %2448 = vrot.lane.b32.xlu0 %v2410, 64
  %v2449 = vpop.permute.xlu0 %2448
  %2450 = vrot.lane.b32.xlu0 %v2419, 64
  %v2451 = vpop.permute.xlu0 %2450
  %2452 = vrot.lane.b32.xlu0 %v2428, 64
  %v2453 = vpop.permute.xlu0 %2452
  %2454 = vrot.lane.b32.xlu0 %v2437, 64
  %v2455 = vpop.permute.xlu0 %2454
  %2465 = vst.msk [vmem:[#allocation5 + $0x18] sm:$0xff] %vm1948, %v2439
  %2466 = vst.msk [vmem:[#allocation5 + $0x40] sm:$0xff] %vm1948, %v2441
  %2467 = vst.msk [vmem:[#allocation5 + $0x68] sm:$0xff] %vm1948, %v2443
  %2468 = vst.msk [vmem:[#allocation5 + $0x90] sm:$0xff] %vm1948, %v2445
  %2469 = vst.msk [vmem:[#allocation5 + $0xb8] sm:$0xff] %vm1948, %v2447
  %2470 = vst.msk [vmem:[#allocation5 + $0xe0] sm:$0xff] %vm1948, %v2449
  %2471 = vst.msk [vmem:[#allocation5 + $0x108] sm:$0xff] %vm1948, %v2451
  %2472 = vst.msk [vmem:[#allocation5 + $0x130] sm:$0xff] %vm1948, %v2453
  %2473 = vst.msk [vmem:[#allocation5 + $0x158] sm:$0xff] %vm1948, %v2455
  %v2474 = vld [vmem:[#allocation4 + $0x8] sm:$0xf8]
  %v2475 = vld [vmem:[#allocation4 + $0x10] sm:$0xff]
  %v2476 = vld [vmem:[#allocation4 + $0x18] sm:$0xff]
  %v2477 = vld [vmem:[#allocation4 + $0x20] sm:$0xff]
  %v2478 = vld [vmem:[#allocation4 + $0x28] sm:$0xff]
  %v2479 = vld [vmem:[#allocation4 + $0x30] sm:$0xff]
  %v2480 = vld [vmem:[#allocation4 + $0x38] sm:$0xff]
  %v2481 = vld [vmem:[#allocation4 + $0x40] sm:$0xff]
  %v2482 = vld [vmem:[#allocation4 + $0x48] sm:$0xff]
  %v2483 = vld [vmem:[#allocation4 + $0x50] sm:$0x7]
  %v2494 = vrot.slane %v2474, 3
  %v2495 = vrot.slane %v2475, 3
  %v2496 = vsel %vm1267, %v2494, %v2495
  %v2497 = vrot.slane %v2476, 3
  %v2498 = vsel %vm1267, %v2495, %v2497
  %v2499 = vrot.slane %v2477, 3
  %v2500 = vsel %vm1267, %v2497, %v2499
  %v2501 = vrot.slane %v2478, 3
  %v2502 = vsel %vm1267, %v2499, %v2501
  %v2503 = vrot.slane %v2479, 3
  %v2504 = vsel %vm1267, %v2501, %v2503
  %v2505 = vrot.slane %v2480, 3
  %v2506 = vsel %vm1267, %v2503, %v2505
  %v2507 = vrot.slane %v2481, 3
  %v2508 = vsel %vm1267, %v2505, %v2507
  %v2509 = vrot.slane %v2482, 3
  %v2510 = vsel %vm1267, %v2507, %v2509
  %v2511 = vrot.slane %v2483, 3
  %v2512 = vsel %vm1267, %v2509, %v2511
  %2522 = vst.msk [vmem:[#allocation5 + $0x20] sm:$0xff] %vm1805, %v2496
  %2523 = vst.msk [vmem:[#allocation5 + $0x48] sm:$0xff] %vm1805, %v2498
  %2524 = vst.msk [vmem:[#allocation5 + $0x70] sm:$0xff] %vm1805, %v2500
  %2525 = vst.msk [vmem:[#allocation5 + $0x98] sm:$0xff] %vm1805, %v2502
  %2526 = vst.msk [vmem:[#allocation5 + $0xc0] sm:$0xff] %vm1805, %v2504
  %2527 = vst.msk [vmem:[#allocation5 + $0xe8] sm:$0xff] %vm1805, %v2506
  %2528 = vst.msk [vmem:[#allocation5 + $0x110] sm:$0xff] %vm1805, %v2508
  %2529 = vst.msk [vmem:[#allocation5 + $0x138] sm:$0xff] %vm1805, %v2510
  %2530 = vst.msk [vmem:[#allocation5 + $0x160] sm:$0xff] %vm1805, %v2512
  %v2531 = vld [vmem:[#allocation5] sm:$0xff]
  %v2532 = vld [vmem:[#allocation5 + $0x8] sm:$0xff]
  %v2533 = vld [vmem:[#allocation5 + $0x10] sm:$0xff]
  %v2534 = vld [vmem:[#allocation5 + $0x18] sm:$0xff]
  %v2535 = vld [vmem:[#allocation5 + $0x20] sm:$0xff]
  %v2536 = vld [vmem:[#allocation5 + $0x28] sm:$0xff]
  %v2537 = vld [vmem:[#allocation5 + $0x30] sm:$0xff]
  %v2538 = vld [vmem:[#allocation5 + $0x38] sm:$0xff]
  %v2539 = vld [vmem:[#allocation5 + $0x40] sm:$0xff]
  %v2540 = vld [vmem:[#allocation5 + $0x48] sm:$0xff]
  %v2541 = vld [vmem:[#allocation5 + $0x50] sm:$0xff]
  %v2542 = vld [vmem:[#allocation5 + $0x58] sm:$0xff]
  %v2543 = vld [vmem:[#allocation5 + $0x60] sm:$0xff]
  %v2544 = vld [vmem:[#allocation5 + $0x68] sm:$0xff]
  %v2545 = vld [vmem:[#allocation5 + $0x70] sm:$0xff]
  %v2546 = vld [vmem:[#allocation5 + $0x78] sm:$0xff]
  %v2547 = vld [vmem:[#allocation5 + $0x80] sm:$0xff]
  %v2548 = vld [vmem:[#allocation5 + $0x88] sm:$0xff]
  %v2549 = vld [vmem:[#allocation5 + $0x90] sm:$0xff]
  %v2550 = vld [vmem:[#allocation5 + $0x98] sm:$0xff]
  %v2551 = vld [vmem:[#allocation5 + $0xa0] sm:$0xff]
  %v2552 = vld [vmem:[#allocation5 + $0xa8] sm:$0xff]
  %v2553 = vld [vmem:[#allocation5 + $0xb0] sm:$0xff]
  %v2554 = vld [vmem:[#allocation5 + $0xb8] sm:$0xff]
  %v2555 = vld [vmem:[#allocation5 + $0xc0] sm:$0xff]
  %v2556 = vld [vmem:[#allocation5 + $0xc8] sm:$0xff]
  %v2557 = vld [vmem:[#allocation5 + $0xd0] sm:$0xff]
  %v2558 = vld [vmem:[#allocation5 + $0xd8] sm:$0xff]
  %v2559 = vld [vmem:[#allocation5 + $0xe0] sm:$0xff]
  %v2560 = vld [vmem:[#allocation5 + $0xe8] sm:$0xff]
  %v2561 = vld [vmem:[#allocation5 + $0xf0] sm:$0xff]
  %v2562 = vld [vmem:[#allocation5 + $0xf8] sm:$0xff]
  %v2563 = vld [vmem:[#allocation5 + $0x100] sm:$0xff]
  %v2564 = vld [vmem:[#allocation5 + $0x108] sm:$0xff]
  %v2565 = vld [vmem:[#allocation5 + $0x110] sm:$0xff]
  %v2566 = vld [vmem:[#allocation5 + $0x118] sm:$0xff]
  %v2567 = vld [vmem:[#allocation5 + $0x120] sm:$0xff]
  %v2568 = vld [vmem:[#allocation5 + $0x128] sm:$0xff]
  %v2569 = vld [vmem:[#allocation5 + $0x130] sm:$0xff]
  %v2570 = vld [vmem:[#allocation5 + $0x138] sm:$0xff]
  %v2571 = vld [vmem:[#allocation5 + $0x140] sm:$0xff]
  %v2572 = vld [vmem:[#allocation5 + $0x148] sm:$0xff]
  %v2573 = vld [vmem:[#allocation5 + $0x150] sm:$0xff]
  %v2574 = vld [vmem:[#allocation5 + $0x158] sm:$0xff]
  %v2575 = vld [vmem:[#allocation5 + $0x160] sm:$0xff]
  %v2576 = vld [vmem:[%s5] sm:$0xf]
  %v2577 = vld [vmem:[%s5 + $0x4] sm:$0xf]
  %v2578 = vld [vmem:[%s5 + $0x8] sm:$0xf]
  %v2579 = vld [vmem:[%s5 + $0xc] sm:$0xf]
  %v2580 = vld [vmem:[%s5 + $0x10] sm:$0xf]
  %v2581 = vld [vmem:[%s5 + $0x14] sm:$0xf]
  %v2582 = vld [vmem:[%s5 + $0x18] sm:$0xf]
  %v2583 = vld [vmem:[%s5 + $0x1c] sm:$0xf]
  %v2584 = vld [vmem:[%s5 + $0x20] sm:$0xf]
  %v2585 = vld [vmem:[%s5 + $0x24] sm:$0xf]
  %v2586 = vld [vmem:[%s5 + $0x28] sm:$0xf]
  %v2587 = vld [vmem:[%s5 + $0x2c] sm:$0xf]
  %v2588 = vld [vmem:[%s5 + $0x30] sm:$0xf]
  %v2589 = vld [vmem:[%s5 + $0x34] sm:$0xf]
  %v2590 = vld [vmem:[%s5 + $0x38] sm:$0xf]
  %v2591 = vld [vmem:[%s5 + $0x3c] sm:$0xf]
  %v2592 = vld [vmem:[%s5 + $0x40] sm:$0xf]
  %v2593 = vld [vmem:[%s5 + $0x44] sm:$0xf]
  %v2594 = vld [vmem:[%s5 + $0x48] sm:$0xf]
  %v2595 = vld [vmem:[%s5 + $0x4c] sm:$0xf]
  %v2596 = vld [vmem:[%s5 + $0x50] sm:$0xf]
  %v2597 = vld [vmem:[%s5 + $0x54] sm:$0xf]
  %v2598 = vld [vmem:[%s5 + $0x58] sm:$0xf]
  %v2599 = vld [vmem:[%s5 + $0x5c] sm:$0xf]
  %v2600 = vld [vmem:[%s5 + $0x60] sm:$0xf]
  %v2601 = vld [vmem:[%s5 + $0x64] sm:$0xf]
  %v2602 = vld [vmem:[%s5 + $0x68] sm:$0xf]
  %v2603 = vld [vmem:[%s5 + $0x6c] sm:$0xf]
  %v2604 = vld [vmem:[%s5 + $0x70] sm:$0xf]
  %v2605 = vld [vmem:[%s5 + $0x74] sm:$0xf]
  %v2606 = vld [vmem:[%s5 + $0x78] sm:$0xf]
  %v2607 = vld [vmem:[%s5 + $0x7c] sm:$0xf]
  %v2608 = vld [vmem:[%s5 + $0x80] sm:$0xf]
  %v2609 = vld [vmem:[%s5 + $0x84] sm:$0xf]
  %v2610 = vld [vmem:[%s5 + $0x88] sm:$0xf]
  %v2611 = vld [vmem:[%s5 + $0x8c] sm:$0xf]
  %v2612 = vld [vmem:[%s5 + $0x90] sm:$0xf]
  %v2613 = vld [vmem:[%s5 + $0x94] sm:$0xf]
  %v2614 = vld [vmem:[%s5 + $0x98] sm:$0xf]
  %v2615 = vld [vmem:[%s5 + $0x9c] sm:$0xf]
  %v2616 = vld [vmem:[%s5 + $0xa0] sm:$0xf]
  %v2617 = vld [vmem:[%s5 + $0xa4] sm:$0xf]
  %v2618 = vld [vmem:[%s5 + $0xa8] sm:$0xf]
  %v2619 = vld [vmem:[%s5 + $0xac] sm:$0xf]
  %v2620 = vld [vmem:[%s5 + $0xb0] sm:$0xf]
  %v2621 = vld [vmem:[%s5 + $0xb4] sm:$0xf]
  %v2622 = vld [vmem:[%s5 + $0xb8] sm:$0xf]
  %v2623 = vld [vmem:[%s5 + $0xbc] sm:$0xf]
  %v2624 = vld [vmem:[%s5 + $0xc0] sm:$0xf]
  %v2625 = vld [vmem:[%s5 + $0xc4] sm:$0xf]
  %v2626 = vld [vmem:[%s5 + $0xc8] sm:$0xf]
  %v2627 = vld [vmem:[%s5 + $0xcc] sm:$0xf]
  %v2628 = vld [vmem:[%s5 + $0xd0] sm:$0xf]
  %v2629 = vld [vmem:[%s5 + $0xd4] sm:$0xf]
  %v2630 = vld [vmem:[%s5 + $0xd8] sm:$0xf]
  %v2631 = vld [vmem:[%s5 + $0xdc] sm:$0xf]
  %v2632 = vld [vmem:[%s5 + $0xe0] sm:$0xf]
  %v2633 = vld [vmem:[%s5 + $0xe4] sm:$0xf]
  %v2634 = vld [vmem:[%s5 + $0xe8] sm:$0xf]
  %v2635 = vld [vmem:[%s5 + $0xec] sm:$0xf]
  %v2636 = vld [vmem:[%s5 + $0xf0] sm:$0xf]
  %v2637 = vld [vmem:[%s5 + $0xf4] sm:$0xf]
  %v2638 = vld [vmem:[%s5 + $0xf8] sm:$0xf]
  %v2639 = vld [vmem:[%s5 + $0xfc] sm:$0xf]
  %v2640 = vld [vmem:[%s5 + $0x100] sm:$0xf]
  %v2641 = vld [vmem:[%s5 + $0x104] sm:$0xf]
  %v2642 = vld [vmem:[%s5 + $0x108] sm:$0xf]
  %v2643 = vld [vmem:[%s5 + $0x10c] sm:$0xf]
  %v2644 = vld [vmem:[%s5 + $0x110] sm:$0xf]
  %v2645 = vld [vmem:[%s5 + $0x114] sm:$0xf]
  %v2646 = vld [vmem:[%s5 + $0x118] sm:$0xf]
  %v2647 = vld [vmem:[%s5 + $0x11c] sm:$0xf]
  %v2648 = vld [vmem:[%s6] sm:$0x1]
  %v2650 = vlaneseq
  %v2651 = vshrl.u32 %v2650, 7
  %v2652 = vsub.s32 0, %v2651
  %v2653 = vrot.slane %v2648, %v2652
  %v2727 = vunpack.c.l.b16 %v2576
  %v2728 = vunpack.c.l.b16 %v2577
  %v2729 = vunpack.c.l.b16 %v2578
  %v2730 = vunpack.c.l.b16 %v2579
  %v2731 = vunpack.c.l.b16 %v2580
  %v2732 = vunpack.c.l.b16 %v2581
  %v2733 = vunpack.c.l.b16 %v2582
  %v2734 = vunpack.c.l.b16 %v2583
  %v2735 = vunpack.c.l.b16 %v2584
  %v2736 = vunpack.c.l.b16 %v2585
  %v2737 = vunpack.c.l.b16 %v2586
  %v2738 = vunpack.c.l.b16 %v2587
  %v2739 = vunpack.c.l.b16 %v2588
  %v2740 = vunpack.c.l.b16 %v2589
  %v2741 = vunpack.c.l.b16 %v2590
  %v2742 = vunpack.c.l.b16 %v2591
  %v2743 = vunpack.c.l.b16 %v2592
  %v2744 = vunpack.c.l.b16 %v2593
  %v2745 = vunpack.c.l.b16 %v2594
  %v2746 = vunpack.c.l.b16 %v2595
  %v2747 = vunpack.c.l.b16 %v2596
  %v2748 = vunpack.c.l.b16 %v2597
  %v2749 = vunpack.c.l.b16 %v2598
  %v2750 = vunpack.c.l.b16 %v2599
  %v2751 = vunpack.c.l.b16 %v2600
  %v2752 = vunpack.c.l.b16 %v2601
  %v2753 = vunpack.c.l.b16 %v2602
  %v2754 = vunpack.c.l.b16 %v2603
  %v2755 = vunpack.c.l.b16 %v2604
  %v2756 = vunpack.c.l.b16 %v2605
  %v2757 = vunpack.c.l.b16 %v2606
  %v2758 = vunpack.c.l.b16 %v2607
  %v2759 = vunpack.c.l.b16 %v2608
  %v2760 = vunpack.c.l.b16 %v2609
  %v2761 = vunpack.c.l.b16 %v2610
  %v2762 = vunpack.c.l.b16 %v2611
  %v2763 = vunpack.c.l.b16 %v2612
  %v2764 = vunpack.c.l.b16 %v2613
  %v2765 = vunpack.c.l.b16 %v2614
  %v2766 = vunpack.c.l.b16 %v2615
  %v2767 = vunpack.c.l.b16 %v2616
  %v2768 = vunpack.c.l.b16 %v2617
  %v2769 = vunpack.c.l.b16 %v2618
  %v2770 = vunpack.c.l.b16 %v2619
  %v2771 = vunpack.c.l.b16 %v2620
  %v2772 = vunpack.c.l.b16 %v2621
  %v2773 = vunpack.c.l.b16 %v2622
  %v2774 = vunpack.c.l.b16 %v2623
  %v2775 = vunpack.c.l.b16 %v2624
  %v2776 = vunpack.c.l.b16 %v2625
  %v2777 = vunpack.c.l.b16 %v2626
  %v2778 = vunpack.c.l.b16 %v2627
  %v2779 = vunpack.c.l.b16 %v2628
  %v2780 = vunpack.c.l.b16 %v2629
  %v2781 = vunpack.c.l.b16 %v2630
  %v2782 = vunpack.c.l.b16 %v2631
  %v2783 = vunpack.c.l.b16 %v2632
  %v2784 = vunpack.c.l.b16 %v2633
  %v2785 = vunpack.c.l.b16 %v2634
  %v2786 = vunpack.c.l.b16 %v2635
  %v2787 = vunpack.c.l.b16 %v2636
  %v2788 = vunpack.c.l.b16 %v2637
  %v2789 = vunpack.c.l.b16 %v2638
  %v2790 = vunpack.c.l.b16 %v2639
  %v2791 = vunpack.c.l.b16 %v2640
  %v2792 = vunpack.c.l.b16 %v2641
  %v2793 = vunpack.c.l.b16 %v2642
  %v2794 = vunpack.c.l.b16 %v2643
  %v2795 = vunpack.c.l.b16 %v2644
  %v2796 = vunpack.c.l.b16 %v2645
  %v2797 = vunpack.c.l.b16 %v2646
  %v2798 = vunpack.c.l.b16 %v2647
  %v2799 = vpack.c.b16 %v2728, %v2727
  %v2800 = vpack.c.b16 %v2730, %v2729
  %v2801 = vpack.c.b16 %v2732, %v2731
  %v2802 = vpack.c.b16 %v2734, %v2733
  %v2803 = vpack.c.b16 %v2736, %v2735
  %v2804 = vpack.c.b16 %v2738, %v2737
  %v2805 = vpack.c.b16 %v2740, %v2739
  %v2806 = vpack.c.b16 %v2742, %v2741
  %v2807 = vpack.c.b16 %v2744, %v2743
  %v2808 = vpack.c.b16 %v2746, %v2745
  %v2809 = vpack.c.b16 %v2748, %v2747
  %v2810 = vpack.c.b16 %v2750, %v2749
  %v2811 = vpack.c.b16 %v2752, %v2751
  %v2812 = vpack.c.b16 %v2754, %v2753
  %v2813 = vpack.c.b16 %v2756, %v2755
  %v2814 = vpack.c.b16 %v2758, %v2757
  %v2815 = vpack.c.b16 %v2760, %v2759
  %v2816 = vpack.c.b16 %v2762, %v2761
  %v2817 = vpack.c.b16 %v2764, %v2763
  %v2818 = vpack.c.b16 %v2766, %v2765
  %v2819 = vpack.c.b16 %v2768, %v2767
  %v2820 = vpack.c.b16 %v2770, %v2769
  %v2821 = vpack.c.b16 %v2772, %v2771
  %v2822 = vpack.c.b16 %v2774, %v2773
  %v2823 = vpack.c.b16 %v2776, %v2775
  %v2824 = vpack.c.b16 %v2778, %v2777
  %v2825 = vpack.c.b16 %v2780, %v2779
  %v2826 = vpack.c.b16 %v2782, %v2781
  %v2827 = vpack.c.b16 %v2784, %v2783
  %v2828 = vpack.c.b16 %v2786, %v2785
  %v2829 = vpack.c.b16 %v2788, %v2787
  %v2830 = vpack.c.b16 %v2790, %v2789
  %v2831 = vpack.c.b16 %v2792, %v2791
  %v2832 = vpack.c.b16 %v2794, %v2793
  %v2833 = vpack.c.b16 %v2796, %v2795
  %v2834 = vpack.c.b16 %v2798, %v2797
  %v2872 = vsel %vm1805, %v2535, 0
  %v2875 = vsel %vm1805, %v2540, 0
  %v2878 = vsel %vm1805, %v2545, 0
  %v2881 = vsel %vm1805, %v2550, 0
  %v2884 = vsel %vm1805, %v2555, 0
  %v2887 = vsel %vm1805, %v2560, 0
  %v2890 = vsel %vm1805, %v2565, 0
  %v2893 = vsel %vm1805, %v2570, 0
  %v2896 = vsel %vm1805, %v2575, 0
  %2898 = vmatprep.subr.bf16.mxu0 0
  %2899 = vmatpush1.bf16.msra.mxu0 %v2799
  %2900 = vmatprep.subr.bf16.mxu0 0
  %2901 = vmatpush1.bf16.msra.mxu0 %v2800
  %2902 = vmatprep.subr.bf16.mxu0 0
  %2903 = vmatpush1.bf16.msra.mxu0 %v2801
  %2904 = vmatprep.subr.bf16.mxu0 0
  %2905 = vmatpush1.bf16.msra.mxu0 %v2802
  %2906 = vmatprep.subr.bf16.mxu0 0
  %2907 = vmatpush1.bf16.msra.mxu0 %v2803
  %2908 = vmatprep.subr.bf16.mxu0 0
  %2909 = vmatpush1.bf16.msra.mxu0 %v2804
  %2910 = vmatprep.subr.bf16.mxu0 0
  %2911 = vmatpush1.bf16.msra.mxu0 %v2805
  %2912 = vmatprep.subr.bf16.mxu0 0
  %2913 = vmatpush1.bf16.msra.mxu0 %v2806
  %2914 = vmatprep.subr.bf16.mxu0 0
  %2915 = vmatpush1.bf16.msra.mxu0 %v2807
  %2916 = vmatprep.subr.bf16.mxu0 0
  %2917 = vmatpush1.bf16.msra.mxu0 %v2808
  %2918 = vmatprep.subr.bf16.mxu0 0
  %2919 = vmatpush1.bf16.msra.mxu0 %v2809
  %2920 = vmatprep.subr.bf16.mxu0 0
  %2921 = vmatpush1.bf16.msra.mxu0 %v2810
  %2922 = vmatprep.subr.bf16.mxu0 0
  %2923 = vmatpush1.bf16.msra.mxu0 %v2811
  %2924 = vmatprep.subr.bf16.mxu0 0
  %2925 = vmatpush1.bf16.msra.mxu0 %v2812
  %2926 = vmatprep.subr.bf16.mxu0 0
  %2927 = vmatpush1.bf16.msra.mxu0 %v2813
  %2928 = vmatprep.subr.bf16.mxu0 0
  %2929 = vmatpush1.bf16.msra.mxu0 %v2814
  %2930 = vmatprep.mubr.bf16.mxu0 %v2532
  %2931 = vmatmul.mubr.bf16.gmra.mrb[0].mxu0 %v2531
  %v2932 = vpop.f32.mrb[0].mxu0
  %v2933 = vadd.f32 %v2653, %v2932
  %v2934 = vpop.f32.mrb[0].mxu0
  %v2935 = vpop.f32.mrb[0].mxu0
  %v2936 = vadd.f32 %v2653, %v2935
  %v2937 = vpop.f32.mrb[0].mxu0
  %2938 = vmatprep.mubr.bf16.mxu0 %v2537
  %2939 = vmatmul.mubr.bf16.gmra.mrb[0].mxu0 %v2536
  %v2940 = vpop.f32.mrb[0].mxu0
  %v2941 = vadd.f32 %v2653, %v2940
  %v2942 = vpop.f32.mrb[0].mxu0
  %v2943 = vpop.f32.mrb[0].mxu0
  %v2944 = vadd.f32 %v2653, %v2943
  %v2945 = vpop.f32.mrb[0].mxu0
  %2946 = vmatprep.mubr.bf16.mxu0 %v2542
  %2947 = vmatmul.mubr.bf16.gmra.mrb[0].mxu0 %v2541
  %v2948 = vpop.f32.mrb[0].mxu0
  %v2949 = vadd.f32 %v2653, %v2948
  %v2950 = vpop.f32.mrb[0].mxu0
  %v2951 = vpop.f32.mrb[0].mxu0
  %v2952 = vadd.f32 %v2653, %v2951
  %v2953 = vpop.f32.mrb[0].mxu0
  %2954 = vmatprep.mubr.bf16.mxu0 %v2547
  %2955 = vmatmul.mubr.bf16.gmra.mrb[0].mxu0 %v2546
  %v2956 = vpop.f32.mrb[0].mxu0
  %v2957 = vadd.f32 %v2653, %v2956
  %v2958 = vpop.f32.mrb[0].mxu0
  %v2959 = vpop.f32.mrb[0].mxu0
  %v2960 = vadd.f32 %v2653, %v2959
  %v2961 = vpop.f32.mrb[0].mxu0
  %2962 = vmatprep.mubr.bf16.mxu0 %v2552
  %2963 = vmatmul.mubr.bf16.gmra.mrb[0].mxu0 %v2551
  %v2964 = vpop.f32.mrb[0].mxu0
  %v2965 = vadd.f32 %v2653, %v2964
  %v2966 = vpop.f32.mrb[0].mxu0
  %v2967 = vpop.f32.mrb[0].mxu0
  %v2968 = vadd.f32 %v2653, %v2967
  %v2969 = vpop.f32.mrb[0].mxu0
  %2970 = vmatprep.mubr.bf16.mxu0 %v2557
  %2971 = vmatmul.mubr.bf16.gmra.mrb[0].mxu0 %v2556
  %v2972 = vpop.f32.mrb[0].mxu0
  %v2973 = vadd.f32 %v2653, %v2972
  %v2974 = vpop.f32.mrb[0].mxu0
  %v2975 = vpop.f32.mrb[0].mxu0
  %v2976 = vadd.f32 %v2653, %v2975
  %v2977 = vpop.f32.mrb[0].mxu0
  %2978 = vmatprep.mubr.bf16.mxu0 %v2562
  %2979 = vmatmul.mubr.bf16.gmra.mrb[0].mxu0 %v2561
  %v2980 = vpop.f32.mrb[0].mxu0
  %v2981 = vadd.f32 %v2653, %v2980
  %v2982 = vpop.f32.mrb[0].mxu0
  %v2983 = vpop.f32.mrb[0].mxu0
  %v2984 = vadd.f32 %v2653, %v2983
  %v2985 = vpop.f32.mrb[0].mxu0
  %2986 = vmatprep.mubr.bf16.mxu0 %v2567
  %2987 = vmatmul.mubr.bf16.gmra.mrb[0].mxu0 %v2566
  %v2988 = vpop.f32.mrb[0].mxu0
  %v2989 = vadd.f32 %v2653, %v2988
  %v2990 = vpop.f32.mrb[0].mxu0
  %v2991 = vpop.f32.mrb[0].mxu0
  %v2992 = vadd.f32 %v2653, %v2991
  %v2993 = vpop.f32.mrb[0].mxu0
  %2994 = vmatprep.mubr.bf16.mxu0 %v2572
  %2995 = vmatmul.mubr.bf16.gmra.mrb[0].mxu0 %v2571
  %v2996 = vpop.f32.mrb[0].mxu0
  %v2997 = vadd.f32 %v2653, %v2996
  %v2998 = vpop.f32.mrb[0].mxu0
  %v2999 = vpop.f32.mrb[0].mxu0
  %v3000 = vadd.f32 %v2653, %v2999
  %v3001 = vpop.f32.mrb[0].mxu0
  %3002 = vdwg.mxu0
  %3003 = vmatprep.subr.bf16.mxu0 0
  %3004 = vmatpush1.bf16.msra.mxu0 %v2815
  %3005 = vmatprep.subr.bf16.mxu0 0
  %3006 = vmatpush1.bf16.msra.mxu0 %v2816
  %3007 = vmatprep.subr.bf16.mxu0 0
  %3008 = vmatpush1.bf16.msra.mxu0 %v2817
  %3009 = vmatprep.subr.bf16.mxu0 0
  %3010 = vmatpush1.bf16.msra.mxu0 %v2818
  %3011 = vmatprep.subr.bf16.mxu0 0
  %3012 = vmatpush1.bf16.msra.mxu0 %v2819
  %3013 = vmatprep.subr.bf16.mxu0 0
  %3014 = vmatpush1.bf16.msra.mxu0 %v2820
  %3015 = vmatprep.subr.bf16.mxu0 0
  %3016 = vmatpush1.bf16.msra.mxu0 %v2821
  %3017 = vmatprep.subr.bf16.mxu0 0
  %3018 = vmatpush1.bf16.msra.mxu0 %v2822
  %3019 = vmatprep.subr.bf16.mxu0 0
  %3020 = vmatpush1.bf16.msra.mxu0 %v2823
  %3021 = vmatprep.subr.bf16.mxu0 0
  %3022 = vmatpush1.bf16.msra.mxu0 %v2824
  %3023 = vmatprep.subr.bf16.mxu0 0
  %3024 = vmatpush1.bf16.msra.mxu0 %v2825
  %3025 = vmatprep.subr.bf16.mxu0 0
  %3026 = vmatpush1.bf16.msra.mxu0 %v2826
  %3027 = vmatprep.subr.bf16.mxu0 0
  %3028 = vmatpush1.bf16.msra.mxu0 %v2827
  %3029 = vmatprep.subr.bf16.mxu0 0
  %3030 = vmatpush1.bf16.msra.mxu0 %v2828
  %3031 = vmatprep.subr.bf16.mxu0 0
  %3032 = vmatpush1.bf16.msra.mxu0 %v2829
  %3033 = vmatprep.subr.bf16.mxu0 0
  %3034 = vmatpush1.bf16.msra.mxu0 %v2830
  %3035 = vmatprep.mubr.bf16.mxu0 %v2534
  %3036 = vmatmul.mubr.bf16.gmra.mrb[0].mxu0 %v2533
  %v3037 = vpop.f32.mrb[0].mxu0
  %v3038 = vadd.f32 %v2933, %v3037
  %v3039 = vpop.f32.mrb[0].mxu0
  %v3040 = vpop.f32.mrb[0].mxu0
  %v3041 = vadd.f32 %v2936, %v3040
  %v3042 = vpop.f32.mrb[0].mxu0
  %3043 = vmatprep.mubr.bf16.mxu0 %v2539
  %3044 = vmatmul.mubr.bf16.gmra.mrb[0].mxu0 %v2538
  %v3045 = vpop.f32.mrb[0].mxu0
  %v3046 = vadd.f32 %v2941, %v3045
  %v3047 = vpop.f32.mrb[0].mxu0
  %v3048 = vpop.f32.mrb[0].mxu0
  %v3049 = vadd.f32 %v2944, %v3048
  %v3050 = vpop.f32.mrb[0].mxu0
  %3051 = vmatprep.mubr.bf16.mxu0 %v2544
  %3052 = vmatmul.mubr.bf16.gmra.mrb[0].mxu0 %v2543
  %v3053 = vpop.f32.mrb[0].mxu0
  %v3054 = vadd.f32 %v2949, %v3053
  %v3055 = vpop.f32.mrb[0].mxu0
  %v3056 = vpop.f32.mrb[0].mxu0
  %v3057 = vadd.f32 %v2952, %v3056
  %v3058 = vpop.f32.mrb[0].mxu0
  %3059 = vmatprep.mubr.bf16.mxu0 %v2549
  %3060 = vmatmul.mubr.bf16.gmra.mrb[0].mxu0 %v2548
  %v3061 = vpop.f32.mrb[0].mxu0
  %v3062 = vadd.f32 %v2957, %v3061
  %v3063 = vpop.f32.mrb[0].mxu0
  %v3064 = vpop.f32.mrb[0].mxu0
  %v3065 = vadd.f32 %v2960, %v3064
  %v3066 = vpop.f32.mrb[0].mxu0
  %3067 = vmatprep.mubr.bf16.mxu0 %v2554
  %3068 = vmatmul.mubr.bf16.gmra.mrb[0].mxu0 %v2553
  %v3069 = vpop.f32.mrb[0].mxu0
  %v3070 = vadd.f32 %v2965, %v3069
  %v3071 = vpop.f32.mrb[0].mxu0
  %v3072 = vpop.f32.mrb[0].mxu0
  %v3073 = vadd.f32 %v2968, %v3072
  %v3074 = vpop.f32.mrb[0].mxu0
  %3075 = vmatprep.mubr.bf16.mxu0 %v2559
  %3076 = vmatmul.mubr.bf16.gmra.mrb[0].mxu0 %v2558
  %v3077 = vpop.f32.mrb[0].mxu0
  %v3078 = vadd.f32 %v2973, %v3077
  %v3079 = vpop.f32.mrb[0].mxu0
  %v3080 = vpop.f32.mrb[0].mxu0
  %v3081 = vadd.f32 %v2976, %v3080
  %v3082 = vpop.f32.mrb[0].mxu0
  %3083 = vmatprep.mubr.bf16.mxu0 %v2564
  %3084 = vmatmul.mubr.bf16.gmra.mrb[0].mxu0 %v2563
  %v3085 = vpop.f32.mrb[0].mxu0
  %v3086 = vadd.f32 %v2981, %v3085
  %v3087 = vpop.f32.mrb[0].mxu0
  %v3088 = vpop.f32.mrb[0].mxu0
  %v3089 = vadd.f32 %v2984, %v3088
  %v3090 = vpop.f32.mrb[0].mxu0
  %3091 = vmatprep.mubr.bf16.mxu0 %v2569
  %3092 = vmatmul.mubr.bf16.gmra.mrb[0].mxu0 %v2568
  %v3093 = vpop.f32.mrb[0].mxu0
  %v3094 = vadd.f32 %v2989, %v3093
  %v3095 = vpop.f32.mrb[0].mxu0
  %v3096 = vpop.f32.mrb[0].mxu0
  %v3097 = vadd.f32 %v2992, %v3096
  %v3098 = vpop.f32.mrb[0].mxu0
  %3099 = vmatprep.mubr.bf16.mxu0 %v2574
  %3100 = vmatmul.mubr.bf16.gmra.mrb[0].mxu0 %v2573
  %v3101 = vpop.f32.mrb[0].mxu0
  %v3102 = vadd.f32 %v2997, %v3101
  %v3103 = vpop.f32.mrb[0].mxu0
  %v3104 = vpop.f32.mrb[0].mxu0
  %v3105 = vadd.f32 %v3000, %v3104
  %v3106 = vpop.f32.mrb[0].mxu0
  %3107 = vdwg.mxu0
  %3108 = vmatprep.subr.bf16.mxu0 0
  %3109 = vmatpush1.bf16.msra.mxu0 %v2831
  %3110 = vmatprep.subr.bf16.mxu0 0
  %3111 = vmatpush1.bf16.msra.mxu0 %v2832
  %3112 = vmatprep.subr.bf16.mxu0 0
  %3113 = vmatpush1.bf16.msra.mxu0 %v2833
  %3114 = vmatprep.subr.bf16.mxu0 0
  %3115 = vmatpush1.bf16.msra.mxu0 %v2834
  %3116 = vmatprep.subr.bf16.mxu0 0
  %3117 = vmatpush1.bf16.msra.mxu0 0
  %3118 = vmatprep.subr.bf16.mxu0 0
  %3119 = vmatpush1.bf16.msra.mxu0 0
  %3120 = vmatprep.subr.bf16.mxu0 0
  %3121 = vmatpush1.bf16.msra.mxu0 0
  %3122 = vmatprep.subr.bf16.mxu0 0
  %3123 = vmatpush1.bf16.msra.mxu0 0
  %3124 = vmatprep.subr.bf16.mxu0 0
  %3125 = vmatpush1.bf16.msra.mxu0 0
  %3126 = vmatprep.subr.bf16.mxu0 0
  %3127 = vmatpush1.bf16.msra.mxu0 0
  %3128 = vmatprep.subr.bf16.mxu0 0
  %3129 = vmatpush1.bf16.msra.mxu0 0
  %3130 = vmatprep.subr.bf16.mxu0 0
  %3131 = vmatpush1.bf16.msra.mxu0 0
  %3132 = vmatprep.subr.bf16.mxu0 0
  %3133 = vmatpush1.bf16.msra.mxu0 0
  %3134 = vmatprep.subr.bf16.mxu0 0
  %3135 = vmatpush1.bf16.msra.mxu0 0
  %3136 = vmatprep.subr.bf16.mxu0 0
  %3137 = vmatpush1.bf16.msra.mxu0 0
  %3138 = vmatprep.subr.bf16.mxu0 0
  %3139 = vmatpush1.bf16.msra.mxu0 0
  %3140 = vmatprep.mubr.bf16.mxu0 0
  %3141 = vmatmul.mubr.bf16.gmra.mrb[0].mxu0 %v2872
  %v3142 = vpop.f32.mrb[0].mxu0
  %v3143 = vadd.f32 %v3038, %v3142
  %v3144 = vpop.f32.mrb[0].mxu0
  %v3145 = vpop.f32.mrb[0].mxu0
  %v3146 = vadd.f32 %v3041, %v3145
  %v3147 = vpop.f32.mrb[0].mxu0
  %3148 = vmatprep.mubr.bf16.mxu0 0
  %3149 = vmatmul.mubr.bf16.gmra.mrb[0].mxu0 %v2875
  %v3150 = vpop.f32.mrb[0].mxu0
  %v3151 = vadd.f32 %v3046, %v3150
  %v3152 = vpop.f32.mrb[0].mxu0
  %v3153 = vpop.f32.mrb[0].mxu0
  %v3154 = vadd.f32 %v3049, %v3153
  %v3155 = vpop.f32.mrb[0].mxu0
  %3156 = vmatprep.mubr.bf16.mxu0 0
  %3157 = vmatmul.mubr.bf16.gmra.mrb[0].mxu0 %v2878
  %v3158 = vpop.f32.mrb[0].mxu0
  %v3159 = vadd.f32 %v3054, %v3158
  %v3160 = vpop.f32.mrb[0].mxu0
  %v3161 = vpop.f32.mrb[0].mxu0
  %v3162 = vadd.f32 %v3057, %v3161
  %v3163 = vpop.f32.mrb[0].mxu0
  %3164 = vmatprep.mubr.bf16.mxu0 0
  %3165 = vmatmul.mubr.bf16.gmra.mrb[0].mxu0 %v2881
  %v3166 = vpop.f32.mrb[0].mxu0
  %v3167 = vadd.f32 %v3062, %v3166
  %v3168 = vpop.f32.mrb[0].mxu0
  %v3169 = vpop.f32.mrb[0].mxu0
  %v3170 = vadd.f32 %v3065, %v3169
  %v3171 = vpop.f32.mrb[0].mxu0
  %3172 = vmatprep.mubr.bf16.mxu0 0
  %3173 = vmatmul.mubr.bf16.gmra.mrb[0].mxu0 %v2884
  %v3174 = vpop.f32.mrb[0].mxu0
  %v3175 = vadd.f32 %v3070, %v3174
  %v3176 = vpop.f32.mrb[0].mxu0
  %v3177 = vpop.f32.mrb[0].mxu0
  %v3178 = vadd.f32 %v3073, %v3177
  %v3179 = vpop.f32.mrb[0].mxu0
  %3180 = vmatprep.mubr.bf16.mxu0 0
  %3181 = vmatmul.mubr.bf16.gmra.mrb[0].mxu0 %v2887
  %v3182 = vpop.f32.mrb[0].mxu0
  %v3183 = vadd.f32 %v3078, %v3182
  %v3184 = vpop.f32.mrb[0].mxu0
  %v3185 = vpop.f32.mrb[0].mxu0
  %v3186 = vadd.f32 %v3081, %v3185
  %v3187 = vpop.f32.mrb[0].mxu0
  %3188 = vmatprep.mubr.bf16.mxu0 0
  %3189 = vmatmul.mubr.bf16.gmra.mrb[0].mxu0 %v2890
  %v3190 = vpop.f32.mrb[0].mxu0
  %v3191 = vadd.f32 %v3086, %v3190
  %v3192 = vpop.f32.mrb[0].mxu0
  %v3193 = vpop.f32.mrb[0].mxu0
  %v3194 = vadd.f32 %v3089, %v3193
  %v3195 = vpop.f32.mrb[0].mxu0
  %3196 = vmatprep.mubr.bf16.mxu0 0
  %3197 = vmatmul.mubr.bf16.gmra.mrb[0].mxu0 %v2893
  %v3198 = vpop.f32.mrb[0].mxu0
  %v3199 = vadd.f32 %v3094, %v3198
  %v3200 = vpop.f32.mrb[0].mxu0
  %v3201 = vpop.f32.mrb[0].mxu0
  %v3202 = vadd.f32 %v3097, %v3201
  %v3203 = vpop.f32.mrb[0].mxu0
  %3204 = vmatprep.mubr.bf16.mxu0 0
  %3205 = vmatmul.mubr.bf16.gmra.mrb[0].mxu0 %v2896
  %v3206 = vpop.f32.mrb[0].mxu0
  %v3207 = vadd.f32 %v3102, %v3206
  %v3208 = vpop.f32.mrb[0].mxu0
  %v3209 = vpop.f32.mrb[0].mxu0
  %v3210 = vadd.f32 %v3105, %v3209
  %v3211 = vpop.f32.mrb[0].mxu0
  %3212 = vdwg.mxu0
  %v3213 = vmax.f32 %v3143, 0.0
  %v3214 = vmax.f32 %v3146, 0.0
  %v3215 = vmax.f32 %v3151, 0.0
  %v3216 = vmax.f32 %v3154, 0.0
  %v3217 = vmax.f32 %v3159, 0.0
  %v3218 = vmax.f32 %v3162, 0.0
  %v3219 = vmax.f32 %v3167, 0.0
  %v3220 = vmax.f32 %v3170, 0.0
  %v3221 = vmax.f32 %v3175, 0.0
  %v3222 = vmax.f32 %v3178, 0.0
  %v3223 = vmax.f32 %v3183, 0.0
  %v3224 = vmax.f32 %v3186, 0.0
  %v3225 = vmax.f32 %v3191, 0.0
  %v3226 = vmax.f32 %v3194, 0.0
  %v3227 = vmax.f32 %v3199, 0.0
  %v3228 = vmax.f32 %v3202, 0.0
  %v3229 = vmax.f32 %v3207, 0.0
  %v3230 = vmax.f32 %v3210, 0.0
  %3231 = vst [vmem:[%s7] sm:$0xff] %v3213
  %3232 = vst [vmem:[%s7 + $0x8] sm:$0xff] %v3214
  %3233 = vst [vmem:[%s7 + $0x10] sm:$0xff] %v3215
  %3234 = vst [vmem:[%s7 + $0x18] sm:$0xff] %v3216
  %3235 = vst [vmem:[%s7 + $0x20] sm:$0xff] %v3217
  %3236 = vst [vmem:[%s7 + $0x28] sm:$0xff] %v3218
  %3237 = vst [vmem:[%s7 + $0x30] sm:$0xff] %v3219
  %3238 = vst [vmem:[%s7 + $0x38] sm:$0xff] %v3220
  %3239 = vst [vmem:[%s7 + $0x40] sm:$0xff] %v3221
  %3240 = vst [vmem:[%s7 + $0x48] sm:$0xff] %v3222
  %3241 = vst [vmem:[%s7 + $0x50] sm:$0xff] %v3223
  %3242 = vst [vmem:[%s7 + $0x58] sm:$0xff] %v3224
  %3243 = vst [vmem:[%s7 + $0x60] sm:$0xff] %v3225
  %3244 = vst [vmem:[%s7 + $0x68] sm:$0xff] %v3226
  %3245 = vst [vmem:[%s7 + $0x70] sm:$0xff] %v3227
  %3246 = vst [vmem:[%s7 + $0x78] sm:$0xff] %v3228
  %3247 = vst [vmem:[%s7 + $0x80] sm:$0xff] %v3229
  %3248 = vst [vmem:[%s7 + $0x88] sm:$0xff] %v3230
  // Predicated region
  $region30: #{_lambda_.1} parent=0 // pred_check
    _
  $region31: #{_lambda_.1} parent=0 // pred_check_branch
    %3250 = sbr.rel (0) target = $region33
  $region32: #{_lambda_.1} parent=0 // pred_region
    _
  $region33: #{_lambda_.1} parent=0 // pred_fallthru
    _
  // Predicated region
  $region34: #{_lambda_.1} parent=0 // pred_check
    _
  $region35: #{_lambda_.1} parent=0 // pred_check_branch
    %3252 = sbr.rel (0) target = $region37
  $region36: #{_lambda_.1} parent=0 // pred_region
    _
  $region37: #{_lambda_.1} parent=0 // pred_fallthru
    _

</llo_original>
